<compile_context>
chip_gen: v7x
topology: tpu7x:2x2x1
jax: 0.10.0
libtpu: 0.0.40
codegen_flags: <defaults>
</compile_context>

<pallas_src>
import jax
import jax.numpy as jnp
from jax.experimental import pallas as pl
from jax.experimental.pallas import tpu as pltpu

_LANE = 128
_MAX_BATCH_PER_BLOCK = 1024   # lane-dense double-buffered working set ~9.5 MiB


def _make_svd_block_kernel(M, N, K):
    """Kernel over batch-last tiles.

    Refs: lam_ref (1,) in SMEM, u_ref (M,K,B), s_ref (K,B), vh_ref (K,N,B),
          x_ref (M,N,B), o_ref (M,N,B).  B is the lane-dense batch block.
    """

    def kernel(lam_ref, u_ref, s_ref, vh_ref, x_ref, o_ref):
        lam = lam_ref[0]
        # Singular values are non-negative -> softshrink == relu(s - lam).
        s_shrunk = jnp.maximum(s_ref[...] - lam, 0.0)            # (K, B)
        # Fold the shrunk scale into Vh once (avoids an (M,K,B) u_scaled temp).
        vhs = vh_ref[...] * s_shrunk[:, None, :]                  # (K, N, B)
        u = u_ref[...]                                            # (M, K, B)
        # K-unrolled VPU contraction over the lane-dense batch axis:
        #   out[m, n, l] = sum_k u[m, k, l] * vhs[k, n, l] - x[m, n, l]
        for m in range(M):
            acc = u[m, 0][None, :] * vhs[0]                       # (N, B)
            for k in range(1, K):
                acc = acc + u[m, k][None, :] * vhs[k]
            o_ref[m] = (acc - x_ref[m]).astype(o_ref.dtype)

    return kernel


def svd_block(x, param_shrink=0.5):
    """x: float array of shape (..., M, N). Returns U @ (softshrink(s) * Vh) - x."""
    assert param_shrink >= 0.0, "Softshrink lambda must be >= 0."
    orig_shape = x.shape
    M, N = orig_shape[-2], orig_shape[-1]
    K = min(M, N)
    L = 1
    for d in orig_shape[:-2]:
        L *= d

    x_flat = x.reshape(L, M, N).astype(jnp.float32)

    # TODO(synk): the SVD factorization (iterative LAPACK-style algorithm) has
    # no clean Pallas equivalent; it is computed with jnp.linalg.svd.
    U, s, Vh = jnp.linalg.svd(x_flat, full_matrices=False)

    # Batch-last (lane-dense) layout: L becomes the minor / lane dimension.
    U_t = jnp.transpose(U.astype(jnp.float32), (1, 2, 0))         # (M, K, L)
    s_t = jnp.transpose(s.astype(jnp.float32), (1, 0))            # (K, L)
    Vh_t = jnp.transpose(Vh.astype(jnp.float32), (1, 2, 0))       # (K, N, L)
    x_t = jnp.transpose(x_flat, (1, 2, 0))                        # (M, N, L)

    # Block size over L: multiple of 128, minimal zero padding of the last
    # block, and (for v7x) an even grid when there is more than one step so
    # the "parallel" batch axis shards across both TensorCores.
    num_blocks = -(-L // _MAX_BATCH_PER_BLOCK)
    if num_blocks > 1 and num_blocks % 2 == 1:
        num_blocks += 1
    B = -(-L // num_blocks)
    B = -(-B // _LANE) * _LANE
    Lp = num_blocks * B

    if Lp != L:
        pad = Lp - L
        U_t = jnp.pad(U_t, ((0, 0), (0, 0), (0, pad)))
        s_t = jnp.pad(s_t, ((0, 0), (0, pad)))
        Vh_t = jnp.pad(Vh_t, ((0, 0), (0, 0), (0, pad)))
        x_t = jnp.pad(x_t, ((0, 0), (0, 0), (0, pad)))

    lam_arr = jnp.asarray([param_shrink], dtype=jnp.float32)

    out_t = pl.pallas_call(
        _make_svd_block_kernel(M, N, K),
        out_shape=jax.ShapeDtypeStruct((M, N, Lp), jnp.float32),
        grid_spec=pltpu.PrefetchScalarGridSpec(
            num_scalar_prefetch=0,
            grid=(num_blocks,),
            in_specs=[
                pl.BlockSpec(memory_space=pltpu.MemorySpace.SMEM),   # lambda
                pl.BlockSpec((M, K, B), lambda i: (0, 0, i)),        # U
                pl.BlockSpec((K, B), lambda i: (0, i)),              # s
                pl.BlockSpec((K, N, B), lambda i: (0, 0, i)),        # Vh
                pl.BlockSpec((M, N, B), lambda i: (0, 0, i)),        # x
            ],
            out_specs=pl.BlockSpec((M, N, B), lambda i: (0, 0, i)),
        ),
        compiler_params=pltpu.CompilerParams(
            dimension_semantics=("parallel",)),
    )(lam_arr, U_t, s_t, Vh_t, x_t)

    out_flat = jnp.transpose(out_t[:, :, :L], (2, 0, 1))          # (L, M, N)
    return out_flat.reshape(orig_shape)


def _reference(x, lam=0.5):
    U, s, Vh = jnp.linalg.svd(x, full_matrices=False)
    s = jnp.where(s > lam, s - lam, jnp.where(s < -lam, s + lam, 0.0))
    recon = jnp.matmul(U, s[..., None] * Vh, precision=jax.lax.Precision.HIGHEST)
    return recon - x


if __name__ == "__main__":
    key = jax.random.PRNGKey(0)
    # Small batched-matrix input consistent with torch.linalg.svd batching.
    x = jax.random.normal(key, (2, 4, 16, 16), dtype=jnp.float32)

    out = svd_block(x, param_shrink=0.5)
    out = jax.block_until_ready(out)

    ref = _reference(x, 0.5)
    assert out.shape == x.shape
    assert jnp.allclose(out, ref, atol=1e-4, rtol=1e-4), "mismatch vs reference"

    print("KERNEL_OK")
</pallas_src>

<mosaic_0001>
module attributes {stable_mosaic.version = 11 : i64} {
  func.func @kernel(%arg0: i32, %arg1: memref<1xf32, #tpu.memory_space<smem>>, %arg2: memref<16x16x128xf32, #tpu.memory_space<vmem>>, %arg3: memref<16x128xf32, #tpu.memory_space<vmem>>, %arg4: memref<16x16x128xf32, #tpu.memory_space<vmem>>, %arg5: memref<16x16x128xf32, #tpu.memory_space<vmem>>, %arg6: memref<16x16x128xf32, #tpu.memory_space<vmem>>) attributes {dimension_semantics = [#tpu.dimension_semantics<parallel>], iteration_bounds = array<i64: 1>, scalar_prefetch = 0 : i64, scratch_operands = 0 : i64, tpu.core_type = #tpu.core_type<tc>, window_params = [{transform_indices = @transform_0, window_bounds = array<i64: 1>}, {transform_indices = @transform_1, window_bounds = array<i64: 16, 16, 128>}, {transform_indices = @transform_2, window_bounds = array<i64: 16, 128>}, {transform_indices = @transform_3, window_bounds = array<i64: 16, 16, 128>}, {transform_indices = @transform_4, window_bounds = array<i64: 16, 16, 128>}, {transform_indices = @transform_5, window_bounds = array<i64: 16, 16, 128>}]} {
    %c0 = arith.constant 0 : index
    %0 = memref.load %arg1[%c0] : memref<1xf32, #tpu.memory_space<smem>>
    %c0_0 = arith.constant 0 : index
    %c0_1 = arith.constant 0 : index
    %1 = vector.load %arg3[%c0_0, %c0_1] : memref<16x128xf32, #tpu.memory_space<vmem>>, vector<16x128xf32>
    %2 = vector.broadcast %0 : f32 to vector<16x128xf32>
    %3 = arith.subf %1, %2 : vector<16x128xf32>
    %cst = arith.constant 0.000000e+00 : f32
    %4 = vector.broadcast %cst : f32 to vector<16x128xf32>
    %5 = arith.maximumf %3, %4 : vector<16x128xf32>
    %c0_2 = arith.constant 0 : index
    %c0_3 = arith.constant 0 : index
    %c0_4 = arith.constant 0 : index
    %6 = vector.load %arg4[%c0_2, %c0_3, %c0_4] : memref<16x16x128xf32, #tpu.memory_space<vmem>>, vector<16x16x128xf32>
    %7 = vector.shape_cast %5 : vector<16x128xf32> to vector<16x1x128xf32>
    %8 = vector.broadcast %7 : vector<16x1x128xf32> to vector<16x16x128xf32>
    %9 = arith.mulf %6, %8 : vector<16x16x128xf32>
    %c0_5 = arith.constant 0 : index
    %c0_6 = arith.constant 0 : index
    %c0_7 = arith.constant 0 : index
    %10 = vector.load %arg2[%c0_5, %c0_6, %c0_7] : memref<16x16x128xf32, #tpu.memory_space<vmem>>, vector<16x16x128xf32>
    %11 = vector.extract_strided_slice %10 {offsets = [0, 0, 0], sizes = [1, 1, 128], strides = [1, 1, 1]} : vector<16x16x128xf32> to vector<1x1x128xf32>
    %12 = vector.shape_cast %11 : vector<1x1x128xf32> to vector<128xf32>
    %13 = vector.shape_cast %12 : vector<128xf32> to vector<1x128xf32>
    %14 = vector.extract_strided_slice %9 {offsets = [0, 0, 0], sizes = [1, 16, 128], strides = [1, 1, 1]} : vector<16x16x128xf32> to vector<1x16x128xf32>
    %15 = vector.shape_cast %14 : vector<1x16x128xf32> to vector<16x128xf32>
    %16 = vector.broadcast %13 : vector<1x128xf32> to vector<16x128xf32>
    %17 = arith.mulf %16, %15 : vector<16x128xf32>
    %18 = vector.extract_strided_slice %10 {offsets = [0, 1, 0], sizes = [1, 1, 128], strides = [1, 1, 1]} : vector<16x16x128xf32> to vector<1x1x128xf32>
    %19 = vector.shape_cast %18 : vector<1x1x128xf32> to vector<128xf32>
    %20 = vector.shape_cast %19 : vector<128xf32> to vector<1x128xf32>
    %21 = vector.extract_strided_slice %9 {offsets = [1, 0, 0], sizes = [1, 16, 128], strides = [1, 1, 1]} : vector<16x16x128xf32> to vector<1x16x128xf32>
    %22 = vector.shape_cast %21 : vector<1x16x128xf32> to vector<16x128xf32>
    %23 = vector.broadcast %20 : vector<1x128xf32> to vector<16x128xf32>
    %24 = arith.mulf %23, %22 : vector<16x128xf32>
    %25 = arith.addf %17, %24 : vector<16x128xf32>
    %26 = vector.extract_strided_slice %10 {offsets = [0, 2, 0], sizes = [1, 1, 128], strides = [1, 1, 1]} : vector<16x16x128xf32> to vector<1x1x128xf32>
    %27 = vector.shape_cast %26 : vector<1x1x128xf32> to vector<128xf32>
    %28 = vector.shape_cast %27 : vector<128xf32> to vector<1x128xf32>
    %29 = vector.extract_strided_slice %9 {offsets = [2, 0, 0], sizes = [1, 16, 128], strides = [1, 1, 1]} : vector<16x16x128xf32> to vector<1x16x128xf32>
    %30 = vector.shape_cast %29 : vector<1x16x128xf32> to vector<16x128xf32>
    %31 = vector.broadcast %28 : vector<1x128xf32> to vector<16x128xf32>
    %32 = arith.mulf %31, %30 : vector<16x128xf32>
    %33 = arith.addf %25, %32 : vector<16x128xf32>
    %34 = vector.extract_strided_slice %10 {offsets = [0, 3, 0], sizes = [1, 1, 128], strides = [1, 1, 1]} : vector<16x16x128xf32> to vector<1x1x128xf32>
    %35 = vector.shape_cast %34 : vector<1x1x128xf32> to vector<128xf32>
    %36 = vector.shape_cast %35 : vector<128xf32> to vector<1x128xf32>
    %37 = vector.extract_strided_slice %9 {offsets = [3, 0, 0], sizes = [1, 16, 128], strides = [1, 1, 1]} : vector<16x16x128xf32> to vector<1x16x128xf32>
    %38 = vector.shape_cast %37 : vector<1x16x128xf32> to vector<16x128xf32>
    %39 = vector.broadcast %36 : vector<1x128xf32> to vector<16x128xf32>
    %40 = arith.mulf %39, %38 : vector<16x128xf32>
    %41 = arith.addf %33, %40 : vector<16x128xf32>
    %42 = vector.extract_strided_slice %10 {offsets = [0, 4, 0], sizes = [1, 1, 128], strides = [1, 1, 1]} : vector<16x16x128xf32> to vector<1x1x128xf32>
    %43 = vector.shape_cast %42 : vector<1x1x128xf32> to vector<128xf32>
    %44 = vector.shape_cast %43 : vector<128xf32> to vector<1x128xf32>
    %45 = vector.extract_strided_slice %9 {offsets = [4, 0, 0], sizes = [1, 16, 128], strides = [1, 1, 1]} : vector<16x16x128xf32> to vector<1x16x128xf32>
    %46 = vector.shape_cast %45 : vector<1x16x128xf32> to vector<16x128xf32>
    %47 = vector.broadcast %44 : vector<1x128xf32> to vector<16x128xf32>
    %48 = arith.mulf %47, %46 : vector<16x128xf32>
    %49 = arith.addf %41, %48 : vector<16x128xf32>
    %50 = vector.extract_strided_slice %10 {offsets = [0, 5, 0], sizes = [1, 1, 128], strides = [1, 1, 1]} : vector<16x16x128xf32> to vector<1x1x128xf32>
    %51 = vector.shape_cast %50 : vector<1x1x128xf32> to vector<128xf32>
    %52 = vector.shape_cast %51 : vector<128xf32> to vector<1x128xf32>
    %53 = vector.extract_strided_slice %9 {offsets = [5, 0, 0], sizes = [1, 16, 128], strides = [1, 1, 1]} : vector<16x16x128xf32> to vector<1x16x128xf32>
    %54 = vector.shape_cast %53 : vector<1x16x128xf32> to vector<16x128xf32>
    %55 = vector.broadcast %52 : vector<1x128xf32> to vector<16x128xf32>
    %56 = arith.mulf %55, %54 : vector<16x128xf32>
    %57 = arith.addf %49, %56 : vector<16x128xf32>
    %58 = vector.extract_strided_slice %10 {offsets = [0, 6, 0], sizes = [1, 1, 128], strides = [1, 1, 1]} : vector<16x16x128xf32> to vector<1x1x128xf32>
    %59 = vector.shape_cast %58 : vector<1x1x128xf32> to vector<128xf32>
    %60 = vector.shape_cast %59 : vector<128xf32> to vector<1x128xf32>
    %61 = vector.extract_strided_slice %9 {offsets = [6, 0, 0], sizes = [1, 16, 128], strides = [1, 1, 1]} : vector<16x16x128xf32> to vector<1x16x128xf32>
    %62 = vector.shape_cast %61 : vector<1x16x128xf32> to vector<16x128xf32>
    %63 = vector.broadcast %60 : vector<1x128xf32> to vector<16x128xf32>
    %64 = arith.mulf %63, %62 : vector<16x128xf32>
    %65 = arith.addf %57, %64 : vector<16x128xf32>
    %66 = vector.extract_strided_slice %10 {offsets = [0, 7, 0], sizes = [1, 1, 128], strides = [1, 1, 1]} : vector<16x16x128xf32> to vector<1x1x128xf32>
    %67 = vector.shape_cast %66 : vector<1x1x128xf32> to vector<128xf32>
    %68 = vector.shape_cast %67 : vector<128xf32> to vector<1x128xf32>
    %69 = vector.extract_strided_slice %9 {offsets = [7, 0, 0], sizes = [1, 16, 128], strides = [1, 1, 1]} : vector<16x16x128xf32> to vector<1x16x128xf32>
    %70 = vector.shape_cast %69 : vector<1x16x128xf32> to vector<16x128xf32>
    %71 = vector.broadcast %68 : vector<1x128xf32> to vector<16x128xf32>
    %72 = arith.mulf %71, %70 : vector<16x128xf32>
    %73 = arith.addf %65, %72 : vector<16x128xf32>
    %74 = vector.extract_strided_slice %10 {offsets = [0, 8, 0], sizes = [1, 1, 128], strides = [1, 1, 1]} : vector<16x16x128xf32> to vector<1x1x128xf32>
    %75 = vector.shape_cast %74 : vector<1x1x128xf32> to vector<128xf32>
    %76 = vector.shape_cast %75 : vector<128xf32> to vector<1x128xf32>
    %77 = vector.extract_strided_slice %9 {offsets = [8, 0, 0], sizes = [1, 16, 128], strides = [1, 1, 1]} : vector<16x16x128xf32> to vector<1x16x128xf32>
    %78 = vector.shape_cast %77 : vector<1x16x128xf32> to vector<16x128xf32>
    %79 = vector.broadcast %76 : vector<1x128xf32> to vector<16x128xf32>
    %80 = arith.mulf %79, %78 : vector<16x128xf32>
    %81 = arith.addf %73, %80 : vector<16x128xf32>
    %82 = vector.extract_strided_slice %10 {offsets = [0, 9, 0], sizes = [1, 1, 128], strides = [1, 1, 1]} : vector<16x16x128xf32> to vector<1x1x128xf32>
    %83 = vector.shape_cast %82 : vector<1x1x128xf32> to vector<128xf32>
    %84 = vector.shape_cast %83 : vector<128xf32> to vector<1x128xf32>
    %85 = vector.extract_strided_slice %9 {offsets = [9, 0, 0], sizes = [1, 16, 128], strides = [1, 1, 1]} : vector<16x16x128xf32> to vector<1x16x128xf32>
    %86 = vector.shape_cast %85 : vector<1x16x128xf32> to vector<16x128xf32>
    %87 = vector.broadcast %84 : vector<1x128xf32> to vector<16x128xf32>
    %88 = arith.mulf %87, %86 : vector<16x128xf32>
    %89 = arith.addf %81, %88 : vector<16x128xf32>
    %90 = vector.extract_strided_slice %10 {offsets = [0, 10, 0], sizes = [1, 1, 128], strides = [1, 1, 1]} : vector<16x16x128xf32> to vector<1x1x128xf32>
    %91 = vector.shape_cast %90 : vector<1x1x128xf32> to vector<128xf32>
    %92 = vector.shape_cast %91 : vector<128xf32> to vector<1x128xf32>
    %93 = vector.extract_strided_slice %9 {offsets = [10, 0, 0], sizes = [1, 16, 128], strides = [1, 1, 1]} : vector<16x16x128xf32> to vector<1x16x128xf32>
    %94 = vector.shape_cast %93 : vector<1x16x128xf32> to vector<16x128xf32>
    %95 = vector.broadcast %92 : vector<1x128xf32> to vector<16x128xf32>
    %96 = arith.mulf %95, %94 : vector<16x128xf32>
    %97 = arith.addf %89, %96 : vector<16x128xf32>
    %98 = vector.extract_strided_slice %10 {offsets = [0, 11, 0], sizes = [1, 1, 128], strides = [1, 1, 1]} : vector<16x16x128xf32> to vector<1x1x128xf32>
    %99 = vector.shape_cast %98 : vector<1x1x128xf32> to vector<128xf32>
    %100 = vector.shape_cast %99 : vector<128xf32> to vector<1x128xf32>
    %101 = vector.extract_strided_slice %9 {offsets = [11, 0, 0], sizes = [1, 16, 128], strides = [1, 1, 1]} : vector<16x16x128xf32> to vector<1x16x128xf32>
    %102 = vector.shape_cast %101 : vector<1x16x128xf32> to vector<16x128xf32>
    %103 = vector.broadcast %100 : vector<1x128xf32> to vector<16x128xf32>
    %104 = arith.mulf %103, %102 : vector<16x128xf32>
    %105 = arith.addf %97, %104 : vector<16x128xf32>
    %106 = vector.extract_strided_slice %10 {offsets = [0, 12, 0], sizes = [1, 1, 128], strides = [1, 1, 1]} : vector<16x16x128xf32> to vector<1x1x128xf32>
    %107 = vector.shape_cast %106 : vector<1x1x128xf32> to vector<128xf32>
    %108 = vector.shape_cast %107 : vector<128xf32> to vector<1x128xf32>
    %109 = vector.extract_strided_slice %9 {offsets = [12, 0, 0], sizes = [1, 16, 128], strides = [1, 1, 1]} : vector<16x16x128xf32> to vector<1x16x128xf32>
    %110 = vector.shape_cast %109 : vector<1x16x128xf32> to vector<16x128xf32>
    %111 = vector.broadcast %108 : vector<1x128xf32> to vector<16x128xf32>
    %112 = arith.mulf %111, %110 : vector<16x128xf32>
    %113 = arith.addf %105, %112 : vector<16x128xf32>
    %114 = vector.extract_strided_slice %10 {offsets = [0, 13, 0], sizes = [1, 1, 128], strides = [1, 1, 1]} : vector<16x16x128xf32> to vector<1x1x128xf32>
    %115 = vector.shape_cast %114 : vector<1x1x128xf32> to vector<128xf32>
    %116 = vector.shape_cast %115 : vector<128xf32> to vector<1x128xf32>
    %117 = vector.extract_strided_slice %9 {offsets = [13, 0, 0], sizes = [1, 16, 128], strides = [1, 1, 1]} : vector<16x16x128xf32> to vector<1x16x128xf32>
    %118 = vector.shape_cast %117 : vector<1x16x128xf32> to vector<16x128xf32>
    %119 = vector.broadcast %116 : vector<1x128xf32> to vector<16x128xf32>
    %120 = arith.mulf %119, %118 : vector<16x128xf32>
    %121 = arith.addf %113, %120 : vector<16x128xf32>
    %122 = vector.extract_strided_slice %10 {offsets = [0, 14, 0], sizes = [1, 1, 128], strides = [1, 1, 1]} : vector<16x16x128xf32> to vector<1x1x128xf32>
    %123 = vector.shape_cast %122 : vector<1x1x128xf32> to vector<128xf32>
    %124 = vector.shape_cast %123 : vector<128xf32> to vector<1x128xf32>
    %125 = vector.extract_strided_slice %9 {offsets = [14, 0, 0], sizes = [1, 16, 128], strides = [1, 1, 1]} : vector<16x16x128xf32> to vector<1x16x128xf32>
    %126 = vector.shape_cast %125 : vector<1x16x128xf32> to vector<16x128xf32>
    %127 = vector.broadcast %124 : vector<1x128xf32> to vector<16x128xf32>
    %128 = arith.mulf %127, %126 : vector<16x128xf32>
    %129 = arith.addf %121, %128 : vector<16x128xf32>
    %130 = vector.extract_strided_slice %10 {offsets = [0, 15, 0], sizes = [1, 1, 128], strides = [1, 1, 1]} : vector<16x16x128xf32> to vector<1x1x128xf32>
    %131 = vector.shape_cast %130 : vector<1x1x128xf32> to vector<128xf32>
    %132 = vector.shape_cast %131 : vector<128xf32> to vector<1x128xf32>
    %133 = vector.extract_strided_slice %9 {offsets = [15, 0, 0], sizes = [1, 16, 128], strides = [1, 1, 1]} : vector<16x16x128xf32> to vector<1x16x128xf32>
    %134 = vector.shape_cast %133 : vector<1x16x128xf32> to vector<16x128xf32>
    %135 = vector.broadcast %132 : vector<1x128xf32> to vector<16x128xf32>
    %136 = arith.mulf %135, %134 : vector<16x128xf32>
    %137 = arith.addf %129, %136 : vector<16x128xf32>
    %c0_8 = arith.constant 0 : index
    %c0_9 = arith.constant 0 : index
    %c0_10 = arith.constant 0 : index
    %138 = vector.load %arg5[%c0_8, %c0_9, %c0_10] : memref<16x16x128xf32, #tpu.memory_space<vmem>>, vector<1x16x128xf32>
    %139 = vector.shape_cast %138 : vector<1x16x128xf32> to vector<16x128xf32>
    %140 = arith.subf %137, %139 : vector<16x128xf32>
    %c0_11 = arith.constant 0 : index
    %c0_12 = arith.constant 0 : index
    %c0_13 = arith.constant 0 : index
    %141 = vector.load %arg6[%c0_11, %c0_12, %c0_13] : memref<16x16x128xf32, #tpu.memory_space<vmem>>, vector<1x16x128xf32>
    %142 = vector.shape_cast %141 : vector<1x16x128xf32> to vector<16x128xf32>
    %143 = vector.shape_cast %140 : vector<16x128xf32> to vector<1x16x128xf32>
    tpu.vector_store %arg6[%c0_11, %c0_12, %c0_13], %143 {strides = array<i32>} : memref<16x16x128xf32, #tpu.memory_space<vmem>>, vector<1x16x128xf32>,
    %144 = vector.extract_strided_slice %10 {offsets = [1, 0, 0], sizes = [1, 1, 128], strides = [1, 1, 1]} : vector<16x16x128xf32> to vector<1x1x128xf32>
    %145 = vector.shape_cast %144 : vector<1x1x128xf32> to vector<128xf32>
    %146 = vector.shape_cast %145 : vector<128xf32> to vector<1x128xf32>
    %147 = vector.extract_strided_slice %9 {offsets = [0, 0, 0], sizes = [1, 16, 128], strides = [1, 1, 1]} : vector<16x16x128xf32> to vector<1x16x128xf32>
    %148 = vector.shape_cast %147 : vector<1x16x128xf32> to vector<16x128xf32>
    %149 = vector.broadcast %146 : vector<1x128xf32> to vector<16x128xf32>
    %150 = arith.mulf %149, %148 : vector<16x128xf32>
    %151 = vector.extract_strided_slice %10 {offsets = [1, 1, 0], sizes = [1, 1, 128], strides = [1, 1, 1]} : vector<16x16x128xf32> to vector<1x1x128xf32>
    %152 = vector.shape_cast %151 : vector<1x1x128xf32> to vector<128xf32>
    %153 = vector.shape_cast %152 : vector<128xf32> to vector<1x128xf32>
    %154 = vector.extract_strided_slice %9 {offsets = [1, 0, 0], sizes = [1, 16, 128], strides = [1, 1, 1]} : vector<16x16x128xf32> to vector<1x16x128xf32>
    %155 = vector.shape_cast %154 : vector<1x16x128xf32> to vector<16x128xf32>
    %156 = vector.broadcast %153 : vector<1x128xf32> to vector<16x128xf32>
    %157 = arith.mulf %156, %155 : vector<16x128xf32>
    %158 = arith.addf %150, %157 : vector<16x128xf32>
    %159 = vector.extract_strided_slice %10 {offsets = [1, 2, 0], sizes = [1, 1, 128], strides = [1, 1, 1]} : vector<16x16x128xf32> to vector<1x1x128xf32>
    %160 = vector.shape_cast %159 : vector<1x1x128xf32> to vector<128xf32>
    %161 = vector.shape_cast %160 : vector<128xf32> to vector<1x128xf32>
    %162 = vector.extract_strided_slice %9 {offsets = [2, 0, 0], sizes = [1, 16, 128], strides = [1, 1, 1]} : vector<16x16x128xf32> to vector<1x16x128xf32>
    %163 = vector.shape_cast %162 : vector<1x16x128xf32> to vector<16x128xf32>
    %164 = vector.broadcast %161 : vector<1x128xf32> to vector<16x128xf32>
    %165 = arith.mulf %164, %163 : vector<16x128xf32>
    %166 = arith.addf %158, %165 : vector<16x128xf32>
    %167 = vector.extract_strided_slice %10 {offsets = [1, 3, 0], sizes = [1, 1, 128], strides = [1, 1, 1]} : vector<16x16x128xf32> to vector<1x1x128xf32>
    %168 = vector.shape_cast %167 : vector<1x1x128xf32> to vector<128xf32>
    %169 = vector.shape_cast %168 : vector<128xf32> to vector<1x128xf32>
    %170 = vector.extract_strided_slice %9 {offsets = [3, 0, 0], sizes = [1, 16, 128], strides = [1, 1, 1]} : vector<16x16x128xf32> to vector<1x16x128xf32>
    %171 = vector.shape_cast %170 : vector<1x16x128xf32> to vector<16x128xf32>
    %172 = vector.broadcast %169 : vector<1x128xf32> to vector<16x128xf32>
    %173 = arith.mulf %172, %171 : vector<16x128xf32>
    %174 = arith.addf %166, %173 : vector<16x128xf32>
    %175 = vector.extract_strided_slice %10 {offsets = [1, 4, 0], sizes = [1, 1, 128], strides = [1, 1, 1]} : vector<16x16x128xf32> to vector<1x1x128xf32>
    %176 = vector.shape_cast %175 : vector<1x1x128xf32> to vector<128xf32>
    %177 = vector.shape_cast %176 : vector<128xf32> to vector<1x128xf32>
    %178 = vector.extract_strided_slice %9 {offsets = [4, 0, 0], sizes = [1, 16, 128], strides = [1, 1, 1]} : vector<16x16x128xf32> to vector<1x16x128xf32>
    %179 = vector.shape_cast %178 : vector<1x16x128xf32> to vector<16x128xf32>
    %180 = vector.broadcast %177 : vector<1x128xf32> to vector<16x128xf32>
    %181 = arith.mulf %180, %179 : vector<16x128xf32>
    %182 = arith.addf %174, %181 : vector<16x128xf32>
    %183 = vector.extract_strided_slice %10 {offsets = [1, 5, 0], sizes = [1, 1, 128], strides = [1, 1, 1]} : vector<16x16x128xf32> to vector<1x1x128xf32>
    %184 = vector.shape_cast %183 : vector<1x1x128xf32> to vector<128xf32>
    %185 = vector.shape_cast %184 : vector<128xf32> to vector<1x128xf32>
    %186 = vector.extract_strided_slice %9 {offsets = [5, 0, 0], sizes = [1, 16, 128], strides = [1, 1, 1]} : vector<16x16x128xf32> to vector<1x16x128xf32>
    %187 = vector.shape_cast %186 : vector<1x16x128xf32> to vector<16x128xf32>
    %188 = vector.broadcast %185 : vector<1x128xf32> to vector<16x128xf32>
    %189 = arith.mulf %188, %187 : vector<16x128xf32>
    %190 = arith.addf %182, %189 : vector<16x128xf32>
    %191 = vector.extract_strided_slice %10 {offsets = [1, 6, 0], sizes = [1, 1, 128], strides = [1, 1, 1]} : vector<16x16x128xf32> to vector<1x1x128xf32>
    %192 = vector.shape_cast %191 : vector<1x1x128xf32> to vector<128xf32>
    %193 = vector.shape_cast %192 : vector<128xf32> to vector<1x128xf32>
    %194 = vector.extract_strided_slice %9 {offsets = [6, 0, 0], sizes = [1, 16, 128], strides = [1, 1, 1]} : vector<16x16x128xf32> to vector<1x16x128xf32>
    %195 = vector.shape_cast %194 : vector<1x16x128xf32> to vector<16x128xf32>
    %196 = vector.broadcast %193 : vector<1x128xf32> to vector<16x128xf32>
    %197 = arith.mulf %196, %195 : vector<16x128xf32>
    %198 = arith.addf %190, %197 : vector<16x128xf32>
    %199 = vector.extract_strided_slice %10 {offsets = [1, 7, 0], sizes = [1, 1, 128], strides = [1, 1, 1]} : vector<16x16x128xf32> to vector<1x1x128xf32>
    %200 = vector.shape_cast %199 : vector<1x1x128xf32> to vector<128xf32>
    %201 = vector.shape_cast %200 : vector<128xf32> to vector<1x128xf32>
    %202 = vector.extract_strided_slice %9 {offsets = [7, 0, 0], sizes = [1, 16, 128], strides = [1, 1, 1]} : vector<16x16x128xf32> to vector<1x16x128xf32>
    %203 = vector.shape_cast %202 : vector<1x16x128xf32> to vector<16x128xf32>
    %204 = vector.broadcast %201 : vector<1x128xf32> to vector<16x128xf32>
    %205 = arith.mulf %204, %203 : vector<16x128xf32>
    %206 = arith.addf %198, %205 : vector<16x128xf32>
    %207 = vector.extract_strided_slice %10 {offsets = [1, 8, 0], sizes = [1, 1, 128], strides = [1, 1, 1]} : vector<16x16x128xf32> to vector<1x1x128xf32>
    %208 = vector.shape_cast %207 : vector<1x1x128xf32> to vector<128xf32>
    %209 = vector.shape_cast %208 : vector<128xf32> to vector<1x128xf32>
    %210 = vector.extract_strided_slice %9 {offsets = [8, 0, 0], sizes = [1, 16, 128], strides = [1, 1, 1]} : vector<16x16x128xf32> to vector<1x16x128xf32>
    %211 = vector.shape_cast %210 : vector<1x16x128xf32> to vector<16x128xf32>
    %212 = vector.broadcast %209 : vector<1x128xf32> to vector<16x128xf32>
    %213 = arith.mulf %212, %211 : vector<16x128xf32>
    %214 = arith.addf %206, %213 : vector<16x128xf32>
    %215 = vector.extract_strided_slice %10 {offsets = [1, 9, 0], sizes = [1, 1, 128], strides = [1, 1, 1]} : vector<16x16x128xf32> to vector<1x1x128xf32>
    %216 = vector.shape_cast %215 : vector<1x1x128xf32> to vector<128xf32>
    %217 = vector.shape_cast %216 : vector<128xf32> to vector<1x128xf32>
    %218 = vector.extract_strided_slice %9 {offsets = [9, 0, 0], sizes = [1, 16, 128], strides = [1, 1, 1]} : vector<16x16x128xf32> to vector<1x16x128xf32>
    %219 = vector.shape_cast %218 : vector<1x16x128xf32> to vector<16x128xf32>
    %220 = vector.broadcast %217 : vector<1x128xf32> to vector<16x128xf32>
    %221 = arith.mulf %220, %219 : vector<16x128xf32>
    %222 = arith.addf %214, %221 : vector<16x128xf32>
    %223 = vector.extract_strided_slice %10 {offsets = [1, 10, 0], sizes = [1, 1, 128], strides = [1, 1, 1]} : vector<16x16x128xf32> to vector<1x1x128xf32>
    %224 = vector.shape_cast %223 : vector<1x1x128xf32> to vector<128xf32>
    %225 = vector.shape_cast %224 : vector<128xf32> to vector<1x128xf32>
    %226 = vector.extract_strided_slice %9 {offsets = [10, 0, 0], sizes = [1, 16, 128], strides = [1, 1, 1]} : vector<16x16x128xf32> to vector<1x16x128xf32>
    %227 = vector.shape_cast %226 : vector<1x16x128xf32> to vector<16x128xf32>
    %228 = vector.broadcast %225 : vector<1x128xf32> to vector<16x128xf32>
    %229 = arith.mulf %228, %227 : vector<16x128xf32>
    %230 = arith.addf %222, %229 : vector<16x128xf32>
    %231 = vector.extract_strided_slice %10 {offsets = [1, 11, 0], sizes = [1, 1, 128], strides = [1, 1, 1]} : vector<16x16x128xf32> to vector<1x1x128xf32>
    %232 = vector.shape_cast %231 : vector<1x1x128xf32> to vector<128xf32>
    %233 = vector.shape_cast %232 : vector<128xf32> to vector<1x128xf32>
    %234 = vector.extract_strided_slice %9 {offsets = [11, 0, 0], sizes = [1, 16, 128], strides = [1, 1, 1]} : vector<16x16x128xf32> to vector<1x16x128xf32>
    %235 = vector.shape_cast %234 : vector<1x16x128xf32> to vector<16x128xf32>
    %236 = vector.broadcast %233 : vector<1x128xf32> to vector<16x128xf32>
    %237 = arith.mulf %236, %235 : vector<16x128xf32>
    %238 = arith.addf %230, %237 : vector<16x128xf32>
    %239 = vector.extract_strided_slice %10 {offsets = [1, 12, 0], sizes = [1, 1, 128], strides = [1, 1, 1]} : vector<16x16x128xf32> to vector<1x1x128xf32>
    %240 = vector.shape_cast %239 : vector<1x1x128xf32> to vector<128xf32>
    %241 = vector.shape_cast %240 : vector<128xf32> to vector<1x128xf32>
    %242 = vector.extract_strided_slice %9 {offsets = [12, 0, 0], sizes = [1, 16, 128], strides = [1, 1, 1]} : vector<16x16x128xf32> to vector<1x16x128xf32>
    %243 = vector.shape_cast %242 : vector<1x16x128xf32> to vector<16x128xf32>
    %244 = vector.broadcast %241 : vector<1x128xf32> to vector<16x128xf32>
    %245 = arith.mulf %244, %243 : vector<16x128xf32>
    %246 = arith.addf %238, %245 : vector<16x128xf32>
    %247 = vector.extract_strided_slice %10 {offsets = [1, 13, 0], sizes = [1, 1, 128], strides = [1, 1, 1]} : vector<16x16x128xf32> to vector<1x1x128xf32>
    %248 = vector.shape_cast %247 : vector<1x1x128xf32> to vector<128xf32>
    %249 = vector.shape_cast %248 : vector<128xf32> to vector<1x128xf32>
    %250 = vector.extract_strided_slice %9 {offsets = [13, 0, 0], sizes = [1, 16, 128], strides = [1, 1, 1]} : vector<16x16x128xf32> to vector<1x16x128xf32>
    %251 = vector.shape_cast %250 : vector<1x16x128xf32> to vector<16x128xf32>
    %252 = vector.broadcast %249 : vector<1x128xf32> to vector<16x128xf32>
    %253 = arith.mulf %252, %251 : vector<16x128xf32>
    %254 = arith.addf %246, %253 : vector<16x128xf32>
    %255 = vector.extract_strided_slice %10 {offsets = [1, 14, 0], sizes = [1, 1, 128], strides = [1, 1, 1]} : vector<16x16x128xf32> to vector<1x1x128xf32>
    %256 = vector.shape_cast %255 : vector<1x1x128xf32> to vector<128xf32>
    %257 = vector.shape_cast %256 : vector<128xf32> to vector<1x128xf32>
    %258 = vector.extract_strided_slice %9 {offsets = [14, 0, 0], sizes = [1, 16, 128], strides = [1, 1, 1]} : vector<16x16x128xf32> to vector<1x16x128xf32>
    %259 = vector.shape_cast %258 : vector<1x16x128xf32> to vector<16x128xf32>
    %260 = vector.broadcast %257 : vector<1x128xf32> to vector<16x128xf32>
    %261 = arith.mulf %260, %259 : vector<16x128xf32>
    %262 = arith.addf %254, %261 : vector<16x128xf32>
    %263 = vector.extract_strided_slice %10 {offsets = [1, 15, 0], sizes = [1, 1, 128], strides = [1, 1, 1]} : vector<16x16x128xf32> to vector<1x1x128xf32>
    %264 = vector.shape_cast %263 : vector<1x1x128xf32> to vector<128xf32>
    %265 = vector.shape_cast %264 : vector<128xf32> to vector<1x128xf32>
    %266 = vector.extract_strided_slice %9 {offsets = [15, 0, 0], sizes = [1, 16, 128], strides = [1, 1, 1]} : vector<16x16x128xf32> to vector<1x16x128xf32>
    %267 = vector.shape_cast %266 : vector<1x16x128xf32> to vector<16x128xf32>
    %268 = vector.broadcast %265 : vector<1x128xf32> to vector<16x128xf32>
    %269 = arith.mulf %268, %267 : vector<16x128xf32>
    %270 = arith.addf %262, %269 : vector<16x128xf32>
    %c1 = arith.constant 1 : index
    %c0_14 = arith.constant 0 : index
    %c0_15 = arith.constant 0 : index
    %271 = vector.load %arg5[%c1, %c0_14, %c0_15] : memref<16x16x128xf32, #tpu.memory_space<vmem>>, vector<1x16x128xf32>
    %272 = vector.shape_cast %271 : vector<1x16x128xf32> to vector<16x128xf32>
    %273 = arith.subf %270, %272 : vector<16x128xf32>
    %c1_16 = arith.constant 1 : index
    %c0_17 = arith.constant 0 : index
    %c0_18 = arith.constant 0 : index
    %274 = vector.load %arg6[%c1_16, %c0_17, %c0_18] : memref<16x16x128xf32, #tpu.memory_space<vmem>>, vector<1x16x128xf32>
    %275 = vector.shape_cast %274 : vector<1x16x128xf32> to vector<16x128xf32>
    %276 = vector.shape_cast %273 : vector<16x128xf32> to vector<1x16x128xf32>
    tpu.vector_store %arg6[%c1_16, %c0_17, %c0_18], %276 {strides = array<i32>} : memref<16x16x128xf32, #tpu.memory_space<vmem>>, vector<1x16x128xf32>,
    %277 = vector.extract_strided_slice %10 {offsets = [2, 0, 0], sizes = [1, 1, 128], strides = [1, 1, 1]} : vector<16x16x128xf32> to vector<1x1x128xf32>
    %278 = vector.shape_cast %277 : vector<1x1x128xf32> to vector<128xf32>
    %279 = vector.shape_cast %278 : vector<128xf32> to vector<1x128xf32>
    %280 = vector.extract_strided_slice %9 {offsets = [0, 0, 0], sizes = [1, 16, 128], strides = [1, 1, 1]} : vector<16x16x128xf32> to vector<1x16x128xf32>
    %281 = vector.shape_cast %280 : vector<1x16x128xf32> to vector<16x128xf32>
    %282 = vector.broadcast %279 : vector<1x128xf32> to vector<16x128xf32>
    %283 = arith.mulf %282, %281 : vector<16x128xf32>
    %284 = vector.extract_strided_slice %10 {offsets = [2, 1, 0], sizes = [1, 1, 128], strides = [1, 1, 1]} : vector<16x16x128xf32> to vector<1x1x128xf32>
    %285 = vector.shape_cast %284 : vector<1x1x128xf32> to vector<128xf32>
    %286 = vector.shape_cast %285 : vector<128xf32> to vector<1x128xf32>
    %287 = vector.extract_strided_slice %9 {offsets = [1, 0, 0], sizes = [1, 16, 128], strides = [1, 1, 1]} : vector<16x16x128xf32> to vector<1x16x128xf32>
    %288 = vector.shape_cast %287 : vector<1x16x128xf32> to vector<16x128xf32>
    %289 = vector.broadcast %286 : vector<1x128xf32> to vector<16x128xf32>
    %290 = arith.mulf %289, %288 : vector<16x128xf32>
    %291 = arith.addf %283, %290 : vector<16x128xf32>
    %292 = vector.extract_strided_slice %10 {offsets = [2, 2, 0], sizes = [1, 1, 128], strides = [1, 1, 1]} : vector<16x16x128xf32> to vector<1x1x128xf32>
    %293 = vector.shape_cast %292 : vector<1x1x128xf32> to vector<128xf32>
    %294 = vector.shape_cast %293 : vector<128xf32> to vector<1x128xf32>
    %295 = vector.extract_strided_slice %9 {offsets = [2, 0, 0], sizes = [1, 16, 128], strides = [1, 1, 1]} : vector<16x16x128xf32> to vector<1x16x128xf32>
    %296 = vector.shape_cast %295 : vector<1x16x128xf32> to vector<16x128xf32>
    %297 = vector.broadcast %294 : vector<1x128xf32> to vector<16x128xf32>
    %298 = arith.mulf %297, %296 : vector<16x128xf32>
    %299 = arith.addf %291, %298 : vector<16x128xf32>
    %300 = vector.extract_strided_slice %10 {offsets = [2, 3, 0], sizes = [1, 1, 128], strides = [1, 1, 1]} : vector<16x16x128xf32> to vector<1x1x128xf32>
    %301 = vector.shape_cast %300 : vector<1x1x128xf32> to vector<128xf32>
    %302 = vector.shape_cast %301 : vector<128xf32> to vector<1x128xf32>
    %303 = vector.extract_strided_slice %9 {offsets = [3, 0, 0], sizes = [1, 16, 128], strides = [1, 1, 1]} : vector<16x16x128xf32> to vector<1x16x128xf32>
    %304 = vector.shape_cast %303 : vector<1x16x128xf32> to vector<16x128xf32>
    %305 = vector.broadcast %302 : vector<1x128xf32> to vector<16x128xf32>
    %306 = arith.mulf %305, %304 : vector<16x128xf32>
    %307 = arith.addf %299, %306 : vector<16x128xf32>
    %308 = vector.extract_strided_slice %10 {offsets = [2, 4, 0], sizes = [1, 1, 128], strides = [1, 1, 1]} : vector<16x16x128xf32> to vector<1x1x128xf32>
    %309 = vector.shape_cast %308 : vector<1x1x128xf32> to vector<128xf32>
    %310 = vector.shape_cast %309 : vector<128xf32> to vector<1x128xf32>
    %311 = vector.extract_strided_slice %9 {offsets = [4, 0, 0], sizes = [1, 16, 128], strides = [1, 1, 1]} : vector<16x16x128xf32> to vector<1x16x128xf32>
    %312 = vector.shape_cast %311 : vector<1x16x128xf32> to vector<16x128xf32>
    %313 = vector.broadcast %310 : vector<1x128xf32> to vector<16x128xf32>
    %314 = arith.mulf %313, %312 : vector<16x128xf32>
    %315 = arith.addf %307, %314 : vector<16x128xf32>
    %316 = vector.extract_strided_slice %10 {offsets = [2, 5, 0], sizes = [1, 1, 128], strides = [1, 1, 1]} : vector<16x16x128xf32> to vector<1x1x128xf32>
    %317 = vector.shape_cast %316 : vector<1x1x128xf32> to vector<128xf32>
    %318 = vector.shape_cast %317 : vector<128xf32> to vector<1x128xf32>
    %319 = vector.extract_strided_slice %9 {offsets = [5, 0, 0], sizes = [1, 16, 128], strides = [1, 1, 1]} : vector<16x16x128xf32> to vector<1x16x128xf32>
    %320 = vector.shape_cast %319 : vector<1x16x128xf32> to vector<16x128xf32>
    %321 = vector.broadcast %318 : vector<1x128xf32> to vector<16x128xf32>
    %322 = arith.mulf %321, %320 : vector<16x128xf32>
    %323 = arith.addf %315, %322 : vector<16x128xf32>
    %324 = vector.extract_strided_slice %10 {offsets = [2, 6, 0], sizes = [1, 1, 128], strides = [1, 1, 1]} : vector<16x16x128xf32> to vector<1x1x128xf32>
    %325 = vector.shape_cast %324 : vector<1x1x128xf32> to vector<128xf32>
    %326 = vector.shape_cast %325 : vector<128xf32> to vector<1x128xf32>
    %327 = vector.extract_strided_slice %9 {offsets = [6, 0, 0], sizes = [1, 16, 128], strides = [1, 1, 1]} : vector<16x16x128xf32> to vector<1x16x128xf32>
    %328 = vector.shape_cast %327 : vector<1x16x128xf32> to vector<16x128xf32>
    %329 = vector.broadcast %326 : vector<1x128xf32> to vector<16x128xf32>
    %330 = arith.mulf %329, %328 : vector<16x128xf32>
    %331 = arith.addf %323, %330 : vector<16x128xf32>
    %332 = vector.extract_strided_slice %10 {offsets = [2, 7, 0], sizes = [1, 1, 128], strides = [1, 1, 1]} : vector<16x16x128xf32> to vector<1x1x128xf32>
    %333 = vector.shape_cast %332 : vector<1x1x128xf32> to vector<128xf32>
    %334 = vector.shape_cast %333 : vector<128xf32> to vector<1x128xf32>
    %335 = vector.extract_strided_slice %9 {offsets = [7, 0, 0], sizes = [1, 16, 128], strides = [1, 1, 1]} : vector<16x16x128xf32> to vector<1x16x128xf32>
    %336 = vector.shape_cast %335 : vector<1x16x128xf32> to vector<16x128xf32>
    %337 = vector.broadcast %334 : vector<1x128xf32> to vector<16x128xf32>
    %338 = arith.mulf %337, %336 : vector<16x128xf32>
    %339 = arith.addf %331, %338 : vector<16x128xf32>
    %340 = vector.extract_strided_slice %10 {offsets = [2, 8, 0], sizes = [1, 1, 128], strides = [1, 1, 1]} : vector<16x16x128xf32> to vector<1x1x128xf32>
    %341 = vector.shape_cast %340 : vector<1x1x128xf32> to vector<128xf32>
    %342 = vector.shape_cast %341 : vector<128xf32> to vector<1x128xf32>
    %343 = vector.extract_strided_slice %9 {offsets = [8, 0, 0], sizes = [1, 16, 128], strides = [1, 1, 1]} : vector<16x16x128xf32> to vector<1x16x128xf32>
    %344 = vector.shape_cast %343 : vector<1x16x128xf32> to vector<16x128xf32>
    %345 = vector.broadcast %342 : vector<1x128xf32> to vector<16x128xf32>
    %346 = arith.mulf %345, %344 : vector<16x128xf32>
    %347 = arith.addf %339, %346 : vector<16x128xf32>
    %348 = vector.extract_strided_slice %10 {offsets = [2, 9, 0], sizes = [1, 1, 128], strides = [1, 1, 1]} : vector<16x16x128xf32> to vector<1x1x128xf32>
    %349 = vector.shape_cast %348 : vector<1x1x128xf32> to vector<128xf32>
    %350 = vector.shape_cast %349 : vector<128xf32> to vector<1x128xf32>
    %351 = vector.extract_strided_slice %9 {offsets = [9, 0, 0], sizes = [1, 16, 128], strides = [1, 1, 1]} : vector<16x16x128xf32> to vector<1x16x128xf32>
    %352 = vector.shape_cast %351 : vector<1x16x128xf32> to vector<16x128xf32>
    %353 = vector.broadcast %350 : vector<1x128xf32> to vector<16x128xf32>
    %354 = arith.mulf %353, %352 : vector<16x128xf32>
    %355 = arith.addf %347, %354 : vector<16x128xf32>
    %356 = vector.extract_strided_slice %10 {offsets = [2, 10, 0], sizes = [1, 1, 128], strides = [1, 1, 1]} : vector<16x16x128xf32> to vector<1x1x128xf32>
    %357 = vector.shape_cast %356 : vector<1x1x128xf32> to vector<128xf32>
    %358 = vector.shape_cast %357 : vector<128xf32> to vector<1x128xf32>
    %359 = vector.extract_strided_slice %9 {offsets = [10, 0, 0], sizes = [1, 16, 128], strides = [1, 1, 1]} : vector<16x16x128xf32> to vector<1x16x128xf32>
    %360 = vector.shape_cast %359 : vector<1x16x128xf32> to vector<16x128xf32>
    %361 = vector.broadcast %358 : vector<1x128xf32> to vector<16x128xf32>
    %362 = arith.mulf %361, %360 : vector<16x128xf32>
    %363 = arith.addf %355, %362 : vector<16x128xf32>
    %364 = vector.extract_strided_slice %10 {offsets = [2, 11, 0], sizes = [1, 1, 128], strides = [1, 1, 1]} : vector<16x16x128xf32> to vector<1x1x128xf32>
    %365 = vector.shape_cast %364 : vector<1x1x128xf32> to vector<128xf32>
    %366 = vector.shape_cast %365 : vector<128xf32> to vector<1x128xf32>
    %367 = vector.extract_strided_slice %9 {offsets = [11, 0, 0], sizes = [1, 16, 128], strides = [1, 1, 1]} : vector<16x16x128xf32> to vector<1x16x128xf32>
    %368 = vector.shape_cast %367 : vector<1x16x128xf32> to vector<16x128xf32>
    %369 = vector.broadcast %366 : vector<1x128xf32> to vector<16x128xf32>
    %370 = arith.mulf %369, %368 : vector<16x128xf32>
    %371 = arith.addf %363, %370 : vector<16x128xf32>
    %372 = vector.extract_strided_slice %10 {offsets = [2, 12, 0], sizes = [1, 1, 128], strides = [1, 1, 1]} : vector<16x16x128xf32> to vector<1x1x128xf32>
    %373 = vector.shape_cast %372 : vector<1x1x128xf32> to vector<128xf32>
    %374 = vector.shape_cast %373 : vector<128xf32> to vector<1x128xf32>
    %375 = vector.extract_strided_slice %9 {offsets = [12, 0, 0], sizes = [1, 16, 128], strides = [1, 1, 1]} : vector<16x16x128xf32> to vector<1x16x128xf32>
    %376 = vector.shape_cast %375 : vector<1x16x128xf32> to vector<16x128xf32>
    %377 = vector.broadcast %374 : vector<1x128xf32> to vector<16x128xf32>
    %378 = arith.mulf %377, %376 : vector<16x128xf32>
    %379 = arith.addf %371, %378 : vector<16x128xf32>
    %380 = vector.extract_strided_slice %10 {offsets = [2, 13, 0], sizes = [1, 1, 128], strides = [1, 1, 1]} : vector<16x16x128xf32> to vector<1x1x128xf32>
    %381 = vector.shape_cast %380 : vector<1x1x128xf32> to vector<128xf32>
    %382 = vector.shape_cast %381 : vector<128xf32> to vector<1x128xf32>
    %383 = vector.extract_strided_slice %9 {offsets = [13, 0, 0], sizes = [1, 16, 128], strides = [1, 1, 1]} : vector<16x16x128xf32> to vector<1x16x128xf32>
    %384 = vector.shape_cast %383 : vector<1x16x128xf32> to vector<16x128xf32>
    %385 = vector.broadcast %382 : vector<1x128xf32> to vector<16x128xf32>
    %386 = arith.mulf %385, %384 : vector<16x128xf32>
    %387 = arith.addf %379, %386 : vector<16x128xf32>
    %388 = vector.extract_strided_slice %10 {offsets = [2, 14, 0], sizes = [1, 1, 128], strides = [1, 1, 1]} : vector<16x16x128xf32> to vector<1x1x128xf32>
    %389 = vector.shape_cast %388 : vector<1x1x128xf32> to vector<128xf32>
    %390 = vector.shape_cast %389 : vector<128xf32> to vector<1x128xf32>
    %391 = vector.extract_strided_slice %9 {offsets = [14, 0, 0], sizes = [1, 16, 128], strides = [1, 1, 1]} : vector<16x16x128xf32> to vector<1x16x128xf32>
    %392 = vector.shape_cast %391 : vector<1x16x128xf32> to vector<16x128xf32>
    %393 = vector.broadcast %390 : vector<1x128xf32> to vector<16x128xf32>
    %394 = arith.mulf %393, %392 : vector<16x128xf32>
    %395 = arith.addf %387, %394 : vector<16x128xf32>
    %396 = vector.extract_strided_slice %10 {offsets = [2, 15, 0], sizes = [1, 1, 128], strides = [1, 1, 1]} : vector<16x16x128xf32> to vector<1x1x128xf32>
    %397 = vector.shape_cast %396 : vector<1x1x128xf32> to vector<128xf32>
    %398 = vector.shape_cast %397 : vector<128xf32> to vector<1x128xf32>
    %399 = vector.extract_strided_slice %9 {offsets = [15, 0, 0], sizes = [1, 16, 128], strides = [1, 1, 1]} : vector<16x16x128xf32> to vector<1x16x128xf32>
    %400 = vector.shape_cast %399 : vector<1x16x128xf32> to vector<16x128xf32>
    %401 = vector.broadcast %398 : vector<1x128xf32> to vector<16x128xf32>
    %402 = arith.mulf %401, %400 : vector<16x128xf32>
    %403 = arith.addf %395, %402 : vector<16x128xf32>
    %c2 = arith.constant 2 : index
    %c0_19 = arith.constant 0 : index
    %c0_20 = arith.constant 0 : index
    %404 = vector.load %arg5[%c2, %c0_19, %c0_20] : memref<16x16x128xf32, #tpu.memory_space<vmem>>, vector<1x16x128xf32>
    %405 = vector.shape_cast %404 : vector<1x16x128xf32> to vector<16x128xf32>
    %406 = arith.subf %403, %405 : vector<16x128xf32>
    %c2_21 = arith.constant 2 : index
    %c0_22 = arith.constant 0 : index
    %c0_23 = arith.constant 0 : index
    %407 = vector.load %arg6[%c2_21, %c0_22, %c0_23] : memref<16x16x128xf32, #tpu.memory_space<vmem>>, vector<1x16x128xf32>
    %408 = vector.shape_cast %407 : vector<1x16x128xf32> to vector<16x128xf32>
    %409 = vector.shape_cast %406 : vector<16x128xf32> to vector<1x16x128xf32>
    tpu.vector_store %arg6[%c2_21, %c0_22, %c0_23], %409 {strides = array<i32>} : memref<16x16x128xf32, #tpu.memory_space<vmem>>, vector<1x16x128xf32>,
    %410 = vector.extract_strided_slice %10 {offsets = [3, 0, 0], sizes = [1, 1, 128], strides = [1, 1, 1]} : vector<16x16x128xf32> to vector<1x1x128xf32>
    %411 = vector.shape_cast %410 : vector<1x1x128xf32> to vector<128xf32>
    %412 = vector.shape_cast %411 : vector<128xf32> to vector<1x128xf32>
    %413 = vector.extract_strided_slice %9 {offsets = [0, 0, 0], sizes = [1, 16, 128], strides = [1, 1, 1]} : vector<16x16x128xf32> to vector<1x16x128xf32>
    %414 = vector.shape_cast %413 : vector<1x16x128xf32> to vector<16x128xf32>
    %415 = vector.broadcast %412 : vector<1x128xf32> to vector<16x128xf32>
    %416 = arith.mulf %415, %414 : vector<16x128xf32>
    %417 = vector.extract_strided_slice %10 {offsets = [3, 1, 0], sizes = [1, 1, 128], strides = [1, 1, 1]} : vector<16x16x128xf32> to vector<1x1x128xf32>
    %418 = vector.shape_cast %417 : vector<1x1x128xf32> to vector<128xf32>
    %419 = vector.shape_cast %418 : vector<128xf32> to vector<1x128xf32>
    %420 = vector.extract_strided_slice %9 {offsets = [1, 0, 0], sizes = [1, 16, 128], strides = [1, 1, 1]} : vector<16x16x128xf32> to vector<1x16x128xf32>
    %421 = vector.shape_cast %420 : vector<1x16x128xf32> to vector<16x128xf32>
    %422 = vector.broadcast %419 : vector<1x128xf32> to vector<16x128xf32>
    %423 = arith.mulf %422, %421 : vector<16x128xf32>
    %424 = arith.addf %416, %423 : vector<16x128xf32>
    %425 = vector.extract_strided_slice %10 {offsets = [3, 2, 0], sizes = [1, 1, 128], strides = [1, 1, 1]} : vector<16x16x128xf32> to vector<1x1x128xf32>
    %426 = vector.shape_cast %425 : vector<1x1x128xf32> to vector<128xf32>
    %427 = vector.shape_cast %426 : vector<128xf32> to vector<1x128xf32>
    %428 = vector.extract_strided_slice %9 {offsets = [2, 0, 0], sizes = [1, 16, 128], strides = [1, 1, 1]} : vector<16x16x128xf32> to vector<1x16x128xf32>
    %429 = vector.shape_cast %428 : vector<1x16x128xf32> to vector<16x128xf32>
    %430 = vector.broadcast %427 : vector<1x128xf32> to vector<16x128xf32>
    %431 = arith.mulf %430, %429 : vector<16x128xf32>
    %432 = arith.addf %424, %431 : vector<16x128xf32>
    %433 = vector.extract_strided_slice %10 {offsets = [3, 3, 0], sizes = [1, 1, 128], strides = [1, 1, 1]} : vector<16x16x128xf32> to vector<1x1x128xf32>
    %434 = vector.shape_cast %433 : vector<1x1x128xf32> to vector<128xf32>
    %435 = vector.shape_cast %434 : vector<128xf32> to vector<1x128xf32>
    %436 = vector.extract_strided_slice %9 {offsets = [3, 0, 0], sizes = [1, 16, 128], strides = [1, 1, 1]} : vector<16x16x128xf32> to vector<1x16x128xf32>
    %437 = vector.shape_cast %436 : vector<1x16x128xf32> to vector<16x128xf32>
    %438 = vector.broadcast %435 : vector<1x128xf32> to vector<16x128xf32>
    %439 = arith.mulf %438, %437 : vector<16x128xf32>
    %440 = arith.addf %432, %439 : vector<16x128xf32>
    %441 = vector.extract_strided_slice %10 {offsets = [3, 4, 0], sizes = [1, 1, 128], strides = [1, 1, 1]} : vector<16x16x128xf32> to vector<1x1x128xf32>
    %442 = vector.shape_cast %441 : vector<1x1x128xf32> to vector<128xf32>
    %443 = vector.shape_cast %442 : vector<128xf32> to vector<1x128xf32>
    %444 = vector.extract_strided_slice %9 {offsets = [4, 0, 0], sizes = [1, 16, 128], strides = [1, 1, 1]} : vector<16x16x128xf32> to vector<1x16x128xf32>
    %445 = vector.shape_cast %444 : vector<1x16x128xf32> to vector<16x128xf32>
    %446 = vector.broadcast %443 : vector<1x128xf32> to vector<16x128xf32>
    %447 = arith.mulf %446, %445 : vector<16x128xf32>
    %448 = arith.addf %440, %447 : vector<16x128xf32>
    %449 = vector.extract_strided_slice %10 {offsets = [3, 5, 0], sizes = [1, 1, 128], strides = [1, 1, 1]} : vector<16x16x128xf32> to vector<1x1x128xf32>
    %450 = vector.shape_cast %449 : vector<1x1x128xf32> to vector<128xf32>
    %451 = vector.shape_cast %450 : vector<128xf32> to vector<1x128xf32>
    %452 = vector.extract_strided_slice %9 {offsets = [5, 0, 0], sizes = [1, 16, 128], strides = [1, 1, 1]} : vector<16x16x128xf32> to vector<1x16x128xf32>
    %453 = vector.shape_cast %452 : vector<1x16x128xf32> to vector<16x128xf32>
    %454 = vector.broadcast %451 : vector<1x128xf32> to vector<16x128xf32>
    %455 = arith.mulf %454, %453 : vector<16x128xf32>
    %456 = arith.addf %448, %455 : vector<16x128xf32>
    %457 = vector.extract_strided_slice %10 {offsets = [3, 6, 0], sizes = [1, 1, 128], strides = [1, 1, 1]} : vector<16x16x128xf32> to vector<1x1x128xf32>
    %458 = vector.shape_cast %457 : vector<1x1x128xf32> to vector<128xf32>
    %459 = vector.shape_cast %458 : vector<128xf32> to vector<1x128xf32>
    %460 = vector.extract_strided_slice %9 {offsets = [6, 0, 0], sizes = [1, 16, 128], strides = [1, 1, 1]} : vector<16x16x128xf32> to vector<1x16x128xf32>
    %461 = vector.shape_cast %460 : vector<1x16x128xf32> to vector<16x128xf32>
    %462 = vector.broadcast %459 : vector<1x128xf32> to vector<16x128xf32>
    %463 = arith.mulf %462, %461 : vector<16x128xf32>
    %464 = arith.addf %456, %463 : vector<16x128xf32>
    %465 = vector.extract_strided_slice %10 {offsets = [3, 7, 0], sizes = [1, 1, 128], strides = [1, 1, 1]} : vector<16x16x128xf32> to vector<1x1x128xf32>
    %466 = vector.shape_cast %465 : vector<1x1x128xf32> to vector<128xf32>
    %467 = vector.shape_cast %466 : vector<128xf32> to vector<1x128xf32>
    %468 = vector.extract_strided_slice %9 {offsets = [7, 0, 0], sizes = [1, 16, 128], strides = [1, 1, 1]} : vector<16x16x128xf32> to vector<1x16x128xf32>
    %469 = vector.shape_cast %468 : vector<1x16x128xf32> to vector<16x128xf32>
    %470 = vector.broadcast %467 : vector<1x128xf32> to vector<16x128xf32>
    %471 = arith.mulf %470, %469 : vector<16x128xf32>
    %472 = arith.addf %464, %471 : vector<16x128xf32>
    %473 = vector.extract_strided_slice %10 {offsets = [3, 8, 0], sizes = [1, 1, 128], strides = [1, 1, 1]} : vector<16x16x128xf32> to vector<1x1x128xf32>
    %474 = vector.shape_cast %473 : vector<1x1x128xf32> to vector<128xf32>
    %475 = vector.shape_cast %474 : vector<128xf32> to vector<1x128xf32>
    %476 = vector.extract_strided_slice %9 {offsets = [8, 0, 0], sizes = [1, 16, 128], strides = [1, 1, 1]} : vector<16x16x128xf32> to vector<1x16x128xf32>
    %477 = vector.shape_cast %476 : vector<1x16x128xf32> to vector<16x128xf32>
    %478 = vector.broadcast %475 : vector<1x128xf32> to vector<16x128xf32>
    %479 = arith.mulf %478, %477 : vector<16x128xf32>
    %480 = arith.addf %472, %479 : vector<16x128xf32>
    %481 = vector.extract_strided_slice %10 {offsets = [3, 9, 0], sizes = [1, 1, 128], strides = [1, 1, 1]} : vector<16x16x128xf32> to vector<1x1x128xf32>
    %482 = vector.shape_cast %481 : vector<1x1x128xf32> to vector<128xf32>
    %483 = vector.shape_cast %482 : vector<128xf32> to vector<1x128xf32>
    %484 = vector.extract_strided_slice %9 {offsets = [9, 0, 0], sizes = [1, 16, 128], strides = [1, 1, 1]} : vector<16x16x128xf32> to vector<1x16x128xf32>
    %485 = vector.shape_cast %484 : vector<1x16x128xf32> to vector<16x128xf32>
    %486 = vector.broadcast %483 : vector<1x128xf32> to vector<16x128xf32>
    %487 = arith.mulf %486, %485 : vector<16x128xf32>
    %488 = arith.addf %480, %487 : vector<16x128xf32>
    %489 = vector.extract_strided_slice %10 {offsets = [3, 10, 0], sizes = [1, 1, 128], strides = [1, 1, 1]} : vector<16x16x128xf32> to vector<1x1x128xf32>
    %490 = vector.shape_cast %489 : vector<1x1x128xf32> to vector<128xf32>
    %491 = vector.shape_cast %490 : vector<128xf32> to vector<1x128xf32>
    %492 = vector.extract_strided_slice %9 {offsets = [10, 0, 0], sizes = [1, 16, 128], strides = [1, 1, 1]} : vector<16x16x128xf32> to vector<1x16x128xf32>
    %493 = vector.shape_cast %492 : vector<1x16x128xf32> to vector<16x128xf32>
    %494 = vector.broadcast %491 : vector<1x128xf32> to vector<16x128xf32>
    %495 = arith.mulf %494, %493 : vector<16x128xf32>
    %496 = arith.addf %488, %495 : vector<16x128xf32>
    %497 = vector.extract_strided_slice %10 {offsets = [3, 11, 0], sizes = [1, 1, 128], strides = [1, 1, 1]} : vector<16x16x128xf32> to vector<1x1x128xf32>
    %498 = vector.shape_cast %497 : vector<1x1x128xf32> to vector<128xf32>
    %499 = vector.shape_cast %498 : vector<128xf32> to vector<1x128xf32>
    %500 = vector.extract_strided_slice %9 {offsets = [11, 0, 0], sizes = [1, 16, 128], strides = [1, 1, 1]} : vector<16x16x128xf32> to vector<1x16x128xf32>
    %501 = vector.shape_cast %500 : vector<1x16x128xf32> to vector<16x128xf32>
    %502 = vector.broadcast %499 : vector<1x128xf32> to vector<16x128xf32>
    %503 = arith.mulf %502, %501 : vector<16x128xf32>
    %504 = arith.addf %496, %503 : vector<16x128xf32>
    %505 = vector.extract_strided_slice %10 {offsets = [3, 12, 0], sizes = [1, 1, 128], strides = [1, 1, 1]} : vector<16x16x128xf32> to vector<1x1x128xf32>
    %506 = vector.shape_cast %505 : vector<1x1x128xf32> to vector<128xf32>
    %507 = vector.shape_cast %506 : vector<128xf32> to vector<1x128xf32>
    %508 = vector.extract_strided_slice %9 {offsets = [12, 0, 0], sizes = [1, 16, 128], strides = [1, 1, 1]} : vector<16x16x128xf32> to vector<1x16x128xf32>
    %509 = vector.shape_cast %508 : vector<1x16x128xf32> to vector<16x128xf32>
    %510 = vector.broadcast %507 : vector<1x128xf32> to vector<16x128xf32>
    %511 = arith.mulf %510, %509 : vector<16x128xf32>
    %512 = arith.addf %504, %511 : vector<16x128xf32>
    %513 = vector.extract_strided_slice %10 {offsets = [3, 13, 0], sizes = [1, 1, 128], strides = [1, 1, 1]} : vector<16x16x128xf32> to vector<1x1x128xf32>
    %514 = vector.shape_cast %513 : vector<1x1x128xf32> to vector<128xf32>
    %515 = vector.shape_cast %514 : vector<128xf32> to vector<1x128xf32>
    %516 = vector.extract_strided_slice %9 {offsets = [13, 0, 0], sizes = [1, 16, 128], strides = [1, 1, 1]} : vector<16x16x128xf32> to vector<1x16x128xf32>
    %517 = vector.shape_cast %516 : vector<1x16x128xf32> to vector<16x128xf32>
    %518 = vector.broadcast %515 : vector<1x128xf32> to vector<16x128xf32>
    %519 = arith.mulf %518, %517 : vector<16x128xf32>
    %520 = arith.addf %512, %519 : vector<16x128xf32>
    %521 = vector.extract_strided_slice %10 {offsets = [3, 14, 0], sizes = [1, 1, 128], strides = [1, 1, 1]} : vector<16x16x128xf32> to vector<1x1x128xf32>
    %522 = vector.shape_cast %521 : vector<1x1x128xf32> to vector<128xf32>
    %523 = vector.shape_cast %522 : vector<128xf32> to vector<1x128xf32>
    %524 = vector.extract_strided_slice %9 {offsets = [14, 0, 0], sizes = [1, 16, 128], strides = [1, 1, 1]} : vector<16x16x128xf32> to vector<1x16x128xf32>
    %525 = vector.shape_cast %524 : vector<1x16x128xf32> to vector<16x128xf32>
    %526 = vector.broadcast %523 : vector<1x128xf32> to vector<16x128xf32>
    %527 = arith.mulf %526, %525 : vector<16x128xf32>
    %528 = arith.addf %520, %527 : vector<16x128xf32>
    %529 = vector.extract_strided_slice %10 {offsets = [3, 15, 0], sizes = [1, 1, 128], strides = [1, 1, 1]} : vector<16x16x128xf32> to vector<1x1x128xf32>
    %530 = vector.shape_cast %529 : vector<1x1x128xf32> to vector<128xf32>
    %531 = vector.shape_cast %530 : vector<128xf32> to vector<1x128xf32>
    %532 = vector.extract_strided_slice %9 {offsets = [15, 0, 0], sizes = [1, 16, 128], strides = [1, 1, 1]} : vector<16x16x128xf32> to vector<1x16x128xf32>
    %533 = vector.shape_cast %532 : vector<1x16x128xf32> to vector<16x128xf32>
    %534 = vector.broadcast %531 : vector<1x128xf32> to vector<16x128xf32>
    %535 = arith.mulf %534, %533 : vector<16x128xf32>
    %536 = arith.addf %528, %535 : vector<16x128xf32>
    %c3 = arith.constant 3 : index
    %c0_24 = arith.constant 0 : index
    %c0_25 = arith.constant 0 : index
    %537 = vector.load %arg5[%c3, %c0_24, %c0_25] : memref<16x16x128xf32, #tpu.memory_space<vmem>>, vector<1x16x128xf32>
    %538 = vector.shape_cast %537 : vector<1x16x128xf32> to vector<16x128xf32>
    %539 = arith.subf %536, %538 : vector<16x128xf32>
    %c3_26 = arith.constant 3 : index
    %c0_27 = arith.constant 0 : index
    %c0_28 = arith.constant 0 : index
    %540 = vector.load %arg6[%c3_26, %c0_27, %c0_28] : memref<16x16x128xf32, #tpu.memory_space<vmem>>, vector<1x16x128xf32>
    %541 = vector.shape_cast %540 : vector<1x16x128xf32> to vector<16x128xf32>
    %542 = vector.shape_cast %539 : vector<16x128xf32> to vector<1x16x128xf32>
    tpu.vector_store %arg6[%c3_26, %c0_27, %c0_28], %542 {strides = array<i32>} : memref<16x16x128xf32, #tpu.memory_space<vmem>>, vector<1x16x128xf32>,
    %543 = vector.extract_strided_slice %10 {offsets = [4, 0, 0], sizes = [1, 1, 128], strides = [1, 1, 1]} : vector<16x16x128xf32> to vector<1x1x128xf32>
    %544 = vector.shape_cast %543 : vector<1x1x128xf32> to vector<128xf32>
    %545 = vector.shape_cast %544 : vector<128xf32> to vector<1x128xf32>
    %546 = vector.extract_strided_slice %9 {offsets = [0, 0, 0], sizes = [1, 16, 128], strides = [1, 1, 1]} : vector<16x16x128xf32> to vector<1x16x128xf32>
    %547 = vector.shape_cast %546 : vector<1x16x128xf32> to vector<16x128xf32>
    %548 = vector.broadcast %545 : vector<1x128xf32> to vector<16x128xf32>
    %549 = arith.mulf %548, %547 : vector<16x128xf32>
    %550 = vector.extract_strided_slice %10 {offsets = [4, 1, 0], sizes = [1, 1, 128], strides = [1, 1, 1]} : vector<16x16x128xf32> to vector<1x1x128xf32>
    %551 = vector.shape_cast %550 : vector<1x1x128xf32> to vector<128xf32>
    %552 = vector.shape_cast %551 : vector<128xf32> to vector<1x128xf32>
    %553 = vector.extract_strided_slice %9 {offsets = [1, 0, 0], sizes = [1, 16, 128], strides = [1, 1, 1]} : vector<16x16x128xf32> to vector<1x16x128xf32>
    %554 = vector.shape_cast %553 : vector<1x16x128xf32> to vector<16x128xf32>
    %555 = vector.broadcast %552 : vector<1x128xf32> to vector<16x128xf32>
    %556 = arith.mulf %555, %554 : vector<16x128xf32>
    %557 = arith.addf %549, %556 : vector<16x128xf32>
    %558 = vector.extract_strided_slice %10 {offsets = [4, 2, 0], sizes = [1, 1, 128], strides = [1, 1, 1]} : vector<16x16x128xf32> to vector<1x1x128xf32>
    %559 = vector.shape_cast %558 : vector<1x1x128xf32> to vector<128xf32>
    %560 = vector.shape_cast %559 : vector<128xf32> to vector<1x128xf32>
    %561 = vector.extract_strided_slice %9 {offsets = [2, 0, 0], sizes = [1, 16, 128], strides = [1, 1, 1]} : vector<16x16x128xf32> to vector<1x16x128xf32>
    %562 = vector.shape_cast %561 : vector<1x16x128xf32> to vector<16x128xf32>
    %563 = vector.broadcast %560 : vector<1x128xf32> to vector<16x128xf32>
    %564 = arith.mulf %563, %562 : vector<16x128xf32>
    %565 = arith.addf %557, %564 : vector<16x128xf32>
    %566 = vector.extract_strided_slice %10 {offsets = [4, 3, 0], sizes = [1, 1, 128], strides = [1, 1, 1]} : vector<16x16x128xf32> to vector<1x1x128xf32>
    %567 = vector.shape_cast %566 : vector<1x1x128xf32> to vector<128xf32>
    %568 = vector.shape_cast %567 : vector<128xf32> to vector<1x128xf32>
    %569 = vector.extract_strided_slice %9 {offsets = [3, 0, 0], sizes = [1, 16, 128], strides = [1, 1, 1]} : vector<16x16x128xf32> to vector<1x16x128xf32>
    %570 = vector.shape_cast %569 : vector<1x16x128xf32> to vector<16x128xf32>
    %571 = vector.broadcast %568 : vector<1x128xf32> to vector<16x128xf32>
    %572 = arith.mulf %571, %570 : vector<16x128xf32>
    %573 = arith.addf %565, %572 : vector<16x128xf32>
    %574 = vector.extract_strided_slice %10 {offsets = [4, 4, 0], sizes = [1, 1, 128], strides = [1, 1, 1]} : vector<16x16x128xf32> to vector<1x1x128xf32>
    %575 = vector.shape_cast %574 : vector<1x1x128xf32> to vector<128xf32>
    %576 = vector.shape_cast %575 : vector<128xf32> to vector<1x128xf32>
    %577 = vector.extract_strided_slice %9 {offsets = [4, 0, 0], sizes = [1, 16, 128], strides = [1, 1, 1]} : vector<16x16x128xf32> to vector<1x16x128xf32>
    %578 = vector.shape_cast %577 : vector<1x16x128xf32> to vector<16x128xf32>
    %579 = vector.broadcast %576 : vector<1x128xf32> to vector<16x128xf32>
    %580 = arith.mulf %579, %578 : vector<16x128xf32>
    %581 = arith.addf %573, %580 : vector<16x128xf32>
    %582 = vector.extract_strided_slice %10 {offsets = [4, 5, 0], sizes = [1, 1, 128], strides = [1, 1, 1]} : vector<16x16x128xf32> to vector<1x1x128xf32>
    %583 = vector.shape_cast %582 : vector<1x1x128xf32> to vector<128xf32>
    %584 = vector.shape_cast %583 : vector<128xf32> to vector<1x128xf32>
    %585 = vector.extract_strided_slice %9 {offsets = [5, 0, 0], sizes = [1, 16, 128], strides = [1, 1, 1]} : vector<16x16x128xf32> to vector<1x16x128xf32>
    %586 = vector.shape_cast %585 : vector<1x16x128xf32> to vector<16x128xf32>
    %587 = vector.broadcast %584 : vector<1x128xf32> to vector<16x128xf32>
    %588 = arith.mulf %587, %586 : vector<16x128xf32>
    %589 = arith.addf %581, %588 : vector<16x128xf32>
    %590 = vector.extract_strided_slice %10 {offsets = [4, 6, 0], sizes = [1, 1, 128], strides = [1, 1, 1]} : vector<16x16x128xf32> to vector<1x1x128xf32>
    %591 = vector.shape_cast %590 : vector<1x1x128xf32> to vector<128xf32>
    %592 = vector.shape_cast %591 : vector<128xf32> to vector<1x128xf32>
    %593 = vector.extract_strided_slice %9 {offsets = [6, 0, 0], sizes = [1, 16, 128], strides = [1, 1, 1]} : vector<16x16x128xf32> to vector<1x16x128xf32>
    %594 = vector.shape_cast %593 : vector<1x16x128xf32> to vector<16x128xf32>
    %595 = vector.broadcast %592 : vector<1x128xf32> to vector<16x128xf32>
    %596 = arith.mulf %595, %594 : vector<16x128xf32>
    %597 = arith.addf %589, %596 : vector<16x128xf32>
    %598 = vector.extract_strided_slice %10 {offsets = [4, 7, 0], sizes = [1, 1, 128], strides = [1, 1, 1]} : vector<16x16x128xf32> to vector<1x1x128xf32>
    %599 = vector.shape_cast %598 : vector<1x1x128xf32> to vector<128xf32>
    %600 = vector.shape_cast %599 : vector<128xf32> to vector<1x128xf32>
    %601 = vector.extract_strided_slice %9 {offsets = [7, 0, 0], sizes = [1, 16, 128], strides = [1, 1, 1]} : vector<16x16x128xf32> to vector<1x16x128xf32>
    %602 = vector.shape_cast %601 : vector<1x16x128xf32> to vector<16x128xf32>
    %603 = vector.broadcast %600 : vector<1x128xf32> to vector<16x128xf32>
    %604 = arith.mulf %603, %602 : vector<16x128xf32>
    %605 = arith.addf %597, %604 : vector<16x128xf32>
    %606 = vector.extract_strided_slice %10 {offsets = [4, 8, 0], sizes = [1, 1, 128], strides = [1, 1, 1]} : vector<16x16x128xf32> to vector<1x1x128xf32>
    %607 = vector.shape_cast %606 : vector<1x1x128xf32> to vector<128xf32>
    %608 = vector.shape_cast %607 : vector<128xf32> to vector<1x128xf32>
    %609 = vector.extract_strided_slice %9 {offsets = [8, 0, 0], sizes = [1, 16, 128], strides = [1, 1, 1]} : vector<16x16x128xf32> to vector<1x16x128xf32>
    %610 = vector.shape_cast %609 : vector<1x16x128xf32> to vector<16x128xf32>
    %611 = vector.broadcast %608 : vector<1x128xf32> to vector<16x128xf32>
    %612 = arith.mulf %611, %610 : vector<16x128xf32>
    %613 = arith.addf %605, %612 : vector<16x128xf32>
    %614 = vector.extract_strided_slice %10 {offsets = [4, 9, 0], sizes = [1, 1, 128], strides = [1, 1, 1]} : vector<16x16x128xf32> to vector<1x1x128xf32>
    %615 = vector.shape_cast %614 : vector<1x1x128xf32> to vector<128xf32>
    %616 = vector.shape_cast %615 : vector<128xf32> to vector<1x128xf32>
    %617 = vector.extract_strided_slice %9 {offsets = [9, 0, 0], sizes = [1, 16, 128], strides = [1, 1, 1]} : vector<16x16x128xf32> to vector<1x16x128xf32>
    %618 = vector.shape_cast %617 : vector<1x16x128xf32> to vector<16x128xf32>
    %619 = vector.broadcast %616 : vector<1x128xf32> to vector<16x128xf32>
    %620 = arith.mulf %619, %618 : vector<16x128xf32>
    %621 = arith.addf %613, %620 : vector<16x128xf32>
    %622 = vector.extract_strided_slice %10 {offsets = [4, 10, 0], sizes = [1, 1, 128], strides = [1, 1, 1]} : vector<16x16x128xf32> to vector<1x1x128xf32>
    %623 = vector.shape_cast %622 : vector<1x1x128xf32> to vector<128xf32>
    %624 = vector.shape_cast %623 : vector<128xf32> to vector<1x128xf32>
    %625 = vector.extract_strided_slice %9 {offsets = [10, 0, 0], sizes = [1, 16, 128], strides = [1, 1, 1]} : vector<16x16x128xf32> to vector<1x16x128xf32>
    %626 = vector.shape_cast %625 : vector<1x16x128xf32> to vector<16x128xf32>
    %627 = vector.broadcast %624 : vector<1x128xf32> to vector<16x128xf32>
    %628 = arith.mulf %627, %626 : vector<16x128xf32>
    %629 = arith.addf %621, %628 : vector<16x128xf32>
    %630 = vector.extract_strided_slice %10 {offsets = [4, 11, 0], sizes = [1, 1, 128], strides = [1, 1, 1]} : vector<16x16x128xf32> to vector<1x1x128xf32>
    %631 = vector.shape_cast %630 : vector<1x1x128xf32> to vector<128xf32>
    %632 = vector.shape_cast %631 : vector<128xf32> to vector<1x128xf32>
    %633 = vector.extract_strided_slice %9 {offsets = [11, 0, 0], sizes = [1, 16, 128], strides = [1, 1, 1]} : vector<16x16x128xf32> to vector<1x16x128xf32>
    %634 = vector.shape_cast %633 : vector<1x16x128xf32> to vector<16x128xf32>
    %635 = vector.broadcast %632 : vector<1x128xf32> to vector<16x128xf32>
    %636 = arith.mulf %635, %634 : vector<16x128xf32>
    %637 = arith.addf %629, %636 : vector<16x128xf32>
    %638 = vector.extract_strided_slice %10 {offsets = [4, 12, 0], sizes = [1, 1, 128], strides = [1, 1, 1]} : vector<16x16x128xf32> to vector<1x1x128xf32>
    %639 = vector.shape_cast %638 : vector<1x1x128xf32> to vector<128xf32>
    %640 = vector.shape_cast %639 : vector<128xf32> to vector<1x128xf32>
    %641 = vector.extract_strided_slice %9 {offsets = [12, 0, 0], sizes = [1, 16, 128], strides = [1, 1, 1]} : vector<16x16x128xf32> to vector<1x16x128xf32>
    %642 = vector.shape_cast %641 : vector<1x16x128xf32> to vector<16x128xf32>
    %643 = vector.broadcast %640 : vector<1x128xf32> to vector<16x128xf32>
    %644 = arith.mulf %643, %642 : vector<16x128xf32>
    %645 = arith.addf %637, %644 : vector<16x128xf32>
    %646 = vector.extract_strided_slice %10 {offsets = [4, 13, 0], sizes = [1, 1, 128], strides = [1, 1, 1]} : vector<16x16x128xf32> to vector<1x1x128xf32>
    %647 = vector.shape_cast %646 : vector<1x1x128xf32> to vector<128xf32>
    %648 = vector.shape_cast %647 : vector<128xf32> to vector<1x128xf32>
    %649 = vector.extract_strided_slice %9 {offsets = [13, 0, 0], sizes = [1, 16, 128], strides = [1, 1, 1]} : vector<16x16x128xf32> to vector<1x16x128xf32>
    %650 = vector.shape_cast %649 : vector<1x16x128xf32> to vector<16x128xf32>
    %651 = vector.broadcast %648 : vector<1x128xf32> to vector<16x128xf32>
    %652 = arith.mulf %651, %650 : vector<16x128xf32>
    %653 = arith.addf %645, %652 : vector<16x128xf32>
    %654 = vector.extract_strided_slice %10 {offsets = [4, 14, 0], sizes = [1, 1, 128], strides = [1, 1, 1]} : vector<16x16x128xf32> to vector<1x1x128xf32>
    %655 = vector.shape_cast %654 : vector<1x1x128xf32> to vector<128xf32>
    %656 = vector.shape_cast %655 : vector<128xf32> to vector<1x128xf32>
    %657 = vector.extract_strided_slice %9 {offsets = [14, 0, 0], sizes = [1, 16, 128], strides = [1, 1, 1]} : vector<16x16x128xf32> to vector<1x16x128xf32>
    %658 = vector.shape_cast %657 : vector<1x16x128xf32> to vector<16x128xf32>
    %659 = vector.broadcast %656 : vector<1x128xf32> to vector<16x128xf32>
    %660 = arith.mulf %659, %658 : vector<16x128xf32>
    %661 = arith.addf %653, %660 : vector<16x128xf32>
    %662 = vector.extract_strided_slice %10 {offsets = [4, 15, 0], sizes = [1, 1, 128], strides = [1, 1, 1]} : vector<16x16x128xf32> to vector<1x1x128xf32>
    %663 = vector.shape_cast %662 : vector<1x1x128xf32> to vector<128xf32>
    %664 = vector.shape_cast %663 : vector<128xf32> to vector<1x128xf32>
    %665 = vector.extract_strided_slice %9 {offsets = [15, 0, 0], sizes = [1, 16, 128], strides = [1, 1, 1]} : vector<16x16x128xf32> to vector<1x16x128xf32>
    %666 = vector.shape_cast %665 : vector<1x16x128xf32> to vector<16x128xf32>
    %667 = vector.broadcast %664 : vector<1x128xf32> to vector<16x128xf32>
    %668 = arith.mulf %667, %666 : vector<16x128xf32>
    %669 = arith.addf %661, %668 : vector<16x128xf32>
    %c4 = arith.constant 4 : index
    %c0_29 = arith.constant 0 : index
    %c0_30 = arith.constant 0 : index
    %670 = vector.load %arg5[%c4, %c0_29, %c0_30] : memref<16x16x128xf32, #tpu.memory_space<vmem>>, vector<1x16x128xf32>
    %671 = vector.shape_cast %670 : vector<1x16x128xf32> to vector<16x128xf32>
    %672 = arith.subf %669, %671 : vector<16x128xf32>
    %c4_31 = arith.constant 4 : index
    %c0_32 = arith.constant 0 : index
    %c0_33 = arith.constant 0 : index
    %673 = vector.load %arg6[%c4_31, %c0_32, %c0_33] : memref<16x16x128xf32, #tpu.memory_space<vmem>>, vector<1x16x128xf32>
    %674 = vector.shape_cast %673 : vector<1x16x128xf32> to vector<16x128xf32>
    %675 = vector.shape_cast %672 : vector<16x128xf32> to vector<1x16x128xf32>
    tpu.vector_store %arg6[%c4_31, %c0_32, %c0_33], %675 {strides = array<i32>} : memref<16x16x128xf32, #tpu.memory_space<vmem>>, vector<1x16x128xf32>,
    %676 = vector.extract_strided_slice %10 {offsets = [5, 0, 0], sizes = [1, 1, 128], strides = [1, 1, 1]} : vector<16x16x128xf32> to vector<1x1x128xf32>
    %677 = vector.shape_cast %676 : vector<1x1x128xf32> to vector<128xf32>
    %678 = vector.shape_cast %677 : vector<128xf32> to vector<1x128xf32>
    %679 = vector.extract_strided_slice %9 {offsets = [0, 0, 0], sizes = [1, 16, 128], strides = [1, 1, 1]} : vector<16x16x128xf32> to vector<1x16x128xf32>
    %680 = vector.shape_cast %679 : vector<1x16x128xf32> to vector<16x128xf32>
    %681 = vector.broadcast %678 : vector<1x128xf32> to vector<16x128xf32>
    %682 = arith.mulf %681, %680 : vector<16x128xf32>
    %683 = vector.extract_strided_slice %10 {offsets = [5, 1, 0], sizes = [1, 1, 128], strides = [1, 1, 1]} : vector<16x16x128xf32> to vector<1x1x128xf32>
    %684 = vector.shape_cast %683 : vector<1x1x128xf32> to vector<128xf32>
    %685 = vector.shape_cast %684 : vector<128xf32> to vector<1x128xf32>
    %686 = vector.extract_strided_slice %9 {offsets = [1, 0, 0], sizes = [1, 16, 128], strides = [1, 1, 1]} : vector<16x16x128xf32> to vector<1x16x128xf32>
    %687 = vector.shape_cast %686 : vector<1x16x128xf32> to vector<16x128xf32>
    %688 = vector.broadcast %685 : vector<1x128xf32> to vector<16x128xf32>
    %689 = arith.mulf %688, %687 : vector<16x128xf32>
    %690 = arith.addf %682, %689 : vector<16x128xf32>
    %691 = vector.extract_strided_slice %10 {offsets = [5, 2, 0], sizes = [1, 1, 128], strides = [1, 1, 1]} : vector<16x16x128xf32> to vector<1x1x128xf32>
    %692 = vector.shape_cast %691 : vector<1x1x128xf32> to vector<128xf32>
    %693 = vector.shape_cast %692 : vector<128xf32> to vector<1x128xf32>
    %694 = vector.extract_strided_slice %9 {offsets = [2, 0, 0], sizes = [1, 16, 128], strides = [1, 1, 1]} : vector<16x16x128xf32> to vector<1x16x128xf32>
    %695 = vector.shape_cast %694 : vector<1x16x128xf32> to vector<16x128xf32>
    %696 = vector.broadcast %693 : vector<1x128xf32> to vector<16x128xf32>
    %697 = arith.mulf %696, %695 : vector<16x128xf32>
    %698 = arith.addf %690, %697 : vector<16x128xf32>
    %699 = vector.extract_strided_slice %10 {offsets = [5, 3, 0], sizes = [1, 1, 128], strides = [1, 1, 1]} : vector<16x16x128xf32> to vector<1x1x128xf32>
    %700 = vector.shape_cast %699 : vector<1x1x128xf32> to vector<128xf32>
    %701 = vector.shape_cast %700 : vector<128xf32> to vector<1x128xf32>
    %702 = vector.extract_strided_slice %9 {offsets = [3, 0, 0], sizes = [1, 16, 128], strides = [1, 1, 1]} : vector<16x16x128xf32> to vector<1x16x128xf32>
    %703 = vector.shape_cast %702 : vector<1x16x128xf32> to vector<16x128xf32>
    %704 = vector.broadcast %701 : vector<1x128xf32> to vector<16x128xf32>
    %705 = arith.mulf %704, %703 : vector<16x128xf32>
    %706 = arith.addf %698, %705 : vector<16x128xf32>
    %707 = vector.extract_strided_slice %10 {offsets = [5, 4, 0], sizes = [1, 1, 128], strides = [1, 1, 1]} : vector<16x16x128xf32> to vector<1x1x128xf32>
    %708 = vector.shape_cast %707 : vector<1x1x128xf32> to vector<128xf32>
    %709 = vector.shape_cast %708 : vector<128xf32> to vector<1x128xf32>
    %710 = vector.extract_strided_slice %9 {offsets = [4, 0, 0], sizes = [1, 16, 128], strides = [1, 1, 1]} : vector<16x16x128xf32> to vector<1x16x128xf32>
    %711 = vector.shape_cast %710 : vector<1x16x128xf32> to vector<16x128xf32>
    %712 = vector.broadcast %709 : vector<1x128xf32> to vector<16x128xf32>
    %713 = arith.mulf %712, %711 : vector<16x128xf32>
    %714 = arith.addf %706, %713 : vector<16x128xf32>
    %715 = vector.extract_strided_slice %10 {offsets = [5, 5, 0], sizes = [1, 1, 128], strides = [1, 1, 1]} : vector<16x16x128xf32> to vector<1x1x128xf32>
    %716 = vector.shape_cast %715 : vector<1x1x128xf32> to vector<128xf32>
    %717 = vector.shape_cast %716 : vector<128xf32> to vector<1x128xf32>
    %718 = vector.extract_strided_slice %9 {offsets = [5, 0, 0], sizes = [1, 16, 128], strides = [1, 1, 1]} : vector<16x16x128xf32> to vector<1x16x128xf32>
    %719 = vector.shape_cast %718 : vector<1x16x128xf32> to vector<16x128xf32>
    %720 = vector.broadcast %717 : vector<1x128xf32> to vector<16x128xf32>
    %721 = arith.mulf %720, %719 : vector<16x128xf32>
    %722 = arith.addf %714, %721 : vector<16x128xf32>
    %723 = vector.extract_strided_slice %10 {offsets = [5, 6, 0], sizes = [1, 1, 128], strides = [1, 1, 1]} : vector<16x16x128xf32> to vector<1x1x128xf32>
    %724 = vector.shape_cast %723 : vector<1x1x128xf32> to vector<128xf32>
    %725 = vector.shape_cast %724 : vector<128xf32> to vector<1x128xf32>
    %726 = vector.extract_strided_slice %9 {offsets = [6, 0, 0], sizes = [1, 16, 128], strides = [1, 1, 1]} : vector<16x16x128xf32> to vector<1x16x128xf32>
    %727 = vector.shape_cast %726 : vector<1x16x128xf32> to vector<16x128xf32>
    %728 = vector.broadcast %725 : vector<1x128xf32> to vector<16x128xf32>
    %729 = arith.mulf %728, %727 : vector<16x128xf32>
    %730 = arith.addf %722, %729 : vector<16x128xf32>
    %731 = vector.extract_strided_slice %10 {offsets = [5, 7, 0], sizes = [1, 1, 128], strides = [1, 1, 1]} : vector<16x16x128xf32> to vector<1x1x128xf32>
    %732 = vector.shape_cast %731 : vector<1x1x128xf32> to vector<128xf32>
    %733 = vector.shape_cast %732 : vector<128xf32> to vector<1x128xf32>
    %734 = vector.extract_strided_slice %9 {offsets = [7, 0, 0], sizes = [1, 16, 128], strides = [1, 1, 1]} : vector<16x16x128xf32> to vector<1x16x128xf32>
    %735 = vector.shape_cast %734 : vector<1x16x128xf32> to vector<16x128xf32>
    %736 = vector.broadcast %733 : vector<1x128xf32> to vector<16x128xf32>
    %737 = arith.mulf %736, %735 : vector<16x128xf32>
    %738 = arith.addf %730, %737 : vector<16x128xf32>
    %739 = vector.extract_strided_slice %10 {offsets = [5, 8, 0], sizes = [1, 1, 128], strides = [1, 1, 1]} : vector<16x16x128xf32> to vector<1x1x128xf32>
    %740 = vector.shape_cast %739 : vector<1x1x128xf32> to vector<128xf32>
    %741 = vector.shape_cast %740 : vector<128xf32> to vector<1x128xf32>
    %742 = vector.extract_strided_slice %9 {offsets = [8, 0, 0], sizes = [1, 16, 128], strides = [1, 1, 1]} : vector<16x16x128xf32> to vector<1x16x128xf32>
    %743 = vector.shape_cast %742 : vector<1x16x128xf32> to vector<16x128xf32>
    %744 = vector.broadcast %741 : vector<1x128xf32> to vector<16x128xf32>
    %745 = arith.mulf %744, %743 : vector<16x128xf32>
    %746 = arith.addf %738, %745 : vector<16x128xf32>
    %747 = vector.extract_strided_slice %10 {offsets = [5, 9, 0], sizes = [1, 1, 128], strides = [1, 1, 1]} : vector<16x16x128xf32> to vector<1x1x128xf32>
    %748 = vector.shape_cast %747 : vector<1x1x128xf32> to vector<128xf32>
    %749 = vector.shape_cast %748 : vector<128xf32> to vector<1x128xf32>
    %750 = vector.extract_strided_slice %9 {offsets = [9, 0, 0], sizes = [1, 16, 128], strides = [1, 1, 1]} : vector<16x16x128xf32> to vector<1x16x128xf32>
    %751 = vector.shape_cast %750 : vector<1x16x128xf32> to vector<16x128xf32>
    %752 = vector.broadcast %749 : vector<1x128xf32> to vector<16x128xf32>
    %753 = arith.mulf %752, %751 : vector<16x128xf32>
    %754 = arith.addf %746, %753 : vector<16x128xf32>
    %755 = vector.extract_strided_slice %10 {offsets = [5, 10, 0], sizes = [1, 1, 128], strides = [1, 1, 1]} : vector<16x16x128xf32> to vector<1x1x128xf32>
    %756 = vector.shape_cast %755 : vector<1x1x128xf32> to vector<128xf32>
    %757 = vector.shape_cast %756 : vector<128xf32> to vector<1x128xf32>
    %758 = vector.extract_strided_slice %9 {offsets = [10, 0, 0], sizes = [1, 16, 128], strides = [1, 1, 1]} : vector<16x16x128xf32> to vector<1x16x128xf32>
    %759 = vector.shape_cast %758 : vector<1x16x128xf32> to vector<16x128xf32>
    %760 = vector.broadcast %757 : vector<1x128xf32> to vector<16x128xf32>
    %761 = arith.mulf %760, %759 : vector<16x128xf32>
    %762 = arith.addf %754, %761 : vector<16x128xf32>
    %763 = vector.extract_strided_slice %10 {offsets = [5, 11, 0], sizes = [1, 1, 128], strides = [1, 1, 1]} : vector<16x16x128xf32> to vector<1x1x128xf32>
    %764 = vector.shape_cast %763 : vector<1x1x128xf32> to vector<128xf32>
    %765 = vector.shape_cast %764 : vector<128xf32> to vector<1x128xf32>
    %766 = vector.extract_strided_slice %9 {offsets = [11, 0, 0], sizes = [1, 16, 128], strides = [1, 1, 1]} : vector<16x16x128xf32> to vector<1x16x128xf32>
    %767 = vector.shape_cast %766 : vector<1x16x128xf32> to vector<16x128xf32>
    %768 = vector.broadcast %765 : vector<1x128xf32> to vector<16x128xf32>
    %769 = arith.mulf %768, %767 : vector<16x128xf32>
    %770 = arith.addf %762, %769 : vector<16x128xf32>
    %771 = vector.extract_strided_slice %10 {offsets = [5, 12, 0], sizes = [1, 1, 128], strides = [1, 1, 1]} : vector<16x16x128xf32> to vector<1x1x128xf32>
    %772 = vector.shape_cast %771 : vector<1x1x128xf32> to vector<128xf32>
    %773 = vector.shape_cast %772 : vector<128xf32> to vector<1x128xf32>
    %774 = vector.extract_strided_slice %9 {offsets = [12, 0, 0], sizes = [1, 16, 128], strides = [1, 1, 1]} : vector<16x16x128xf32> to vector<1x16x128xf32>
    %775 = vector.shape_cast %774 : vector<1x16x128xf32> to vector<16x128xf32>
    %776 = vector.broadcast %773 : vector<1x128xf32> to vector<16x128xf32>
    %777 = arith.mulf %776, %775 : vector<16x128xf32>
    %778 = arith.addf %770, %777 : vector<16x128xf32>
    %779 = vector.extract_strided_slice %10 {offsets = [5, 13, 0], sizes = [1, 1, 128], strides = [1, 1, 1]} : vector<16x16x128xf32> to vector<1x1x128xf32>
    %780 = vector.shape_cast %779 : vector<1x1x128xf32> to vector<128xf32>
    %781 = vector.shape_cast %780 : vector<128xf32> to vector<1x128xf32>
    %782 = vector.extract_strided_slice %9 {offsets = [13, 0, 0], sizes = [1, 16, 128], strides = [1, 1, 1]} : vector<16x16x128xf32> to vector<1x16x128xf32>
    %783 = vector.shape_cast %782 : vector<1x16x128xf32> to vector<16x128xf32>
    %784 = vector.broadcast %781 : vector<1x128xf32> to vector<16x128xf32>
    %785 = arith.mulf %784, %783 : vector<16x128xf32>
    %786 = arith.addf %778, %785 : vector<16x128xf32>
    %787 = vector.extract_strided_slice %10 {offsets = [5, 14, 0], sizes = [1, 1, 128], strides = [1, 1, 1]} : vector<16x16x128xf32> to vector<1x1x128xf32>
    %788 = vector.shape_cast %787 : vector<1x1x128xf32> to vector<128xf32>
    %789 = vector.shape_cast %788 : vector<128xf32> to vector<1x128xf32>
    %790 = vector.extract_strided_slice %9 {offsets = [14, 0, 0], sizes = [1, 16, 128], strides = [1, 1, 1]} : vector<16x16x128xf32> to vector<1x16x128xf32>
    %791 = vector.shape_cast %790 : vector<1x16x128xf32> to vector<16x128xf32>
    %792 = vector.broadcast %789 : vector<1x128xf32> to vector<16x128xf32>
    %793 = arith.mulf %792, %791 : vector<16x128xf32>
    %794 = arith.addf %786, %793 : vector<16x128xf32>
    %795 = vector.extract_strided_slice %10 {offsets = [5, 15, 0], sizes = [1, 1, 128], strides = [1, 1, 1]} : vector<16x16x128xf32> to vector<1x1x128xf32>
    %796 = vector.shape_cast %795 : vector<1x1x128xf32> to vector<128xf32>
    %797 = vector.shape_cast %796 : vector<128xf32> to vector<1x128xf32>
    %798 = vector.extract_strided_slice %9 {offsets = [15, 0, 0], sizes = [1, 16, 128], strides = [1, 1, 1]} : vector<16x16x128xf32> to vector<1x16x128xf32>
    %799 = vector.shape_cast %798 : vector<1x16x128xf32> to vector<16x128xf32>
    %800 = vector.broadcast %797 : vector<1x128xf32> to vector<16x128xf32>
    %801 = arith.mulf %800, %799 : vector<16x128xf32>
    %802 = arith.addf %794, %801 : vector<16x128xf32>
    %c5 = arith.constant 5 : index
    %c0_34 = arith.constant 0 : index
    %c0_35 = arith.constant 0 : index
    %803 = vector.load %arg5[%c5, %c0_34, %c0_35] : memref<16x16x128xf32, #tpu.memory_space<vmem>>, vector<1x16x128xf32>
    %804 = vector.shape_cast %803 : vector<1x16x128xf32> to vector<16x128xf32>
    %805 = arith.subf %802, %804 : vector<16x128xf32>
    %c5_36 = arith.constant 5 : index
    %c0_37 = arith.constant 0 : index
    %c0_38 = arith.constant 0 : index
    %806 = vector.load %arg6[%c5_36, %c0_37, %c0_38] : memref<16x16x128xf32, #tpu.memory_space<vmem>>, vector<1x16x128xf32>
    %807 = vector.shape_cast %806 : vector<1x16x128xf32> to vector<16x128xf32>
    %808 = vector.shape_cast %805 : vector<16x128xf32> to vector<1x16x128xf32>
    tpu.vector_store %arg6[%c5_36, %c0_37, %c0_38], %808 {strides = array<i32>} : memref<16x16x128xf32, #tpu.memory_space<vmem>>, vector<1x16x128xf32>,
    %809 = vector.extract_strided_slice %10 {offsets = [6, 0, 0], sizes = [1, 1, 128], strides = [1, 1, 1]} : vector<16x16x128xf32> to vector<1x1x128xf32>
    %810 = vector.shape_cast %809 : vector<1x1x128xf32> to vector<128xf32>
    %811 = vector.shape_cast %810 : vector<128xf32> to vector<1x128xf32>
    %812 = vector.extract_strided_slice %9 {offsets = [0, 0, 0], sizes = [1, 16, 128], strides = [1, 1, 1]} : vector<16x16x128xf32> to vector<1x16x128xf32>
    %813 = vector.shape_cast %812 : vector<1x16x128xf32> to vector<16x128xf32>
    %814 = vector.broadcast %811 : vector<1x128xf32> to vector<16x128xf32>
    %815 = arith.mulf %814, %813 : vector<16x128xf32>
    %816 = vector.extract_strided_slice %10 {offsets = [6, 1, 0], sizes = [1, 1, 128], strides = [1, 1, 1]} : vector<16x16x128xf32> to vector<1x1x128xf32>
    %817 = vector.shape_cast %816 : vector<1x1x128xf32> to vector<128xf32>
    %818 = vector.shape_cast %817 : vector<128xf32> to vector<1x128xf32>
    %819 = vector.extract_strided_slice %9 {offsets = [1, 0, 0], sizes = [1, 16, 128], strides = [1, 1, 1]} : vector<16x16x128xf32> to vector<1x16x128xf32>
    %820 = vector.shape_cast %819 : vector<1x16x128xf32> to vector<16x128xf32>
    %821 = vector.broadcast %818 : vector<1x128xf32> to vector<16x128xf32>
    %822 = arith.mulf %821, %820 : vector<16x128xf32>
    %823 = arith.addf %815, %822 : vector<16x128xf32>
    %824 = vector.extract_strided_slice %10 {offsets = [6, 2, 0], sizes = [1, 1, 128], strides = [1, 1, 1]} : vector<16x16x128xf32> to vector<1x1x128xf32>
    %825 = vector.shape_cast %824 : vector<1x1x128xf32> to vector<128xf32>
    %826 = vector.shape_cast %825 : vector<128xf32> to vector<1x128xf32>
    %827 = vector.extract_strided_slice %9 {offsets = [2, 0, 0], sizes = [1, 16, 128], strides = [1, 1, 1]} : vector<16x16x128xf32> to vector<1x16x128xf32>
    %828 = vector.shape_cast %827 : vector<1x16x128xf32> to vector<16x128xf32>
    %829 = vector.broadcast %826 : vector<1x128xf32> to vector<16x128xf32>
    %830 = arith.mulf %829, %828 : vector<16x128xf32>
    %831 = arith.addf %823, %830 : vector<16x128xf32>
    %832 = vector.extract_strided_slice %10 {offsets = [6, 3, 0], sizes = [1, 1, 128], strides = [1, 1, 1]} : vector<16x16x128xf32> to vector<1x1x128xf32>
    %833 = vector.shape_cast %832 : vector<1x1x128xf32> to vector<128xf32>
    %834 = vector.shape_cast %833 : vector<128xf32> to vector<1x128xf32>
    %835 = vector.extract_strided_slice %9 {offsets = [3, 0, 0], sizes = [1, 16, 128], strides = [1, 1, 1]} : vector<16x16x128xf32> to vector<1x16x128xf32>
    %836 = vector.shape_cast %835 : vector<1x16x128xf32> to vector<16x128xf32>
    %837 = vector.broadcast %834 : vector<1x128xf32> to vector<16x128xf32>
    %838 = arith.mulf %837, %836 : vector<16x128xf32>
    %839 = arith.addf %831, %838 : vector<16x128xf32>
    %840 = vector.extract_strided_slice %10 {offsets = [6, 4, 0], sizes = [1, 1, 128], strides = [1, 1, 1]} : vector<16x16x128xf32> to vector<1x1x128xf32>
    %841 = vector.shape_cast %840 : vector<1x1x128xf32> to vector<128xf32>
    %842 = vector.shape_cast %841 : vector<128xf32> to vector<1x128xf32>
    %843 = vector.extract_strided_slice %9 {offsets = [4, 0, 0], sizes = [1, 16, 128], strides = [1, 1, 1]} : vector<16x16x128xf32> to vector<1x16x128xf32>
    %844 = vector.shape_cast %843 : vector<1x16x128xf32> to vector<16x128xf32>
    %845 = vector.broadcast %842 : vector<1x128xf32> to vector<16x128xf32>
    %846 = arith.mulf %845, %844 : vector<16x128xf32>
    %847 = arith.addf %839, %846 : vector<16x128xf32>
    %848 = vector.extract_strided_slice %10 {offsets = [6, 5, 0], sizes = [1, 1, 128], strides = [1, 1, 1]} : vector<16x16x128xf32> to vector<1x1x128xf32>
    %849 = vector.shape_cast %848 : vector<1x1x128xf32> to vector<128xf32>
    %850 = vector.shape_cast %849 : vector<128xf32> to vector<1x128xf32>
    %851 = vector.extract_strided_slice %9 {offsets = [5, 0, 0], sizes = [1, 16, 128], strides = [1, 1, 1]} : vector<16x16x128xf32> to vector<1x16x128xf32>
    %852 = vector.shape_cast %851 : vector<1x16x128xf32> to vector<16x128xf32>
    %853 = vector.broadcast %850 : vector<1x128xf32> to vector<16x128xf32>
    %854 = arith.mulf %853, %852 : vector<16x128xf32>
    %855 = arith.addf %847, %854 : vector<16x128xf32>
    %856 = vector.extract_strided_slice %10 {offsets = [6, 6, 0], sizes = [1, 1, 128], strides = [1, 1, 1]} : vector<16x16x128xf32> to vector<1x1x128xf32>
    %857 = vector.shape_cast %856 : vector<1x1x128xf32> to vector<128xf32>
    %858 = vector.shape_cast %857 : vector<128xf32> to vector<1x128xf32>
    %859 = vector.extract_strided_slice %9 {offsets = [6, 0, 0], sizes = [1, 16, 128], strides = [1, 1, 1]} : vector<16x16x128xf32> to vector<1x16x128xf32>
    %860 = vector.shape_cast %859 : vector<1x16x128xf32> to vector<16x128xf32>
    %861 = vector.broadcast %858 : vector<1x128xf32> to vector<16x128xf32>
    %862 = arith.mulf %861, %860 : vector<16x128xf32>
    %863 = arith.addf %855, %862 : vector<16x128xf32>
    %864 = vector.extract_strided_slice %10 {offsets = [6, 7, 0], sizes = [1, 1, 128], strides = [1, 1, 1]} : vector<16x16x128xf32> to vector<1x1x128xf32>
    %865 = vector.shape_cast %864 : vector<1x1x128xf32> to vector<128xf32>
    %866 = vector.shape_cast %865 : vector<128xf32> to vector<1x128xf32>
    %867 = vector.extract_strided_slice %9 {offsets = [7, 0, 0], sizes = [1, 16, 128], strides = [1, 1, 1]} : vector<16x16x128xf32> to vector<1x16x128xf32>
    %868 = vector.shape_cast %867 : vector<1x16x128xf32> to vector<16x128xf32>
    %869 = vector.broadcast %866 : vector<1x128xf32> to vector<16x128xf32>
    %870 = arith.mulf %869, %868 : vector<16x128xf32>
    %871 = arith.addf %863, %870 : vector<16x128xf32>
    %872 = vector.extract_strided_slice %10 {offsets = [6, 8, 0], sizes = [1, 1, 128], strides = [1, 1, 1]} : vector<16x16x128xf32> to vector<1x1x128xf32>
    %873 = vector.shape_cast %872 : vector<1x1x128xf32> to vector<128xf32>
    %874 = vector.shape_cast %873 : vector<128xf32> to vector<1x128xf32>
    %875 = vector.extract_strided_slice %9 {offsets = [8, 0, 0], sizes = [1, 16, 128], strides = [1, 1, 1]} : vector<16x16x128xf32> to vector<1x16x128xf32>
    %876 = vector.shape_cast %875 : vector<1x16x128xf32> to vector<16x128xf32>
    %877 = vector.broadcast %874 : vector<1x128xf32> to vector<16x128xf32>
    %878 = arith.mulf %877, %876 : vector<16x128xf32>
    %879 = arith.addf %871, %878 : vector<16x128xf32>
    %880 = vector.extract_strided_slice %10 {offsets = [6, 9, 0], sizes = [1, 1, 128], strides = [1, 1, 1]} : vector<16x16x128xf32> to vector<1x1x128xf32>
    %881 = vector.shape_cast %880 : vector<1x1x128xf32> to vector<128xf32>
    %882 = vector.shape_cast %881 : vector<128xf32> to vector<1x128xf32>
    %883 = vector.extract_strided_slice %9 {offsets = [9, 0, 0], sizes = [1, 16, 128], strides = [1, 1, 1]} : vector<16x16x128xf32> to vector<1x16x128xf32>
    %884 = vector.shape_cast %883 : vector<1x16x128xf32> to vector<16x128xf32>
    %885 = vector.broadcast %882 : vector<1x128xf32> to vector<16x128xf32>
    %886 = arith.mulf %885, %884 : vector<16x128xf32>
    %887 = arith.addf %879, %886 : vector<16x128xf32>
    %888 = vector.extract_strided_slice %10 {offsets = [6, 10, 0], sizes = [1, 1, 128], strides = [1, 1, 1]} : vector<16x16x128xf32> to vector<1x1x128xf32>
    %889 = vector.shape_cast %888 : vector<1x1x128xf32> to vector<128xf32>
    %890 = vector.shape_cast %889 : vector<128xf32> to vector<1x128xf32>
    %891 = vector.extract_strided_slice %9 {offsets = [10, 0, 0], sizes = [1, 16, 128], strides = [1, 1, 1]} : vector<16x16x128xf32> to vector<1x16x128xf32>
    %892 = vector.shape_cast %891 : vector<1x16x128xf32> to vector<16x128xf32>
    %893 = vector.broadcast %890 : vector<1x128xf32> to vector<16x128xf32>
    %894 = arith.mulf %893, %892 : vector<16x128xf32>
    %895 = arith.addf %887, %894 : vector<16x128xf32>
    %896 = vector.extract_strided_slice %10 {offsets = [6, 11, 0], sizes = [1, 1, 128], strides = [1, 1, 1]} : vector<16x16x128xf32> to vector<1x1x128xf32>
    %897 = vector.shape_cast %896 : vector<1x1x128xf32> to vector<128xf32>
    %898 = vector.shape_cast %897 : vector<128xf32> to vector<1x128xf32>
    %899 = vector.extract_strided_slice %9 {offsets = [11, 0, 0], sizes = [1, 16, 128], strides = [1, 1, 1]} : vector<16x16x128xf32> to vector<1x16x128xf32>
    %900 = vector.shape_cast %899 : vector<1x16x128xf32> to vector<16x128xf32>
    %901 = vector.broadcast %898 : vector<1x128xf32> to vector<16x128xf32>
    %902 = arith.mulf %901, %900 : vector<16x128xf32>
    %903 = arith.addf %895, %902 : vector<16x128xf32>
    %904 = vector.extract_strided_slice %10 {offsets = [6, 12, 0], sizes = [1, 1, 128], strides = [1, 1, 1]} : vector<16x16x128xf32> to vector<1x1x128xf32>
    %905 = vector.shape_cast %904 : vector<1x1x128xf32> to vector<128xf32>
    %906 = vector.shape_cast %905 : vector<128xf32> to vector<1x128xf32>
    %907 = vector.extract_strided_slice %9 {offsets = [12, 0, 0], sizes = [1, 16, 128], strides = [1, 1, 1]} : vector<16x16x128xf32> to vector<1x16x128xf32>
    %908 = vector.shape_cast %907 : vector<1x16x128xf32> to vector<16x128xf32>
    %909 = vector.broadcast %906 : vector<1x128xf32> to vector<16x128xf32>
    %910 = arith.mulf %909, %908 : vector<16x128xf32>
    %911 = arith.addf %903, %910 : vector<16x128xf32>
    %912 = vector.extract_strided_slice %10 {offsets = [6, 13, 0], sizes = [1, 1, 128], strides = [1, 1, 1]} : vector<16x16x128xf32> to vector<1x1x128xf32>
    %913 = vector.shape_cast %912 : vector<1x1x128xf32> to vector<128xf32>
    %914 = vector.shape_cast %913 : vector<128xf32> to vector<1x128xf32>
    %915 = vector.extract_strided_slice %9 {offsets = [13, 0, 0], sizes = [1, 16, 128], strides = [1, 1, 1]} : vector<16x16x128xf32> to vector<1x16x128xf32>
    %916 = vector.shape_cast %915 : vector<1x16x128xf32> to vector<16x128xf32>
    %917 = vector.broadcast %914 : vector<1x128xf32> to vector<16x128xf32>
    %918 = arith.mulf %917, %916 : vector<16x128xf32>
    %919 = arith.addf %911, %918 : vector<16x128xf32>
    %920 = vector.extract_strided_slice %10 {offsets = [6, 14, 0], sizes = [1, 1, 128], strides = [1, 1, 1]} : vector<16x16x128xf32> to vector<1x1x128xf32>
    %921 = vector.shape_cast %920 : vector<1x1x128xf32> to vector<128xf32>
    %922 = vector.shape_cast %921 : vector<128xf32> to vector<1x128xf32>
    %923 = vector.extract_strided_slice %9 {offsets = [14, 0, 0], sizes = [1, 16, 128], strides = [1, 1, 1]} : vector<16x16x128xf32> to vector<1x16x128xf32>
    %924 = vector.shape_cast %923 : vector<1x16x128xf32> to vector<16x128xf32>
    %925 = vector.broadcast %922 : vector<1x128xf32> to vector<16x128xf32>
    %926 = arith.mulf %925, %924 : vector<16x128xf32>
    %927 = arith.addf %919, %926 : vector<16x128xf32>
    %928 = vector.extract_strided_slice %10 {offsets = [6, 15, 0], sizes = [1, 1, 128], strides = [1, 1, 1]} : vector<16x16x128xf32> to vector<1x1x128xf32>
    %929 = vector.shape_cast %928 : vector<1x1x128xf32> to vector<128xf32>
    %930 = vector.shape_cast %929 : vector<128xf32> to vector<1x128xf32>
    %931 = vector.extract_strided_slice %9 {offsets = [15, 0, 0], sizes = [1, 16, 128], strides = [1, 1, 1]} : vector<16x16x128xf32> to vector<1x16x128xf32>
    %932 = vector.shape_cast %931 : vector<1x16x128xf32> to vector<16x128xf32>
    %933 = vector.broadcast %930 : vector<1x128xf32> to vector<16x128xf32>
    %934 = arith.mulf %933, %932 : vector<16x128xf32>
    %935 = arith.addf %927, %934 : vector<16x128xf32>
    %c6 = arith.constant 6 : index
    %c0_39 = arith.constant 0 : index
    %c0_40 = arith.constant 0 : index
    %936 = vector.load %arg5[%c6, %c0_39, %c0_40] : memref<16x16x128xf32, #tpu.memory_space<vmem>>, vector<1x16x128xf32>
    %937 = vector.shape_cast %936 : vector<1x16x128xf32> to vector<16x128xf32>
    %938 = arith.subf %935, %937 : vector<16x128xf32>
    %c6_41 = arith.constant 6 : index
    %c0_42 = arith.constant 0 : index
    %c0_43 = arith.constant 0 : index
    %939 = vector.load %arg6[%c6_41, %c0_42, %c0_43] : memref<16x16x128xf32, #tpu.memory_space<vmem>>, vector<1x16x128xf32>
    %940 = vector.shape_cast %939 : vector<1x16x128xf32> to vector<16x128xf32>
    %941 = vector.shape_cast %938 : vector<16x128xf32> to vector<1x16x128xf32>
    tpu.vector_store %arg6[%c6_41, %c0_42, %c0_43], %941 {strides = array<i32>} : memref<16x16x128xf32, #tpu.memory_space<vmem>>, vector<1x16x128xf32>,
    %942 = vector.extract_strided_slice %10 {offsets = [7, 0, 0], sizes = [1, 1, 128], strides = [1, 1, 1]} : vector<16x16x128xf32> to vector<1x1x128xf32>
    %943 = vector.shape_cast %942 : vector<1x1x128xf32> to vector<128xf32>
    %944 = vector.shape_cast %943 : vector<128xf32> to vector<1x128xf32>
    %945 = vector.extract_strided_slice %9 {offsets = [0, 0, 0], sizes = [1, 16, 128], strides = [1, 1, 1]} : vector<16x16x128xf32> to vector<1x16x128xf32>
    %946 = vector.shape_cast %945 : vector<1x16x128xf32> to vector<16x128xf32>
    %947 = vector.broadcast %944 : vector<1x128xf32> to vector<16x128xf32>
    %948 = arith.mulf %947, %946 : vector<16x128xf32>
    %949 = vector.extract_strided_slice %10 {offsets = [7, 1, 0], sizes = [1, 1, 128], strides = [1, 1, 1]} : vector<16x16x128xf32> to vector<1x1x128xf32>
    %950 = vector.shape_cast %949 : vector<1x1x128xf32> to vector<128xf32>
    %951 = vector.shape_cast %950 : vector<128xf32> to vector<1x128xf32>
    %952 = vector.extract_strided_slice %9 {offsets = [1, 0, 0], sizes = [1, 16, 128], strides = [1, 1, 1]} : vector<16x16x128xf32> to vector<1x16x128xf32>
    %953 = vector.shape_cast %952 : vector<1x16x128xf32> to vector<16x128xf32>
    %954 = vector.broadcast %951 : vector<1x128xf32> to vector<16x128xf32>
    %955 = arith.mulf %954, %953 : vector<16x128xf32>
    %956 = arith.addf %948, %955 : vector<16x128xf32>
    %957 = vector.extract_strided_slice %10 {offsets = [7, 2, 0], sizes = [1, 1, 128], strides = [1, 1, 1]} : vector<16x16x128xf32> to vector<1x1x128xf32>
    %958 = vector.shape_cast %957 : vector<1x1x128xf32> to vector<128xf32>
    %959 = vector.shape_cast %958 : vector<128xf32> to vector<1x128xf32>
    %960 = vector.extract_strided_slice %9 {offsets = [2, 0, 0], sizes = [1, 16, 128], strides = [1, 1, 1]} : vector<16x16x128xf32> to vector<1x16x128xf32>
    %961 = vector.shape_cast %960 : vector<1x16x128xf32> to vector<16x128xf32>
    %962 = vector.broadcast %959 : vector<1x128xf32> to vector<16x128xf32>
    %963 = arith.mulf %962, %961 : vector<16x128xf32>
    %964 = arith.addf %956, %963 : vector<16x128xf32>
    %965 = vector.extract_strided_slice %10 {offsets = [7, 3, 0], sizes = [1, 1, 128], strides = [1, 1, 1]} : vector<16x16x128xf32> to vector<1x1x128xf32>
    %966 = vector.shape_cast %965 : vector<1x1x128xf32> to vector<128xf32>
    %967 = vector.shape_cast %966 : vector<128xf32> to vector<1x128xf32>
    %968 = vector.extract_strided_slice %9 {offsets = [3, 0, 0], sizes = [1, 16, 128], strides = [1, 1, 1]} : vector<16x16x128xf32> to vector<1x16x128xf32>
    %969 = vector.shape_cast %968 : vector<1x16x128xf32> to vector<16x128xf32>
    %970 = vector.broadcast %967 : vector<1x128xf32> to vector<16x128xf32>
    %971 = arith.mulf %970, %969 : vector<16x128xf32>
    %972 = arith.addf %964, %971 : vector<16x128xf32>
    %973 = vector.extract_strided_slice %10 {offsets = [7, 4, 0], sizes = [1, 1, 128], strides = [1, 1, 1]} : vector<16x16x128xf32> to vector<1x1x128xf32>
    %974 = vector.shape_cast %973 : vector<1x1x128xf32> to vector<128xf32>
    %975 = vector.shape_cast %974 : vector<128xf32> to vector<1x128xf32>
    %976 = vector.extract_strided_slice %9 {offsets = [4, 0, 0], sizes = [1, 16, 128], strides = [1, 1, 1]} : vector<16x16x128xf32> to vector<1x16x128xf32>
    %977 = vector.shape_cast %976 : vector<1x16x128xf32> to vector<16x128xf32>
    %978 = vector.broadcast %975 : vector<1x128xf32> to vector<16x128xf32>
    %979 = arith.mulf %978, %977 : vector<16x128xf32>
    %980 = arith.addf %972, %979 : vector<16x128xf32>
    %981 = vector.extract_strided_slice %10 {offsets = [7, 5, 0], sizes = [1, 1, 128], strides = [1, 1, 1]} : vector<16x16x128xf32> to vector<1x1x128xf32>
    %982 = vector.shape_cast %981 : vector<1x1x128xf32> to vector<128xf32>
    %983 = vector.shape_cast %982 : vector<128xf32> to vector<1x128xf32>
    %984 = vector.extract_strided_slice %9 {offsets = [5, 0, 0], sizes = [1, 16, 128], strides = [1, 1, 1]} : vector<16x16x128xf32> to vector<1x16x128xf32>
    %985 = vector.shape_cast %984 : vector<1x16x128xf32> to vector<16x128xf32>
    %986 = vector.broadcast %983 : vector<1x128xf32> to vector<16x128xf32>
    %987 = arith.mulf %986, %985 : vector<16x128xf32>
    %988 = arith.addf %980, %987 : vector<16x128xf32>
    %989 = vector.extract_strided_slice %10 {offsets = [7, 6, 0], sizes = [1, 1, 128], strides = [1, 1, 1]} : vector<16x16x128xf32> to vector<1x1x128xf32>
    %990 = vector.shape_cast %989 : vector<1x1x128xf32> to vector<128xf32>
    %991 = vector.shape_cast %990 : vector<128xf32> to vector<1x128xf32>
    %992 = vector.extract_strided_slice %9 {offsets = [6, 0, 0], sizes = [1, 16, 128], strides = [1, 1, 1]} : vector<16x16x128xf32> to vector<1x16x128xf32>
    %993 = vector.shape_cast %992 : vector<1x16x128xf32> to vector<16x128xf32>
    %994 = vector.broadcast %991 : vector<1x128xf32> to vector<16x128xf32>
    %995 = arith.mulf %994, %993 : vector<16x128xf32>
    %996 = arith.addf %988, %995 : vector<16x128xf32>
    %997 = vector.extract_strided_slice %10 {offsets = [7, 7, 0], sizes = [1, 1, 128], strides = [1, 1, 1]} : vector<16x16x128xf32> to vector<1x1x128xf32>
    %998 = vector.shape_cast %997 : vector<1x1x128xf32> to vector<128xf32>
    %999 = vector.shape_cast %998 : vector<128xf32> to vector<1x128xf32>
    %1000 = vector.extract_strided_slice %9 {offsets = [7, 0, 0], sizes = [1, 16, 128], strides = [1, 1, 1]} : vector<16x16x128xf32> to vector<1x16x128xf32>
    %1001 = vector.shape_cast %1000 : vector<1x16x128xf32> to vector<16x128xf32>
    %1002 = vector.broadcast %999 : vector<1x128xf32> to vector<16x128xf32>
    %1003 = arith.mulf %1002, %1001 : vector<16x128xf32>
    %1004 = arith.addf %996, %1003 : vector<16x128xf32>
    %1005 = vector.extract_strided_slice %10 {offsets = [7, 8, 0], sizes = [1, 1, 128], strides = [1, 1, 1]} : vector<16x16x128xf32> to vector<1x1x128xf32>
    %1006 = vector.shape_cast %1005 : vector<1x1x128xf32> to vector<128xf32>
    %1007 = vector.shape_cast %1006 : vector<128xf32> to vector<1x128xf32>
    %1008 = vector.extract_strided_slice %9 {offsets = [8, 0, 0], sizes = [1, 16, 128], strides = [1, 1, 1]} : vector<16x16x128xf32> to vector<1x16x128xf32>
    %1009 = vector.shape_cast %1008 : vector<1x16x128xf32> to vector<16x128xf32>
    %1010 = vector.broadcast %1007 : vector<1x128xf32> to vector<16x128xf32>
    %1011 = arith.mulf %1010, %1009 : vector<16x128xf32>
    %1012 = arith.addf %1004, %1011 : vector<16x128xf32>
    %1013 = vector.extract_strided_slice %10 {offsets = [7, 9, 0], sizes = [1, 1, 128], strides = [1, 1, 1]} : vector<16x16x128xf32> to vector<1x1x128xf32>
    %1014 = vector.shape_cast %1013 : vector<1x1x128xf32> to vector<128xf32>
    %1015 = vector.shape_cast %1014 : vector<128xf32> to vector<1x128xf32>
    %1016 = vector.extract_strided_slice %9 {offsets = [9, 0, 0], sizes = [1, 16, 128], strides = [1, 1, 1]} : vector<16x16x128xf32> to vector<1x16x128xf32>
    %1017 = vector.shape_cast %1016 : vector<1x16x128xf32> to vector<16x128xf32>
    %1018 = vector.broadcast %1015 : vector<1x128xf32> to vector<16x128xf32>
    %1019 = arith.mulf %1018, %1017 : vector<16x128xf32>
    %1020 = arith.addf %1012, %1019 : vector<16x128xf32>
    %1021 = vector.extract_strided_slice %10 {offsets = [7, 10, 0], sizes = [1, 1, 128], strides = [1, 1, 1]} : vector<16x16x128xf32> to vector<1x1x128xf32>
    %1022 = vector.shape_cast %1021 : vector<1x1x128xf32> to vector<128xf32>
    %1023 = vector.shape_cast %1022 : vector<128xf32> to vector<1x128xf32>
    %1024 = vector.extract_strided_slice %9 {offsets = [10, 0, 0], sizes = [1, 16, 128], strides = [1, 1, 1]} : vector<16x16x128xf32> to vector<1x16x128xf32>
    %1025 = vector.shape_cast %1024 : vector<1x16x128xf32> to vector<16x128xf32>
    %1026 = vector.broadcast %1023 : vector<1x128xf32> to vector<16x128xf32>
    %1027 = arith.mulf %1026, %1025 : vector<16x128xf32>
    %1028 = arith.addf %1020, %1027 : vector<16x128xf32>
    %1029 = vector.extract_strided_slice %10 {offsets = [7, 11, 0], sizes = [1, 1, 128], strides = [1, 1, 1]} : vector<16x16x128xf32> to vector<1x1x128xf32>
    %1030 = vector.shape_cast %1029 : vector<1x1x128xf32> to vector<128xf32>
    %1031 = vector.shape_cast %1030 : vector<128xf32> to vector<1x128xf32>
    %1032 = vector.extract_strided_slice %9 {offsets = [11, 0, 0], sizes = [1, 16, 128], strides = [1, 1, 1]} : vector<16x16x128xf32> to vector<1x16x128xf32>
    %1033 = vector.shape_cast %1032 : vector<1x16x128xf32> to vector<16x128xf32>
    %1034 = vector.broadcast %1031 : vector<1x128xf32> to vector<16x128xf32>
    %1035 = arith.mulf %1034, %1033 : vector<16x128xf32>
    %1036 = arith.addf %1028, %1035 : vector<16x128xf32>
    %1037 = vector.extract_strided_slice %10 {offsets = [7, 12, 0], sizes = [1, 1, 128], strides = [1, 1, 1]} : vector<16x16x128xf32> to vector<1x1x128xf32>
    %1038 = vector.shape_cast %1037 : vector<1x1x128xf32> to vector<128xf32>
    %1039 = vector.shape_cast %1038 : vector<128xf32> to vector<1x128xf32>
    %1040 = vector.extract_strided_slice %9 {offsets = [12, 0, 0], sizes = [1, 16, 128], strides = [1, 1, 1]} : vector<16x16x128xf32> to vector<1x16x128xf32>
    %1041 = vector.shape_cast %1040 : vector<1x16x128xf32> to vector<16x128xf32>
    %1042 = vector.broadcast %1039 : vector<1x128xf32> to vector<16x128xf32>
    %1043 = arith.mulf %1042, %1041 : vector<16x128xf32>
    %1044 = arith.addf %1036, %1043 : vector<16x128xf32>
    %1045 = vector.extract_strided_slice %10 {offsets = [7, 13, 0], sizes = [1, 1, 128], strides = [1, 1, 1]} : vector<16x16x128xf32> to vector<1x1x128xf32>
    %1046 = vector.shape_cast %1045 : vector<1x1x128xf32> to vector<128xf32>
    %1047 = vector.shape_cast %1046 : vector<128xf32> to vector<1x128xf32>
    %1048 = vector.extract_strided_slice %9 {offsets = [13, 0, 0], sizes = [1, 16, 128], strides = [1, 1, 1]} : vector<16x16x128xf32> to vector<1x16x128xf32>
    %1049 = vector.shape_cast %1048 : vector<1x16x128xf32> to vector<16x128xf32>
    %1050 = vector.broadcast %1047 : vector<1x128xf32> to vector<16x128xf32>
    %1051 = arith.mulf %1050, %1049 : vector<16x128xf32>
    %1052 = arith.addf %1044, %1051 : vector<16x128xf32>
    %1053 = vector.extract_strided_slice %10 {offsets = [7, 14, 0], sizes = [1, 1, 128], strides = [1, 1, 1]} : vector<16x16x128xf32> to vector<1x1x128xf32>
    %1054 = vector.shape_cast %1053 : vector<1x1x128xf32> to vector<128xf32>
    %1055 = vector.shape_cast %1054 : vector<128xf32> to vector<1x128xf32>
    %1056 = vector.extract_strided_slice %9 {offsets = [14, 0, 0], sizes = [1, 16, 128], strides = [1, 1, 1]} : vector<16x16x128xf32> to vector<1x16x128xf32>
    %1057 = vector.shape_cast %1056 : vector<1x16x128xf32> to vector<16x128xf32>
    %1058 = vector.broadcast %1055 : vector<1x128xf32> to vector<16x128xf32>
    %1059 = arith.mulf %1058, %1057 : vector<16x128xf32>
    %1060 = arith.addf %1052, %1059 : vector<16x128xf32>
    %1061 = vector.extract_strided_slice %10 {offsets = [7, 15, 0], sizes = [1, 1, 128], strides = [1, 1, 1]} : vector<16x16x128xf32> to vector<1x1x128xf32>
    %1062 = vector.shape_cast %1061 : vector<1x1x128xf32> to vector<128xf32>
    %1063 = vector.shape_cast %1062 : vector<128xf32> to vector<1x128xf32>
    %1064 = vector.extract_strided_slice %9 {offsets = [15, 0, 0], sizes = [1, 16, 128], strides = [1, 1, 1]} : vector<16x16x128xf32> to vector<1x16x128xf32>
    %1065 = vector.shape_cast %1064 : vector<1x16x128xf32> to vector<16x128xf32>
    %1066 = vector.broadcast %1063 : vector<1x128xf32> to vector<16x128xf32>
    %1067 = arith.mulf %1066, %1065 : vector<16x128xf32>
    %1068 = arith.addf %1060, %1067 : vector<16x128xf32>
    %c7 = arith.constant 7 : index
    %c0_44 = arith.constant 0 : index
    %c0_45 = arith.constant 0 : index
    %1069 = vector.load %arg5[%c7, %c0_44, %c0_45] : memref<16x16x128xf32, #tpu.memory_space<vmem>>, vector<1x16x128xf32>
    %1070 = vector.shape_cast %1069 : vector<1x16x128xf32> to vector<16x128xf32>
    %1071 = arith.subf %1068, %1070 : vector<16x128xf32>
    %c7_46 = arith.constant 7 : index
    %c0_47 = arith.constant 0 : index
    %c0_48 = arith.constant 0 : index
    %1072 = vector.load %arg6[%c7_46, %c0_47, %c0_48] : memref<16x16x128xf32, #tpu.memory_space<vmem>>, vector<1x16x128xf32>
    %1073 = vector.shape_cast %1072 : vector<1x16x128xf32> to vector<16x128xf32>
    %1074 = vector.shape_cast %1071 : vector<16x128xf32> to vector<1x16x128xf32>
    tpu.vector_store %arg6[%c7_46, %c0_47, %c0_48], %1074 {strides = array<i32>} : memref<16x16x128xf32, #tpu.memory_space<vmem>>, vector<1x16x128xf32>,
    %1075 = vector.extract_strided_slice %10 {offsets = [8, 0, 0], sizes = [1, 1, 128], strides = [1, 1, 1]} : vector<16x16x128xf32> to vector<1x1x128xf32>
    %1076 = vector.shape_cast %1075 : vector<1x1x128xf32> to vector<128xf32>
    %1077 = vector.shape_cast %1076 : vector<128xf32> to vector<1x128xf32>
    %1078 = vector.extract_strided_slice %9 {offsets = [0, 0, 0], sizes = [1, 16, 128], strides = [1, 1, 1]} : vector<16x16x128xf32> to vector<1x16x128xf32>
    %1079 = vector.shape_cast %1078 : vector<1x16x128xf32> to vector<16x128xf32>
    %1080 = vector.broadcast %1077 : vector<1x128xf32> to vector<16x128xf32>
    %1081 = arith.mulf %1080, %1079 : vector<16x128xf32>
    %1082 = vector.extract_strided_slice %10 {offsets = [8, 1, 0], sizes = [1, 1, 128], strides = [1, 1, 1]} : vector<16x16x128xf32> to vector<1x1x128xf32>
    %1083 = vector.shape_cast %1082 : vector<1x1x128xf32> to vector<128xf32>
    %1084 = vector.shape_cast %1083 : vector<128xf32> to vector<1x128xf32>
    %1085 = vector.extract_strided_slice %9 {offsets = [1, 0, 0], sizes = [1, 16, 128], strides = [1, 1, 1]} : vector<16x16x128xf32> to vector<1x16x128xf32>
    %1086 = vector.shape_cast %1085 : vector<1x16x128xf32> to vector<16x128xf32>
    %1087 = vector.broadcast %1084 : vector<1x128xf32> to vector<16x128xf32>
    %1088 = arith.mulf %1087, %1086 : vector<16x128xf32>
    %1089 = arith.addf %1081, %1088 : vector<16x128xf32>
    %1090 = vector.extract_strided_slice %10 {offsets = [8, 2, 0], sizes = [1, 1, 128], strides = [1, 1, 1]} : vector<16x16x128xf32> to vector<1x1x128xf32>
    %1091 = vector.shape_cast %1090 : vector<1x1x128xf32> to vector<128xf32>
    %1092 = vector.shape_cast %1091 : vector<128xf32> to vector<1x128xf32>
    %1093 = vector.extract_strided_slice %9 {offsets = [2, 0, 0], sizes = [1, 16, 128], strides = [1, 1, 1]} : vector<16x16x128xf32> to vector<1x16x128xf32>
    %1094 = vector.shape_cast %1093 : vector<1x16x128xf32> to vector<16x128xf32>
    %1095 = vector.broadcast %1092 : vector<1x128xf32> to vector<16x128xf32>
    %1096 = arith.mulf %1095, %1094 : vector<16x128xf32>
    %1097 = arith.addf %1089, %1096 : vector<16x128xf32>
    %1098 = vector.extract_strided_slice %10 {offsets = [8, 3, 0], sizes = [1, 1, 128], strides = [1, 1, 1]} : vector<16x16x128xf32> to vector<1x1x128xf32>
    %1099 = vector.shape_cast %1098 : vector<1x1x128xf32> to vector<128xf32>
    %1100 = vector.shape_cast %1099 : vector<128xf32> to vector<1x128xf32>
    %1101 = vector.extract_strided_slice %9 {offsets = [3, 0, 0], sizes = [1, 16, 128], strides = [1, 1, 1]} : vector<16x16x128xf32> to vector<1x16x128xf32>
    %1102 = vector.shape_cast %1101 : vector<1x16x128xf32> to vector<16x128xf32>
    %1103 = vector.broadcast %1100 : vector<1x128xf32> to vector<16x128xf32>
    %1104 = arith.mulf %1103, %1102 : vector<16x128xf32>
    %1105 = arith.addf %1097, %1104 : vector<16x128xf32>
    %1106 = vector.extract_strided_slice %10 {offsets = [8, 4, 0], sizes = [1, 1, 128], strides = [1, 1, 1]} : vector<16x16x128xf32> to vector<1x1x128xf32>
    %1107 = vector.shape_cast %1106 : vector<1x1x128xf32> to vector<128xf32>
    %1108 = vector.shape_cast %1107 : vector<128xf32> to vector<1x128xf32>
    %1109 = vector.extract_strided_slice %9 {offsets = [4, 0, 0], sizes = [1, 16, 128], strides = [1, 1, 1]} : vector<16x16x128xf32> to vector<1x16x128xf32>
    %1110 = vector.shape_cast %1109 : vector<1x16x128xf32> to vector<16x128xf32>
    %1111 = vector.broadcast %1108 : vector<1x128xf32> to vector<16x128xf32>
    %1112 = arith.mulf %1111, %1110 : vector<16x128xf32>
    %1113 = arith.addf %1105, %1112 : vector<16x128xf32>
    %1114 = vector.extract_strided_slice %10 {offsets = [8, 5, 0], sizes = [1, 1, 128], strides = [1, 1, 1]} : vector<16x16x128xf32> to vector<1x1x128xf32>
    %1115 = vector.shape_cast %1114 : vector<1x1x128xf32> to vector<128xf32>
    %1116 = vector.shape_cast %1115 : vector<128xf32> to vector<1x128xf32>
    %1117 = vector.extract_strided_slice %9 {offsets = [5, 0, 0], sizes = [1, 16, 128], strides = [1, 1, 1]} : vector<16x16x128xf32> to vector<1x16x128xf32>
    %1118 = vector.shape_cast %1117 : vector<1x16x128xf32> to vector<16x128xf32>
    %1119 = vector.broadcast %1116 : vector<1x128xf32> to vector<16x128xf32>
    %1120 = arith.mulf %1119, %1118 : vector<16x128xf32>
    %1121 = arith.addf %1113, %1120 : vector<16x128xf32>
    %1122 = vector.extract_strided_slice %10 {offsets = [8, 6, 0], sizes = [1, 1, 128], strides = [1, 1, 1]} : vector<16x16x128xf32> to vector<1x1x128xf32>
    %1123 = vector.shape_cast %1122 : vector<1x1x128xf32> to vector<128xf32>
    %1124 = vector.shape_cast %1123 : vector<128xf32> to vector<1x128xf32>
    %1125 = vector.extract_strided_slice %9 {offsets = [6, 0, 0], sizes = [1, 16, 128], strides = [1, 1, 1]} : vector<16x16x128xf32> to vector<1x16x128xf32>
    %1126 = vector.shape_cast %1125 : vector<1x16x128xf32> to vector<16x128xf32>
    %1127 = vector.broadcast %1124 : vector<1x128xf32> to vector<16x128xf32>
    %1128 = arith.mulf %1127, %1126 : vector<16x128xf32>
    %1129 = arith.addf %1121, %1128 : vector<16x128xf32>
    %1130 = vector.extract_strided_slice %10 {offsets = [8, 7, 0], sizes = [1, 1, 128], strides = [1, 1, 1]} : vector<16x16x128xf32> to vector<1x1x128xf32>
    %1131 = vector.shape_cast %1130 : vector<1x1x128xf32> to vector<128xf32>
    %1132 = vector.shape_cast %1131 : vector<128xf32> to vector<1x128xf32>
    %1133 = vector.extract_strided_slice %9 {offsets = [7, 0, 0], sizes = [1, 16, 128], strides = [1, 1, 1]} : vector<16x16x128xf32> to vector<1x16x128xf32>
    %1134 = vector.shape_cast %1133 : vector<1x16x128xf32> to vector<16x128xf32>
    %1135 = vector.broadcast %1132 : vector<1x128xf32> to vector<16x128xf32>
    %1136 = arith.mulf %1135, %1134 : vector<16x128xf32>
    %1137 = arith.addf %1129, %1136 : vector<16x128xf32>
    %1138 = vector.extract_strided_slice %10 {offsets = [8, 8, 0], sizes = [1, 1, 128], strides = [1, 1, 1]} : vector<16x16x128xf32> to vector<1x1x128xf32>
    %1139 = vector.shape_cast %1138 : vector<1x1x128xf32> to vector<128xf32>
    %1140 = vector.shape_cast %1139 : vector<128xf32> to vector<1x128xf32>
    %1141 = vector.extract_strided_slice %9 {offsets = [8, 0, 0], sizes = [1, 16, 128], strides = [1, 1, 1]} : vector<16x16x128xf32> to vector<1x16x128xf32>
    %1142 = vector.shape_cast %1141 : vector<1x16x128xf32> to vector<16x128xf32>
    %1143 = vector.broadcast %1140 : vector<1x128xf32> to vector<16x128xf32>
    %1144 = arith.mulf %1143, %1142 : vector<16x128xf32>
    %1145 = arith.addf %1137, %1144 : vector<16x128xf32>
    %1146 = vector.extract_strided_slice %10 {offsets = [8, 9, 0], sizes = [1, 1, 128], strides = [1, 1, 1]} : vector<16x16x128xf32> to vector<1x1x128xf32>
    %1147 = vector.shape_cast %1146 : vector<1x1x128xf32> to vector<128xf32>
    %1148 = vector.shape_cast %1147 : vector<128xf32> to vector<1x128xf32>
    %1149 = vector.extract_strided_slice %9 {offsets = [9, 0, 0], sizes = [1, 16, 128], strides = [1, 1, 1]} : vector<16x16x128xf32> to vector<1x16x128xf32>
    %1150 = vector.shape_cast %1149 : vector<1x16x128xf32> to vector<16x128xf32>
    %1151 = vector.broadcast %1148 : vector<1x128xf32> to vector<16x128xf32>
    %1152 = arith.mulf %1151, %1150 : vector<16x128xf32>
    %1153 = arith.addf %1145, %1152 : vector<16x128xf32>
    %1154 = vector.extract_strided_slice %10 {offsets = [8, 10, 0], sizes = [1, 1, 128], strides = [1, 1, 1]} : vector<16x16x128xf32> to vector<1x1x128xf32>
    %1155 = vector.shape_cast %1154 : vector<1x1x128xf32> to vector<128xf32>
    %1156 = vector.shape_cast %1155 : vector<128xf32> to vector<1x128xf32>
    %1157 = vector.extract_strided_slice %9 {offsets = [10, 0, 0], sizes = [1, 16, 128], strides = [1, 1, 1]} : vector<16x16x128xf32> to vector<1x16x128xf32>
    %1158 = vector.shape_cast %1157 : vector<1x16x128xf32> to vector<16x128xf32>
    %1159 = vector.broadcast %1156 : vector<1x128xf32> to vector<16x128xf32>
    %1160 = arith.mulf %1159, %1158 : vector<16x128xf32>
    %1161 = arith.addf %1153, %1160 : vector<16x128xf32>
    %1162 = vector.extract_strided_slice %10 {offsets = [8, 11, 0], sizes = [1, 1, 128], strides = [1, 1, 1]} : vector<16x16x128xf32> to vector<1x1x128xf32>
    %1163 = vector.shape_cast %1162 : vector<1x1x128xf32> to vector<128xf32>
    %1164 = vector.shape_cast %1163 : vector<128xf32> to vector<1x128xf32>
    %1165 = vector.extract_strided_slice %9 {offsets = [11, 0, 0], sizes = [1, 16, 128], strides = [1, 1, 1]} : vector<16x16x128xf32> to vector<1x16x128xf32>
    %1166 = vector.shape_cast %1165 : vector<1x16x128xf32> to vector<16x128xf32>
    %1167 = vector.broadcast %1164 : vector<1x128xf32> to vector<16x128xf32>
    %1168 = arith.mulf %1167, %1166 : vector<16x128xf32>
    %1169 = arith.addf %1161, %1168 : vector<16x128xf32>
    %1170 = vector.extract_strided_slice %10 {offsets = [8, 12, 0], sizes = [1, 1, 128], strides = [1, 1, 1]} : vector<16x16x128xf32> to vector<1x1x128xf32>
    %1171 = vector.shape_cast %1170 : vector<1x1x128xf32> to vector<128xf32>
    %1172 = vector.shape_cast %1171 : vector<128xf32> to vector<1x128xf32>
    %1173 = vector.extract_strided_slice %9 {offsets = [12, 0, 0], sizes = [1, 16, 128], strides = [1, 1, 1]} : vector<16x16x128xf32> to vector<1x16x128xf32>
    %1174 = vector.shape_cast %1173 : vector<1x16x128xf32> to vector<16x128xf32>
    %1175 = vector.broadcast %1172 : vector<1x128xf32> to vector<16x128xf32>
    %1176 = arith.mulf %1175, %1174 : vector<16x128xf32>
    %1177 = arith.addf %1169, %1176 : vector<16x128xf32>
    %1178 = vector.extract_strided_slice %10 {offsets = [8, 13, 0], sizes = [1, 1, 128], strides = [1, 1, 1]} : vector<16x16x128xf32> to vector<1x1x128xf32>
    %1179 = vector.shape_cast %1178 : vector<1x1x128xf32> to vector<128xf32>
    %1180 = vector.shape_cast %1179 : vector<128xf32> to vector<1x128xf32>
    %1181 = vector.extract_strided_slice %9 {offsets = [13, 0, 0], sizes = [1, 16, 128], strides = [1, 1, 1]} : vector<16x16x128xf32> to vector<1x16x128xf32>
    %1182 = vector.shape_cast %1181 : vector<1x16x128xf32> to vector<16x128xf32>
    %1183 = vector.broadcast %1180 : vector<1x128xf32> to vector<16x128xf32>
    %1184 = arith.mulf %1183, %1182 : vector<16x128xf32>
    %1185 = arith.addf %1177, %1184 : vector<16x128xf32>
    %1186 = vector.extract_strided_slice %10 {offsets = [8, 14, 0], sizes = [1, 1, 128], strides = [1, 1, 1]} : vector<16x16x128xf32> to vector<1x1x128xf32>
    %1187 = vector.shape_cast %1186 : vector<1x1x128xf32> to vector<128xf32>
    %1188 = vector.shape_cast %1187 : vector<128xf32> to vector<1x128xf32>
    %1189 = vector.extract_strided_slice %9 {offsets = [14, 0, 0], sizes = [1, 16, 128], strides = [1, 1, 1]} : vector<16x16x128xf32> to vector<1x16x128xf32>
    %1190 = vector.shape_cast %1189 : vector<1x16x128xf32> to vector<16x128xf32>
    %1191 = vector.broadcast %1188 : vector<1x128xf32> to vector<16x128xf32>
    %1192 = arith.mulf %1191, %1190 : vector<16x128xf32>
    %1193 = arith.addf %1185, %1192 : vector<16x128xf32>
    %1194 = vector.extract_strided_slice %10 {offsets = [8, 15, 0], sizes = [1, 1, 128], strides = [1, 1, 1]} : vector<16x16x128xf32> to vector<1x1x128xf32>
    %1195 = vector.shape_cast %1194 : vector<1x1x128xf32> to vector<128xf32>
    %1196 = vector.shape_cast %1195 : vector<128xf32> to vector<1x128xf32>
    %1197 = vector.extract_strided_slice %9 {offsets = [15, 0, 0], sizes = [1, 16, 128], strides = [1, 1, 1]} : vector<16x16x128xf32> to vector<1x16x128xf32>
    %1198 = vector.shape_cast %1197 : vector<1x16x128xf32> to vector<16x128xf32>
    %1199 = vector.broadcast %1196 : vector<1x128xf32> to vector<16x128xf32>
    %1200 = arith.mulf %1199, %1198 : vector<16x128xf32>
    %1201 = arith.addf %1193, %1200 : vector<16x128xf32>
    %c8 = arith.constant 8 : index
    %c0_49 = arith.constant 0 : index
    %c0_50 = arith.constant 0 : index
    %1202 = vector.load %arg5[%c8, %c0_49, %c0_50] : memref<16x16x128xf32, #tpu.memory_space<vmem>>, vector<1x16x128xf32>
    %1203 = vector.shape_cast %1202 : vector<1x16x128xf32> to vector<16x128xf32>
    %1204 = arith.subf %1201, %1203 : vector<16x128xf32>
    %c8_51 = arith.constant 8 : index
    %c0_52 = arith.constant 0 : index
    %c0_53 = arith.constant 0 : index
    %1205 = vector.load %arg6[%c8_51, %c0_52, %c0_53] : memref<16x16x128xf32, #tpu.memory_space<vmem>>, vector<1x16x128xf32>
    %1206 = vector.shape_cast %1205 : vector<1x16x128xf32> to vector<16x128xf32>
    %1207 = vector.shape_cast %1204 : vector<16x128xf32> to vector<1x16x128xf32>
    tpu.vector_store %arg6[%c8_51, %c0_52, %c0_53], %1207 {strides = array<i32>} : memref<16x16x128xf32, #tpu.memory_space<vmem>>, vector<1x16x128xf32>,
    %1208 = vector.extract_strided_slice %10 {offsets = [9, 0, 0], sizes = [1, 1, 128], strides = [1, 1, 1]} : vector<16x16x128xf32> to vector<1x1x128xf32>
    %1209 = vector.shape_cast %1208 : vector<1x1x128xf32> to vector<128xf32>
    %1210 = vector.shape_cast %1209 : vector<128xf32> to vector<1x128xf32>
    %1211 = vector.extract_strided_slice %9 {offsets = [0, 0, 0], sizes = [1, 16, 128], strides = [1, 1, 1]} : vector<16x16x128xf32> to vector<1x16x128xf32>
    %1212 = vector.shape_cast %1211 : vector<1x16x128xf32> to vector<16x128xf32>
    %1213 = vector.broadcast %1210 : vector<1x128xf32> to vector<16x128xf32>
    %1214 = arith.mulf %1213, %1212 : vector<16x128xf32>
    %1215 = vector.extract_strided_slice %10 {offsets = [9, 1, 0], sizes = [1, 1, 128], strides = [1, 1, 1]} : vector<16x16x128xf32> to vector<1x1x128xf32>
    %1216 = vector.shape_cast %1215 : vector<1x1x128xf32> to vector<128xf32>
    %1217 = vector.shape_cast %1216 : vector<128xf32> to vector<1x128xf32>
    %1218 = vector.extract_strided_slice %9 {offsets = [1, 0, 0], sizes = [1, 16, 128], strides = [1, 1, 1]} : vector<16x16x128xf32> to vector<1x16x128xf32>
    %1219 = vector.shape_cast %1218 : vector<1x16x128xf32> to vector<16x128xf32>
    %1220 = vector.broadcast %1217 : vector<1x128xf32> to vector<16x128xf32>
    %1221 = arith.mulf %1220, %1219 : vector<16x128xf32>
    %1222 = arith.addf %1214, %1221 : vector<16x128xf32>
    %1223 = vector.extract_strided_slice %10 {offsets = [9, 2, 0], sizes = [1, 1, 128], strides = [1, 1, 1]} : vector<16x16x128xf32> to vector<1x1x128xf32>
    %1224 = vector.shape_cast %1223 : vector<1x1x128xf32> to vector<128xf32>
    %1225 = vector.shape_cast %1224 : vector<128xf32> to vector<1x128xf32>
    %1226 = vector.extract_strided_slice %9 {offsets = [2, 0, 0], sizes = [1, 16, 128], strides = [1, 1, 1]} : vector<16x16x128xf32> to vector<1x16x128xf32>
    %1227 = vector.shape_cast %1226 : vector<1x16x128xf32> to vector<16x128xf32>
    %1228 = vector.broadcast %1225 : vector<1x128xf32> to vector<16x128xf32>
    %1229 = arith.mulf %1228, %1227 : vector<16x128xf32>
    %1230 = arith.addf %1222, %1229 : vector<16x128xf32>
    %1231 = vector.extract_strided_slice %10 {offsets = [9, 3, 0], sizes = [1, 1, 128], strides = [1, 1, 1]} : vector<16x16x128xf32> to vector<1x1x128xf32>
    %1232 = vector.shape_cast %1231 : vector<1x1x128xf32> to vector<128xf32>
    %1233 = vector.shape_cast %1232 : vector<128xf32> to vector<1x128xf32>
    %1234 = vector.extract_strided_slice %9 {offsets = [3, 0, 0], sizes = [1, 16, 128], strides = [1, 1, 1]} : vector<16x16x128xf32> to vector<1x16x128xf32>
    %1235 = vector.shape_cast %1234 : vector<1x16x128xf32> to vector<16x128xf32>
    %1236 = vector.broadcast %1233 : vector<1x128xf32> to vector<16x128xf32>
    %1237 = arith.mulf %1236, %1235 : vector<16x128xf32>
    %1238 = arith.addf %1230, %1237 : vector<16x128xf32>
    %1239 = vector.extract_strided_slice %10 {offsets = [9, 4, 0], sizes = [1, 1, 128], strides = [1, 1, 1]} : vector<16x16x128xf32> to vector<1x1x128xf32>
    %1240 = vector.shape_cast %1239 : vector<1x1x128xf32> to vector<128xf32>
    %1241 = vector.shape_cast %1240 : vector<128xf32> to vector<1x128xf32>
    %1242 = vector.extract_strided_slice %9 {offsets = [4, 0, 0], sizes = [1, 16, 128], strides = [1, 1, 1]} : vector<16x16x128xf32> to vector<1x16x128xf32>
    %1243 = vector.shape_cast %1242 : vector<1x16x128xf32> to vector<16x128xf32>
    %1244 = vector.broadcast %1241 : vector<1x128xf32> to vector<16x128xf32>
    %1245 = arith.mulf %1244, %1243 : vector<16x128xf32>
    %1246 = arith.addf %1238, %1245 : vector<16x128xf32>
    %1247 = vector.extract_strided_slice %10 {offsets = [9, 5, 0], sizes = [1, 1, 128], strides = [1, 1, 1]} : vector<16x16x128xf32> to vector<1x1x128xf32>
    %1248 = vector.shape_cast %1247 : vector<1x1x128xf32> to vector<128xf32>
    %1249 = vector.shape_cast %1248 : vector<128xf32> to vector<1x128xf32>
    %1250 = vector.extract_strided_slice %9 {offsets = [5, 0, 0], sizes = [1, 16, 128], strides = [1, 1, 1]} : vector<16x16x128xf32> to vector<1x16x128xf32>
    %1251 = vector.shape_cast %1250 : vector<1x16x128xf32> to vector<16x128xf32>
    %1252 = vector.broadcast %1249 : vector<1x128xf32> to vector<16x128xf32>
    %1253 = arith.mulf %1252, %1251 : vector<16x128xf32>
    %1254 = arith.addf %1246, %1253 : vector<16x128xf32>
    %1255 = vector.extract_strided_slice %10 {offsets = [9, 6, 0], sizes = [1, 1, 128], strides = [1, 1, 1]} : vector<16x16x128xf32> to vector<1x1x128xf32>
    %1256 = vector.shape_cast %1255 : vector<1x1x128xf32> to vector<128xf32>
    %1257 = vector.shape_cast %1256 : vector<128xf32> to vector<1x128xf32>
    %1258 = vector.extract_strided_slice %9 {offsets = [6, 0, 0], sizes = [1, 16, 128], strides = [1, 1, 1]} : vector<16x16x128xf32> to vector<1x16x128xf32>
    %1259 = vector.shape_cast %1258 : vector<1x16x128xf32> to vector<16x128xf32>
    %1260 = vector.broadcast %1257 : vector<1x128xf32> to vector<16x128xf32>
    %1261 = arith.mulf %1260, %1259 : vector<16x128xf32>
    %1262 = arith.addf %1254, %1261 : vector<16x128xf32>
    %1263 = vector.extract_strided_slice %10 {offsets = [9, 7, 0], sizes = [1, 1, 128], strides = [1, 1, 1]} : vector<16x16x128xf32> to vector<1x1x128xf32>
    %1264 = vector.shape_cast %1263 : vector<1x1x128xf32> to vector<128xf32>
    %1265 = vector.shape_cast %1264 : vector<128xf32> to vector<1x128xf32>
    %1266 = vector.extract_strided_slice %9 {offsets = [7, 0, 0], sizes = [1, 16, 128], strides = [1, 1, 1]} : vector<16x16x128xf32> to vector<1x16x128xf32>
    %1267 = vector.shape_cast %1266 : vector<1x16x128xf32> to vector<16x128xf32>
    %1268 = vector.broadcast %1265 : vector<1x128xf32> to vector<16x128xf32>
    %1269 = arith.mulf %1268, %1267 : vector<16x128xf32>
    %1270 = arith.addf %1262, %1269 : vector<16x128xf32>
    %1271 = vector.extract_strided_slice %10 {offsets = [9, 8, 0], sizes = [1, 1, 128], strides = [1, 1, 1]} : vector<16x16x128xf32> to vector<1x1x128xf32>
    %1272 = vector.shape_cast %1271 : vector<1x1x128xf32> to vector<128xf32>
    %1273 = vector.shape_cast %1272 : vector<128xf32> to vector<1x128xf32>
    %1274 = vector.extract_strided_slice %9 {offsets = [8, 0, 0], sizes = [1, 16, 128], strides = [1, 1, 1]} : vector<16x16x128xf32> to vector<1x16x128xf32>
    %1275 = vector.shape_cast %1274 : vector<1x16x128xf32> to vector<16x128xf32>
    %1276 = vector.broadcast %1273 : vector<1x128xf32> to vector<16x128xf32>
    %1277 = arith.mulf %1276, %1275 : vector<16x128xf32>
    %1278 = arith.addf %1270, %1277 : vector<16x128xf32>
    %1279 = vector.extract_strided_slice %10 {offsets = [9, 9, 0], sizes = [1, 1, 128], strides = [1, 1, 1]} : vector<16x16x128xf32> to vector<1x1x128xf32>
    %1280 = vector.shape_cast %1279 : vector<1x1x128xf32> to vector<128xf32>
    %1281 = vector.shape_cast %1280 : vector<128xf32> to vector<1x128xf32>
    %1282 = vector.extract_strided_slice %9 {offsets = [9, 0, 0], sizes = [1, 16, 128], strides = [1, 1, 1]} : vector<16x16x128xf32> to vector<1x16x128xf32>
    %1283 = vector.shape_cast %1282 : vector<1x16x128xf32> to vector<16x128xf32>
    %1284 = vector.broadcast %1281 : vector<1x128xf32> to vector<16x128xf32>
    %1285 = arith.mulf %1284, %1283 : vector<16x128xf32>
    %1286 = arith.addf %1278, %1285 : vector<16x128xf32>
    %1287 = vector.extract_strided_slice %10 {offsets = [9, 10, 0], sizes = [1, 1, 128], strides = [1, 1, 1]} : vector<16x16x128xf32> to vector<1x1x128xf32>
    %1288 = vector.shape_cast %1287 : vector<1x1x128xf32> to vector<128xf32>
    %1289 = vector.shape_cast %1288 : vector<128xf32> to vector<1x128xf32>
    %1290 = vector.extract_strided_slice %9 {offsets = [10, 0, 0], sizes = [1, 16, 128], strides = [1, 1, 1]} : vector<16x16x128xf32> to vector<1x16x128xf32>
    %1291 = vector.shape_cast %1290 : vector<1x16x128xf32> to vector<16x128xf32>
    %1292 = vector.broadcast %1289 : vector<1x128xf32> to vector<16x128xf32>
    %1293 = arith.mulf %1292, %1291 : vector<16x128xf32>
    %1294 = arith.addf %1286, %1293 : vector<16x128xf32>
    %1295 = vector.extract_strided_slice %10 {offsets = [9, 11, 0], sizes = [1, 1, 128], strides = [1, 1, 1]} : vector<16x16x128xf32> to vector<1x1x128xf32>
    %1296 = vector.shape_cast %1295 : vector<1x1x128xf32> to vector<128xf32>
    %1297 = vector.shape_cast %1296 : vector<128xf32> to vector<1x128xf32>
    %1298 = vector.extract_strided_slice %9 {offsets = [11, 0, 0], sizes = [1, 16, 128], strides = [1, 1, 1]} : vector<16x16x128xf32> to vector<1x16x128xf32>
    %1299 = vector.shape_cast %1298 : vector<1x16x128xf32> to vector<16x128xf32>
    %1300 = vector.broadcast %1297 : vector<1x128xf32> to vector<16x128xf32>
    %1301 = arith.mulf %1300, %1299 : vector<16x128xf32>
    %1302 = arith.addf %1294, %1301 : vector<16x128xf32>
    %1303 = vector.extract_strided_slice %10 {offsets = [9, 12, 0], sizes = [1, 1, 128], strides = [1, 1, 1]} : vector<16x16x128xf32> to vector<1x1x128xf32>
    %1304 = vector.shape_cast %1303 : vector<1x1x128xf32> to vector<128xf32>
    %1305 = vector.shape_cast %1304 : vector<128xf32> to vector<1x128xf32>
    %1306 = vector.extract_strided_slice %9 {offsets = [12, 0, 0], sizes = [1, 16, 128], strides = [1, 1, 1]} : vector<16x16x128xf32> to vector<1x16x128xf32>
    %1307 = vector.shape_cast %1306 : vector<1x16x128xf32> to vector<16x128xf32>
    %1308 = vector.broadcast %1305 : vector<1x128xf32> to vector<16x128xf32>
    %1309 = arith.mulf %1308, %1307 : vector<16x128xf32>
    %1310 = arith.addf %1302, %1309 : vector<16x128xf32>
    %1311 = vector.extract_strided_slice %10 {offsets = [9, 13, 0], sizes = [1, 1, 128], strides = [1, 1, 1]} : vector<16x16x128xf32> to vector<1x1x128xf32>
    %1312 = vector.shape_cast %1311 : vector<1x1x128xf32> to vector<128xf32>
    %1313 = vector.shape_cast %1312 : vector<128xf32> to vector<1x128xf32>
    %1314 = vector.extract_strided_slice %9 {offsets = [13, 0, 0], sizes = [1, 16, 128], strides = [1, 1, 1]} : vector<16x16x128xf32> to vector<1x16x128xf32>
    %1315 = vector.shape_cast %1314 : vector<1x16x128xf32> to vector<16x128xf32>
    %1316 = vector.broadcast %1313 : vector<1x128xf32> to vector<16x128xf32>
    %1317 = arith.mulf %1316, %1315 : vector<16x128xf32>
    %1318 = arith.addf %1310, %1317 : vector<16x128xf32>
    %1319 = vector.extract_strided_slice %10 {offsets = [9, 14, 0], sizes = [1, 1, 128], strides = [1, 1, 1]} : vector<16x16x128xf32> to vector<1x1x128xf32>
    %1320 = vector.shape_cast %1319 : vector<1x1x128xf32> to vector<128xf32>
    %1321 = vector.shape_cast %1320 : vector<128xf32> to vector<1x128xf32>
    %1322 = vector.extract_strided_slice %9 {offsets = [14, 0, 0], sizes = [1, 16, 128], strides = [1, 1, 1]} : vector<16x16x128xf32> to vector<1x16x128xf32>
    %1323 = vector.shape_cast %1322 : vector<1x16x128xf32> to vector<16x128xf32>
    %1324 = vector.broadcast %1321 : vector<1x128xf32> to vector<16x128xf32>
    %1325 = arith.mulf %1324, %1323 : vector<16x128xf32>
    %1326 = arith.addf %1318, %1325 : vector<16x128xf32>
    %1327 = vector.extract_strided_slice %10 {offsets = [9, 15, 0], sizes = [1, 1, 128], strides = [1, 1, 1]} : vector<16x16x128xf32> to vector<1x1x128xf32>
    %1328 = vector.shape_cast %1327 : vector<1x1x128xf32> to vector<128xf32>
    %1329 = vector.shape_cast %1328 : vector<128xf32> to vector<1x128xf32>
    %1330 = vector.extract_strided_slice %9 {offsets = [15, 0, 0], sizes = [1, 16, 128], strides = [1, 1, 1]} : vector<16x16x128xf32> to vector<1x16x128xf32>
    %1331 = vector.shape_cast %1330 : vector<1x16x128xf32> to vector<16x128xf32>
    %1332 = vector.broadcast %1329 : vector<1x128xf32> to vector<16x128xf32>
    %1333 = arith.mulf %1332, %1331 : vector<16x128xf32>
    %1334 = arith.addf %1326, %1333 : vector<16x128xf32>
    %c9 = arith.constant 9 : index
    %c0_54 = arith.constant 0 : index
    %c0_55 = arith.constant 0 : index
    %1335 = vector.load %arg5[%c9, %c0_54, %c0_55] : memref<16x16x128xf32, #tpu.memory_space<vmem>>, vector<1x16x128xf32>
    %1336 = vector.shape_cast %1335 : vector<1x16x128xf32> to vector<16x128xf32>
    %1337 = arith.subf %1334, %1336 : vector<16x128xf32>
    %c9_56 = arith.constant 9 : index
    %c0_57 = arith.constant 0 : index
    %c0_58 = arith.constant 0 : index
    %1338 = vector.load %arg6[%c9_56, %c0_57, %c0_58] : memref<16x16x128xf32, #tpu.memory_space<vmem>>, vector<1x16x128xf32>
    %1339 = vector.shape_cast %1338 : vector<1x16x128xf32> to vector<16x128xf32>
    %1340 = vector.shape_cast %1337 : vector<16x128xf32> to vector<1x16x128xf32>
    tpu.vector_store %arg6[%c9_56, %c0_57, %c0_58], %1340 {strides = array<i32>} : memref<16x16x128xf32, #tpu.memory_space<vmem>>, vector<1x16x128xf32>,
    %1341 = vector.extract_strided_slice %10 {offsets = [10, 0, 0], sizes = [1, 1, 128], strides = [1, 1, 1]} : vector<16x16x128xf32> to vector<1x1x128xf32>
    %1342 = vector.shape_cast %1341 : vector<1x1x128xf32> to vector<128xf32>
    %1343 = vector.shape_cast %1342 : vector<128xf32> to vector<1x128xf32>
    %1344 = vector.extract_strided_slice %9 {offsets = [0, 0, 0], sizes = [1, 16, 128], strides = [1, 1, 1]} : vector<16x16x128xf32> to vector<1x16x128xf32>
    %1345 = vector.shape_cast %1344 : vector<1x16x128xf32> to vector<16x128xf32>
    %1346 = vector.broadcast %1343 : vector<1x128xf32> to vector<16x128xf32>
    %1347 = arith.mulf %1346, %1345 : vector<16x128xf32>
    %1348 = vector.extract_strided_slice %10 {offsets = [10, 1, 0], sizes = [1, 1, 128], strides = [1, 1, 1]} : vector<16x16x128xf32> to vector<1x1x128xf32>
    %1349 = vector.shape_cast %1348 : vector<1x1x128xf32> to vector<128xf32>
    %1350 = vector.shape_cast %1349 : vector<128xf32> to vector<1x128xf32>
    %1351 = vector.extract_strided_slice %9 {offsets = [1, 0, 0], sizes = [1, 16, 128], strides = [1, 1, 1]} : vector<16x16x128xf32> to vector<1x16x128xf32>
    %1352 = vector.shape_cast %1351 : vector<1x16x128xf32> to vector<16x128xf32>
    %1353 = vector.broadcast %1350 : vector<1x128xf32> to vector<16x128xf32>
    %1354 = arith.mulf %1353, %1352 : vector<16x128xf32>
    %1355 = arith.addf %1347, %1354 : vector<16x128xf32>
    %1356 = vector.extract_strided_slice %10 {offsets = [10, 2, 0], sizes = [1, 1, 128], strides = [1, 1, 1]} : vector<16x16x128xf32> to vector<1x1x128xf32>
    %1357 = vector.shape_cast %1356 : vector<1x1x128xf32> to vector<128xf32>
    %1358 = vector.shape_cast %1357 : vector<128xf32> to vector<1x128xf32>
    %1359 = vector.extract_strided_slice %9 {offsets = [2, 0, 0], sizes = [1, 16, 128], strides = [1, 1, 1]} : vector<16x16x128xf32> to vector<1x16x128xf32>
    %1360 = vector.shape_cast %1359 : vector<1x16x128xf32> to vector<16x128xf32>
    %1361 = vector.broadcast %1358 : vector<1x128xf32> to vector<16x128xf32>
    %1362 = arith.mulf %1361, %1360 : vector<16x128xf32>
    %1363 = arith.addf %1355, %1362 : vector<16x128xf32>
    %1364 = vector.extract_strided_slice %10 {offsets = [10, 3, 0], sizes = [1, 1, 128], strides = [1, 1, 1]} : vector<16x16x128xf32> to vector<1x1x128xf32>
    %1365 = vector.shape_cast %1364 : vector<1x1x128xf32> to vector<128xf32>
    %1366 = vector.shape_cast %1365 : vector<128xf32> to vector<1x128xf32>
    %1367 = vector.extract_strided_slice %9 {offsets = [3, 0, 0], sizes = [1, 16, 128], strides = [1, 1, 1]} : vector<16x16x128xf32> to vector<1x16x128xf32>
    %1368 = vector.shape_cast %1367 : vector<1x16x128xf32> to vector<16x128xf32>
    %1369 = vector.broadcast %1366 : vector<1x128xf32> to vector<16x128xf32>
    %1370 = arith.mulf %1369, %1368 : vector<16x128xf32>
    %1371 = arith.addf %1363, %1370 : vector<16x128xf32>
    %1372 = vector.extract_strided_slice %10 {offsets = [10, 4, 0], sizes = [1, 1, 128], strides = [1, 1, 1]} : vector<16x16x128xf32> to vector<1x1x128xf32>
    %1373 = vector.shape_cast %1372 : vector<1x1x128xf32> to vector<128xf32>
    %1374 = vector.shape_cast %1373 : vector<128xf32> to vector<1x128xf32>
    %1375 = vector.extract_strided_slice %9 {offsets = [4, 0, 0], sizes = [1, 16, 128], strides = [1, 1, 1]} : vector<16x16x128xf32> to vector<1x16x128xf32>
    %1376 = vector.shape_cast %1375 : vector<1x16x128xf32> to vector<16x128xf32>
    %1377 = vector.broadcast %1374 : vector<1x128xf32> to vector<16x128xf32>
    %1378 = arith.mulf %1377, %1376 : vector<16x128xf32>
    %1379 = arith.addf %1371, %1378 : vector<16x128xf32>
    %1380 = vector.extract_strided_slice %10 {offsets = [10, 5, 0], sizes = [1, 1, 128], strides = [1, 1, 1]} : vector<16x16x128xf32> to vector<1x1x128xf32>
    %1381 = vector.shape_cast %1380 : vector<1x1x128xf32> to vector<128xf32>
    %1382 = vector.shape_cast %1381 : vector<128xf32> to vector<1x128xf32>
    %1383 = vector.extract_strided_slice %9 {offsets = [5, 0, 0], sizes = [1, 16, 128], strides = [1, 1, 1]} : vector<16x16x128xf32> to vector<1x16x128xf32>
    %1384 = vector.shape_cast %1383 : vector<1x16x128xf32> to vector<16x128xf32>
    %1385 = vector.broadcast %1382 : vector<1x128xf32> to vector<16x128xf32>
    %1386 = arith.mulf %1385, %1384 : vector<16x128xf32>
    %1387 = arith.addf %1379, %1386 : vector<16x128xf32>
    %1388 = vector.extract_strided_slice %10 {offsets = [10, 6, 0], sizes = [1, 1, 128], strides = [1, 1, 1]} : vector<16x16x128xf32> to vector<1x1x128xf32>
    %1389 = vector.shape_cast %1388 : vector<1x1x128xf32> to vector<128xf32>
    %1390 = vector.shape_cast %1389 : vector<128xf32> to vector<1x128xf32>
    %1391 = vector.extract_strided_slice %9 {offsets = [6, 0, 0], sizes = [1, 16, 128], strides = [1, 1, 1]} : vector<16x16x128xf32> to vector<1x16x128xf32>
    %1392 = vector.shape_cast %1391 : vector<1x16x128xf32> to vector<16x128xf32>
    %1393 = vector.broadcast %1390 : vector<1x128xf32> to vector<16x128xf32>
    %1394 = arith.mulf %1393, %1392 : vector<16x128xf32>
    %1395 = arith.addf %1387, %1394 : vector<16x128xf32>
    %1396 = vector.extract_strided_slice %10 {offsets = [10, 7, 0], sizes = [1, 1, 128], strides = [1, 1, 1]} : vector<16x16x128xf32> to vector<1x1x128xf32>
    %1397 = vector.shape_cast %1396 : vector<1x1x128xf32> to vector<128xf32>
    %1398 = vector.shape_cast %1397 : vector<128xf32> to vector<1x128xf32>
    %1399 = vector.extract_strided_slice %9 {offsets = [7, 0, 0], sizes = [1, 16, 128], strides = [1, 1, 1]} : vector<16x16x128xf32> to vector<1x16x128xf32>
    %1400 = vector.shape_cast %1399 : vector<1x16x128xf32> to vector<16x128xf32>
    %1401 = vector.broadcast %1398 : vector<1x128xf32> to vector<16x128xf32>
    %1402 = arith.mulf %1401, %1400 : vector<16x128xf32>
    %1403 = arith.addf %1395, %1402 : vector<16x128xf32>
    %1404 = vector.extract_strided_slice %10 {offsets = [10, 8, 0], sizes = [1, 1, 128], strides = [1, 1, 1]} : vector<16x16x128xf32> to vector<1x1x128xf32>
    %1405 = vector.shape_cast %1404 : vector<1x1x128xf32> to vector<128xf32>
    %1406 = vector.shape_cast %1405 : vector<128xf32> to vector<1x128xf32>
    %1407 = vector.extract_strided_slice %9 {offsets = [8, 0, 0], sizes = [1, 16, 128], strides = [1, 1, 1]} : vector<16x16x128xf32> to vector<1x16x128xf32>
    %1408 = vector.shape_cast %1407 : vector<1x16x128xf32> to vector<16x128xf32>
    %1409 = vector.broadcast %1406 : vector<1x128xf32> to vector<16x128xf32>
    %1410 = arith.mulf %1409, %1408 : vector<16x128xf32>
    %1411 = arith.addf %1403, %1410 : vector<16x128xf32>
    %1412 = vector.extract_strided_slice %10 {offsets = [10, 9, 0], sizes = [1, 1, 128], strides = [1, 1, 1]} : vector<16x16x128xf32> to vector<1x1x128xf32>
    %1413 = vector.shape_cast %1412 : vector<1x1x128xf32> to vector<128xf32>
    %1414 = vector.shape_cast %1413 : vector<128xf32> to vector<1x128xf32>
    %1415 = vector.extract_strided_slice %9 {offsets = [9, 0, 0], sizes = [1, 16, 128], strides = [1, 1, 1]} : vector<16x16x128xf32> to vector<1x16x128xf32>
    %1416 = vector.shape_cast %1415 : vector<1x16x128xf32> to vector<16x128xf32>
    %1417 = vector.broadcast %1414 : vector<1x128xf32> to vector<16x128xf32>
    %1418 = arith.mulf %1417, %1416 : vector<16x128xf32>
    %1419 = arith.addf %1411, %1418 : vector<16x128xf32>
    %1420 = vector.extract_strided_slice %10 {offsets = [10, 10, 0], sizes = [1, 1, 128], strides = [1, 1, 1]} : vector<16x16x128xf32> to vector<1x1x128xf32>
    %1421 = vector.shape_cast %1420 : vector<1x1x128xf32> to vector<128xf32>
    %1422 = vector.shape_cast %1421 : vector<128xf32> to vector<1x128xf32>
    %1423 = vector.extract_strided_slice %9 {offsets = [10, 0, 0], sizes = [1, 16, 128], strides = [1, 1, 1]} : vector<16x16x128xf32> to vector<1x16x128xf32>
    %1424 = vector.shape_cast %1423 : vector<1x16x128xf32> to vector<16x128xf32>
    %1425 = vector.broadcast %1422 : vector<1x128xf32> to vector<16x128xf32>
    %1426 = arith.mulf %1425, %1424 : vector<16x128xf32>
    %1427 = arith.addf %1419, %1426 : vector<16x128xf32>
    %1428 = vector.extract_strided_slice %10 {offsets = [10, 11, 0], sizes = [1, 1, 128], strides = [1, 1, 1]} : vector<16x16x128xf32> to vector<1x1x128xf32>
    %1429 = vector.shape_cast %1428 : vector<1x1x128xf32> to vector<128xf32>
    %1430 = vector.shape_cast %1429 : vector<128xf32> to vector<1x128xf32>
    %1431 = vector.extract_strided_slice %9 {offsets = [11, 0, 0], sizes = [1, 16, 128], strides = [1, 1, 1]} : vector<16x16x128xf32> to vector<1x16x128xf32>
    %1432 = vector.shape_cast %1431 : vector<1x16x128xf32> to vector<16x128xf32>
    %1433 = vector.broadcast %1430 : vector<1x128xf32> to vector<16x128xf32>
    %1434 = arith.mulf %1433, %1432 : vector<16x128xf32>
    %1435 = arith.addf %1427, %1434 : vector<16x128xf32>
    %1436 = vector.extract_strided_slice %10 {offsets = [10, 12, 0], sizes = [1, 1, 128], strides = [1, 1, 1]} : vector<16x16x128xf32> to vector<1x1x128xf32>
    %1437 = vector.shape_cast %1436 : vector<1x1x128xf32> to vector<128xf32>
    %1438 = vector.shape_cast %1437 : vector<128xf32> to vector<1x128xf32>
    %1439 = vector.extract_strided_slice %9 {offsets = [12, 0, 0], sizes = [1, 16, 128], strides = [1, 1, 1]} : vector<16x16x128xf32> to vector<1x16x128xf32>
    %1440 = vector.shape_cast %1439 : vector<1x16x128xf32> to vector<16x128xf32>
    %1441 = vector.broadcast %1438 : vector<1x128xf32> to vector<16x128xf32>
    %1442 = arith.mulf %1441, %1440 : vector<16x128xf32>
    %1443 = arith.addf %1435, %1442 : vector<16x128xf32>
    %1444 = vector.extract_strided_slice %10 {offsets = [10, 13, 0], sizes = [1, 1, 128], strides = [1, 1, 1]} : vector<16x16x128xf32> to vector<1x1x128xf32>
    %1445 = vector.shape_cast %1444 : vector<1x1x128xf32> to vector<128xf32>
    %1446 = vector.shape_cast %1445 : vector<128xf32> to vector<1x128xf32>
    %1447 = vector.extract_strided_slice %9 {offsets = [13, 0, 0], sizes = [1, 16, 128], strides = [1, 1, 1]} : vector<16x16x128xf32> to vector<1x16x128xf32>
    %1448 = vector.shape_cast %1447 : vector<1x16x128xf32> to vector<16x128xf32>
    %1449 = vector.broadcast %1446 : vector<1x128xf32> to vector<16x128xf32>
    %1450 = arith.mulf %1449, %1448 : vector<16x128xf32>
    %1451 = arith.addf %1443, %1450 : vector<16x128xf32>
    %1452 = vector.extract_strided_slice %10 {offsets = [10, 14, 0], sizes = [1, 1, 128], strides = [1, 1, 1]} : vector<16x16x128xf32> to vector<1x1x128xf32>
    %1453 = vector.shape_cast %1452 : vector<1x1x128xf32> to vector<128xf32>
    %1454 = vector.shape_cast %1453 : vector<128xf32> to vector<1x128xf32>
    %1455 = vector.extract_strided_slice %9 {offsets = [14, 0, 0], sizes = [1, 16, 128], strides = [1, 1, 1]} : vector<16x16x128xf32> to vector<1x16x128xf32>
    %1456 = vector.shape_cast %1455 : vector<1x16x128xf32> to vector<16x128xf32>
    %1457 = vector.broadcast %1454 : vector<1x128xf32> to vector<16x128xf32>
    %1458 = arith.mulf %1457, %1456 : vector<16x128xf32>
    %1459 = arith.addf %1451, %1458 : vector<16x128xf32>
    %1460 = vector.extract_strided_slice %10 {offsets = [10, 15, 0], sizes = [1, 1, 128], strides = [1, 1, 1]} : vector<16x16x128xf32> to vector<1x1x128xf32>
    %1461 = vector.shape_cast %1460 : vector<1x1x128xf32> to vector<128xf32>
    %1462 = vector.shape_cast %1461 : vector<128xf32> to vector<1x128xf32>
    %1463 = vector.extract_strided_slice %9 {offsets = [15, 0, 0], sizes = [1, 16, 128], strides = [1, 1, 1]} : vector<16x16x128xf32> to vector<1x16x128xf32>
    %1464 = vector.shape_cast %1463 : vector<1x16x128xf32> to vector<16x128xf32>
    %1465 = vector.broadcast %1462 : vector<1x128xf32> to vector<16x128xf32>
    %1466 = arith.mulf %1465, %1464 : vector<16x128xf32>
    %1467 = arith.addf %1459, %1466 : vector<16x128xf32>
    %c10 = arith.constant 10 : index
    %c0_59 = arith.constant 0 : index
    %c0_60 = arith.constant 0 : index
    %1468 = vector.load %arg5[%c10, %c0_59, %c0_60] : memref<16x16x128xf32, #tpu.memory_space<vmem>>, vector<1x16x128xf32>
    %1469 = vector.shape_cast %1468 : vector<1x16x128xf32> to vector<16x128xf32>
    %1470 = arith.subf %1467, %1469 : vector<16x128xf32>
    %c10_61 = arith.constant 10 : index
    %c0_62 = arith.constant 0 : index
    %c0_63 = arith.constant 0 : index
    %1471 = vector.load %arg6[%c10_61, %c0_62, %c0_63] : memref<16x16x128xf32, #tpu.memory_space<vmem>>, vector<1x16x128xf32>
    %1472 = vector.shape_cast %1471 : vector<1x16x128xf32> to vector<16x128xf32>
    %1473 = vector.shape_cast %1470 : vector<16x128xf32> to vector<1x16x128xf32>
    tpu.vector_store %arg6[%c10_61, %c0_62, %c0_63], %1473 {strides = array<i32>} : memref<16x16x128xf32, #tpu.memory_space<vmem>>, vector<1x16x128xf32>,
    %1474 = vector.extract_strided_slice %10 {offsets = [11, 0, 0], sizes = [1, 1, 128], strides = [1, 1, 1]} : vector<16x16x128xf32> to vector<1x1x128xf32>
    %1475 = vector.shape_cast %1474 : vector<1x1x128xf32> to vector<128xf32>
    %1476 = vector.shape_cast %1475 : vector<128xf32> to vector<1x128xf32>
    %1477 = vector.extract_strided_slice %9 {offsets = [0, 0, 0], sizes = [1, 16, 128], strides = [1, 1, 1]} : vector<16x16x128xf32> to vector<1x16x128xf32>
    %1478 = vector.shape_cast %1477 : vector<1x16x128xf32> to vector<16x128xf32>
    %1479 = vector.broadcast %1476 : vector<1x128xf32> to vector<16x128xf32>
    %1480 = arith.mulf %1479, %1478 : vector<16x128xf32>
    %1481 = vector.extract_strided_slice %10 {offsets = [11, 1, 0], sizes = [1, 1, 128], strides = [1, 1, 1]} : vector<16x16x128xf32> to vector<1x1x128xf32>
    %1482 = vector.shape_cast %1481 : vector<1x1x128xf32> to vector<128xf32>
    %1483 = vector.shape_cast %1482 : vector<128xf32> to vector<1x128xf32>
    %1484 = vector.extract_strided_slice %9 {offsets = [1, 0, 0], sizes = [1, 16, 128], strides = [1, 1, 1]} : vector<16x16x128xf32> to vector<1x16x128xf32>
    %1485 = vector.shape_cast %1484 : vector<1x16x128xf32> to vector<16x128xf32>
    %1486 = vector.broadcast %1483 : vector<1x128xf32> to vector<16x128xf32>
    %1487 = arith.mulf %1486, %1485 : vector<16x128xf32>
    %1488 = arith.addf %1480, %1487 : vector<16x128xf32>
    %1489 = vector.extract_strided_slice %10 {offsets = [11, 2, 0], sizes = [1, 1, 128], strides = [1, 1, 1]} : vector<16x16x128xf32> to vector<1x1x128xf32>
    %1490 = vector.shape_cast %1489 : vector<1x1x128xf32> to vector<128xf32>
    %1491 = vector.shape_cast %1490 : vector<128xf32> to vector<1x128xf32>
    %1492 = vector.extract_strided_slice %9 {offsets = [2, 0, 0], sizes = [1, 16, 128], strides = [1, 1, 1]} : vector<16x16x128xf32> to vector<1x16x128xf32>
    %1493 = vector.shape_cast %1492 : vector<1x16x128xf32> to vector<16x128xf32>
    %1494 = vector.broadcast %1491 : vector<1x128xf32> to vector<16x128xf32>
    %1495 = arith.mulf %1494, %1493 : vector<16x128xf32>
    %1496 = arith.addf %1488, %1495 : vector<16x128xf32>
    %1497 = vector.extract_strided_slice %10 {offsets = [11, 3, 0], sizes = [1, 1, 128], strides = [1, 1, 1]} : vector<16x16x128xf32> to vector<1x1x128xf32>
    %1498 = vector.shape_cast %1497 : vector<1x1x128xf32> to vector<128xf32>
    %1499 = vector.shape_cast %1498 : vector<128xf32> to vector<1x128xf32>
    %1500 = vector.extract_strided_slice %9 {offsets = [3, 0, 0], sizes = [1, 16, 128], strides = [1, 1, 1]} : vector<16x16x128xf32> to vector<1x16x128xf32>
    %1501 = vector.shape_cast %1500 : vector<1x16x128xf32> to vector<16x128xf32>
    %1502 = vector.broadcast %1499 : vector<1x128xf32> to vector<16x128xf32>
    %1503 = arith.mulf %1502, %1501 : vector<16x128xf32>
    %1504 = arith.addf %1496, %1503 : vector<16x128xf32>
    %1505 = vector.extract_strided_slice %10 {offsets = [11, 4, 0], sizes = [1, 1, 128], strides = [1, 1, 1]} : vector<16x16x128xf32> to vector<1x1x128xf32>
    %1506 = vector.shape_cast %1505 : vector<1x1x128xf32> to vector<128xf32>
    %1507 = vector.shape_cast %1506 : vector<128xf32> to vector<1x128xf32>
    %1508 = vector.extract_strided_slice %9 {offsets = [4, 0, 0], sizes = [1, 16, 128], strides = [1, 1, 1]} : vector<16x16x128xf32> to vector<1x16x128xf32>
    %1509 = vector.shape_cast %1508 : vector<1x16x128xf32> to vector<16x128xf32>
    %1510 = vector.broadcast %1507 : vector<1x128xf32> to vector<16x128xf32>
    %1511 = arith.mulf %1510, %1509 : vector<16x128xf32>
    %1512 = arith.addf %1504, %1511 : vector<16x128xf32>
    %1513 = vector.extract_strided_slice %10 {offsets = [11, 5, 0], sizes = [1, 1, 128], strides = [1, 1, 1]} : vector<16x16x128xf32> to vector<1x1x128xf32>
    %1514 = vector.shape_cast %1513 : vector<1x1x128xf32> to vector<128xf32>
    %1515 = vector.shape_cast %1514 : vector<128xf32> to vector<1x128xf32>
    %1516 = vector.extract_strided_slice %9 {offsets = [5, 0, 0], sizes = [1, 16, 128], strides = [1, 1, 1]} : vector<16x16x128xf32> to vector<1x16x128xf32>
    %1517 = vector.shape_cast %1516 : vector<1x16x128xf32> to vector<16x128xf32>
    %1518 = vector.broadcast %1515 : vector<1x128xf32> to vector<16x128xf32>
    %1519 = arith.mulf %1518, %1517 : vector<16x128xf32>
    %1520 = arith.addf %1512, %1519 : vector<16x128xf32>
    %1521 = vector.extract_strided_slice %10 {offsets = [11, 6, 0], sizes = [1, 1, 128], strides = [1, 1, 1]} : vector<16x16x128xf32> to vector<1x1x128xf32>
    %1522 = vector.shape_cast %1521 : vector<1x1x128xf32> to vector<128xf32>
    %1523 = vector.shape_cast %1522 : vector<128xf32> to vector<1x128xf32>
    %1524 = vector.extract_strided_slice %9 {offsets = [6, 0, 0], sizes = [1, 16, 128], strides = [1, 1, 1]} : vector<16x16x128xf32> to vector<1x16x128xf32>
    %1525 = vector.shape_cast %1524 : vector<1x16x128xf32> to vector<16x128xf32>
    %1526 = vector.broadcast %1523 : vector<1x128xf32> to vector<16x128xf32>
    %1527 = arith.mulf %1526, %1525 : vector<16x128xf32>
    %1528 = arith.addf %1520, %1527 : vector<16x128xf32>
    %1529 = vector.extract_strided_slice %10 {offsets = [11, 7, 0], sizes = [1, 1, 128], strides = [1, 1, 1]} : vector<16x16x128xf32> to vector<1x1x128xf32>
    %1530 = vector.shape_cast %1529 : vector<1x1x128xf32> to vector<128xf32>
    %1531 = vector.shape_cast %1530 : vector<128xf32> to vector<1x128xf32>
    %1532 = vector.extract_strided_slice %9 {offsets = [7, 0, 0], sizes = [1, 16, 128], strides = [1, 1, 1]} : vector<16x16x128xf32> to vector<1x16x128xf32>
    %1533 = vector.shape_cast %1532 : vector<1x16x128xf32> to vector<16x128xf32>
    %1534 = vector.broadcast %1531 : vector<1x128xf32> to vector<16x128xf32>
    %1535 = arith.mulf %1534, %1533 : vector<16x128xf32>
    %1536 = arith.addf %1528, %1535 : vector<16x128xf32>
    %1537 = vector.extract_strided_slice %10 {offsets = [11, 8, 0], sizes = [1, 1, 128], strides = [1, 1, 1]} : vector<16x16x128xf32> to vector<1x1x128xf32>
    %1538 = vector.shape_cast %1537 : vector<1x1x128xf32> to vector<128xf32>
    %1539 = vector.shape_cast %1538 : vector<128xf32> to vector<1x128xf32>
    %1540 = vector.extract_strided_slice %9 {offsets = [8, 0, 0], sizes = [1, 16, 128], strides = [1, 1, 1]} : vector<16x16x128xf32> to vector<1x16x128xf32>
    %1541 = vector.shape_cast %1540 : vector<1x16x128xf32> to vector<16x128xf32>
    %1542 = vector.broadcast %1539 : vector<1x128xf32> to vector<16x128xf32>
    %1543 = arith.mulf %1542, %1541 : vector<16x128xf32>
    %1544 = arith.addf %1536, %1543 : vector<16x128xf32>
    %1545 = vector.extract_strided_slice %10 {offsets = [11, 9, 0], sizes = [1, 1, 128], strides = [1, 1, 1]} : vector<16x16x128xf32> to vector<1x1x128xf32>
    %1546 = vector.shape_cast %1545 : vector<1x1x128xf32> to vector<128xf32>
    %1547 = vector.shape_cast %1546 : vector<128xf32> to vector<1x128xf32>
    %1548 = vector.extract_strided_slice %9 {offsets = [9, 0, 0], sizes = [1, 16, 128], strides = [1, 1, 1]} : vector<16x16x128xf32> to vector<1x16x128xf32>
    %1549 = vector.shape_cast %1548 : vector<1x16x128xf32> to vector<16x128xf32>
    %1550 = vector.broadcast %1547 : vector<1x128xf32> to vector<16x128xf32>
    %1551 = arith.mulf %1550, %1549 : vector<16x128xf32>
    %1552 = arith.addf %1544, %1551 : vector<16x128xf32>
    %1553 = vector.extract_strided_slice %10 {offsets = [11, 10, 0], sizes = [1, 1, 128], strides = [1, 1, 1]} : vector<16x16x128xf32> to vector<1x1x128xf32>
    %1554 = vector.shape_cast %1553 : vector<1x1x128xf32> to vector<128xf32>
    %1555 = vector.shape_cast %1554 : vector<128xf32> to vector<1x128xf32>
    %1556 = vector.extract_strided_slice %9 {offsets = [10, 0, 0], sizes = [1, 16, 128], strides = [1, 1, 1]} : vector<16x16x128xf32> to vector<1x16x128xf32>
    %1557 = vector.shape_cast %1556 : vector<1x16x128xf32> to vector<16x128xf32>
    %1558 = vector.broadcast %1555 : vector<1x128xf32> to vector<16x128xf32>
    %1559 = arith.mulf %1558, %1557 : vector<16x128xf32>
    %1560 = arith.addf %1552, %1559 : vector<16x128xf32>
    %1561 = vector.extract_strided_slice %10 {offsets = [11, 11, 0], sizes = [1, 1, 128], strides = [1, 1, 1]} : vector<16x16x128xf32> to vector<1x1x128xf32>
    %1562 = vector.shape_cast %1561 : vector<1x1x128xf32> to vector<128xf32>
    %1563 = vector.shape_cast %1562 : vector<128xf32> to vector<1x128xf32>
    %1564 = vector.extract_strided_slice %9 {offsets = [11, 0, 0], sizes = [1, 16, 128], strides = [1, 1, 1]} : vector<16x16x128xf32> to vector<1x16x128xf32>
    %1565 = vector.shape_cast %1564 : vector<1x16x128xf32> to vector<16x128xf32>
    %1566 = vector.broadcast %1563 : vector<1x128xf32> to vector<16x128xf32>
    %1567 = arith.mulf %1566, %1565 : vector<16x128xf32>
    %1568 = arith.addf %1560, %1567 : vector<16x128xf32>
    %1569 = vector.extract_strided_slice %10 {offsets = [11, 12, 0], sizes = [1, 1, 128], strides = [1, 1, 1]} : vector<16x16x128xf32> to vector<1x1x128xf32>
    %1570 = vector.shape_cast %1569 : vector<1x1x128xf32> to vector<128xf32>
    %1571 = vector.shape_cast %1570 : vector<128xf32> to vector<1x128xf32>
    %1572 = vector.extract_strided_slice %9 {offsets = [12, 0, 0], sizes = [1, 16, 128], strides = [1, 1, 1]} : vector<16x16x128xf32> to vector<1x16x128xf32>
    %1573 = vector.shape_cast %1572 : vector<1x16x128xf32> to vector<16x128xf32>
    %1574 = vector.broadcast %1571 : vector<1x128xf32> to vector<16x128xf32>
    %1575 = arith.mulf %1574, %1573 : vector<16x128xf32>
    %1576 = arith.addf %1568, %1575 : vector<16x128xf32>
    %1577 = vector.extract_strided_slice %10 {offsets = [11, 13, 0], sizes = [1, 1, 128], strides = [1, 1, 1]} : vector<16x16x128xf32> to vector<1x1x128xf32>
    %1578 = vector.shape_cast %1577 : vector<1x1x128xf32> to vector<128xf32>
    %1579 = vector.shape_cast %1578 : vector<128xf32> to vector<1x128xf32>
    %1580 = vector.extract_strided_slice %9 {offsets = [13, 0, 0], sizes = [1, 16, 128], strides = [1, 1, 1]} : vector<16x16x128xf32> to vector<1x16x128xf32>
    %1581 = vector.shape_cast %1580 : vector<1x16x128xf32> to vector<16x128xf32>
    %1582 = vector.broadcast %1579 : vector<1x128xf32> to vector<16x128xf32>
    %1583 = arith.mulf %1582, %1581 : vector<16x128xf32>
    %1584 = arith.addf %1576, %1583 : vector<16x128xf32>
    %1585 = vector.extract_strided_slice %10 {offsets = [11, 14, 0], sizes = [1, 1, 128], strides = [1, 1, 1]} : vector<16x16x128xf32> to vector<1x1x128xf32>
    %1586 = vector.shape_cast %1585 : vector<1x1x128xf32> to vector<128xf32>
    %1587 = vector.shape_cast %1586 : vector<128xf32> to vector<1x128xf32>
    %1588 = vector.extract_strided_slice %9 {offsets = [14, 0, 0], sizes = [1, 16, 128], strides = [1, 1, 1]} : vector<16x16x128xf32> to vector<1x16x128xf32>
    %1589 = vector.shape_cast %1588 : vector<1x16x128xf32> to vector<16x128xf32>
    %1590 = vector.broadcast %1587 : vector<1x128xf32> to vector<16x128xf32>
    %1591 = arith.mulf %1590, %1589 : vector<16x128xf32>
    %1592 = arith.addf %1584, %1591 : vector<16x128xf32>
    %1593 = vector.extract_strided_slice %10 {offsets = [11, 15, 0], sizes = [1, 1, 128], strides = [1, 1, 1]} : vector<16x16x128xf32> to vector<1x1x128xf32>
    %1594 = vector.shape_cast %1593 : vector<1x1x128xf32> to vector<128xf32>
    %1595 = vector.shape_cast %1594 : vector<128xf32> to vector<1x128xf32>
    %1596 = vector.extract_strided_slice %9 {offsets = [15, 0, 0], sizes = [1, 16, 128], strides = [1, 1, 1]} : vector<16x16x128xf32> to vector<1x16x128xf32>
    %1597 = vector.shape_cast %1596 : vector<1x16x128xf32> to vector<16x128xf32>
    %1598 = vector.broadcast %1595 : vector<1x128xf32> to vector<16x128xf32>
    %1599 = arith.mulf %1598, %1597 : vector<16x128xf32>
    %1600 = arith.addf %1592, %1599 : vector<16x128xf32>
    %c11 = arith.constant 11 : index
    %c0_64 = arith.constant 0 : index
    %c0_65 = arith.constant 0 : index
    %1601 = vector.load %arg5[%c11, %c0_64, %c0_65] : memref<16x16x128xf32, #tpu.memory_space<vmem>>, vector<1x16x128xf32>
    %1602 = vector.shape_cast %1601 : vector<1x16x128xf32> to vector<16x128xf32>
    %1603 = arith.subf %1600, %1602 : vector<16x128xf32>
    %c11_66 = arith.constant 11 : index
    %c0_67 = arith.constant 0 : index
    %c0_68 = arith.constant 0 : index
    %1604 = vector.load %arg6[%c11_66, %c0_67, %c0_68] : memref<16x16x128xf32, #tpu.memory_space<vmem>>, vector<1x16x128xf32>
    %1605 = vector.shape_cast %1604 : vector<1x16x128xf32> to vector<16x128xf32>
    %1606 = vector.shape_cast %1603 : vector<16x128xf32> to vector<1x16x128xf32>
    tpu.vector_store %arg6[%c11_66, %c0_67, %c0_68], %1606 {strides = array<i32>} : memref<16x16x128xf32, #tpu.memory_space<vmem>>, vector<1x16x128xf32>,
    %1607 = vector.extract_strided_slice %10 {offsets = [12, 0, 0], sizes = [1, 1, 128], strides = [1, 1, 1]} : vector<16x16x128xf32> to vector<1x1x128xf32>
    %1608 = vector.shape_cast %1607 : vector<1x1x128xf32> to vector<128xf32>
    %1609 = vector.shape_cast %1608 : vector<128xf32> to vector<1x128xf32>
    %1610 = vector.extract_strided_slice %9 {offsets = [0, 0, 0], sizes = [1, 16, 128], strides = [1, 1, 1]} : vector<16x16x128xf32> to vector<1x16x128xf32>
    %1611 = vector.shape_cast %1610 : vector<1x16x128xf32> to vector<16x128xf32>
    %1612 = vector.broadcast %1609 : vector<1x128xf32> to vector<16x128xf32>
    %1613 = arith.mulf %1612, %1611 : vector<16x128xf32>
    %1614 = vector.extract_strided_slice %10 {offsets = [12, 1, 0], sizes = [1, 1, 128], strides = [1, 1, 1]} : vector<16x16x128xf32> to vector<1x1x128xf32>
    %1615 = vector.shape_cast %1614 : vector<1x1x128xf32> to vector<128xf32>
    %1616 = vector.shape_cast %1615 : vector<128xf32> to vector<1x128xf32>
    %1617 = vector.extract_strided_slice %9 {offsets = [1, 0, 0], sizes = [1, 16, 128], strides = [1, 1, 1]} : vector<16x16x128xf32> to vector<1x16x128xf32>
    %1618 = vector.shape_cast %1617 : vector<1x16x128xf32> to vector<16x128xf32>
    %1619 = vector.broadcast %1616 : vector<1x128xf32> to vector<16x128xf32>
    %1620 = arith.mulf %1619, %1618 : vector<16x128xf32>
    %1621 = arith.addf %1613, %1620 : vector<16x128xf32>
    %1622 = vector.extract_strided_slice %10 {offsets = [12, 2, 0], sizes = [1, 1, 128], strides = [1, 1, 1]} : vector<16x16x128xf32> to vector<1x1x128xf32>
    %1623 = vector.shape_cast %1622 : vector<1x1x128xf32> to vector<128xf32>
    %1624 = vector.shape_cast %1623 : vector<128xf32> to vector<1x128xf32>
    %1625 = vector.extract_strided_slice %9 {offsets = [2, 0, 0], sizes = [1, 16, 128], strides = [1, 1, 1]} : vector<16x16x128xf32> to vector<1x16x128xf32>
    %1626 = vector.shape_cast %1625 : vector<1x16x128xf32> to vector<16x128xf32>
    %1627 = vector.broadcast %1624 : vector<1x128xf32> to vector<16x128xf32>
    %1628 = arith.mulf %1627, %1626 : vector<16x128xf32>
    %1629 = arith.addf %1621, %1628 : vector<16x128xf32>
    %1630 = vector.extract_strided_slice %10 {offsets = [12, 3, 0], sizes = [1, 1, 128], strides = [1, 1, 1]} : vector<16x16x128xf32> to vector<1x1x128xf32>
    %1631 = vector.shape_cast %1630 : vector<1x1x128xf32> to vector<128xf32>
    %1632 = vector.shape_cast %1631 : vector<128xf32> to vector<1x128xf32>
    %1633 = vector.extract_strided_slice %9 {offsets = [3, 0, 0], sizes = [1, 16, 128], strides = [1, 1, 1]} : vector<16x16x128xf32> to vector<1x16x128xf32>
    %1634 = vector.shape_cast %1633 : vector<1x16x128xf32> to vector<16x128xf32>
    %1635 = vector.broadcast %1632 : vector<1x128xf32> to vector<16x128xf32>
    %1636 = arith.mulf %1635, %1634 : vector<16x128xf32>
    %1637 = arith.addf %1629, %1636 : vector<16x128xf32>
    %1638 = vector.extract_strided_slice %10 {offsets = [12, 4, 0], sizes = [1, 1, 128], strides = [1, 1, 1]} : vector<16x16x128xf32> to vector<1x1x128xf32>
    %1639 = vector.shape_cast %1638 : vector<1x1x128xf32> to vector<128xf32>
    %1640 = vector.shape_cast %1639 : vector<128xf32> to vector<1x128xf32>
    %1641 = vector.extract_strided_slice %9 {offsets = [4, 0, 0], sizes = [1, 16, 128], strides = [1, 1, 1]} : vector<16x16x128xf32> to vector<1x16x128xf32>
    %1642 = vector.shape_cast %1641 : vector<1x16x128xf32> to vector<16x128xf32>
    %1643 = vector.broadcast %1640 : vector<1x128xf32> to vector<16x128xf32>
    %1644 = arith.mulf %1643, %1642 : vector<16x128xf32>
    %1645 = arith.addf %1637, %1644 : vector<16x128xf32>
    %1646 = vector.extract_strided_slice %10 {offsets = [12, 5, 0], sizes = [1, 1, 128], strides = [1, 1, 1]} : vector<16x16x128xf32> to vector<1x1x128xf32>
    %1647 = vector.shape_cast %1646 : vector<1x1x128xf32> to vector<128xf32>
    %1648 = vector.shape_cast %1647 : vector<128xf32> to vector<1x128xf32>
    %1649 = vector.extract_strided_slice %9 {offsets = [5, 0, 0], sizes = [1, 16, 128], strides = [1, 1, 1]} : vector<16x16x128xf32> to vector<1x16x128xf32>
    %1650 = vector.shape_cast %1649 : vector<1x16x128xf32> to vector<16x128xf32>
    %1651 = vector.broadcast %1648 : vector<1x128xf32> to vector<16x128xf32>
    %1652 = arith.mulf %1651, %1650 : vector<16x128xf32>
    %1653 = arith.addf %1645, %1652 : vector<16x128xf32>
    %1654 = vector.extract_strided_slice %10 {offsets = [12, 6, 0], sizes = [1, 1, 128], strides = [1, 1, 1]} : vector<16x16x128xf32> to vector<1x1x128xf32>
    %1655 = vector.shape_cast %1654 : vector<1x1x128xf32> to vector<128xf32>
    %1656 = vector.shape_cast %1655 : vector<128xf32> to vector<1x128xf32>
    %1657 = vector.extract_strided_slice %9 {offsets = [6, 0, 0], sizes = [1, 16, 128], strides = [1, 1, 1]} : vector<16x16x128xf32> to vector<1x16x128xf32>
    %1658 = vector.shape_cast %1657 : vector<1x16x128xf32> to vector<16x128xf32>
    %1659 = vector.broadcast %1656 : vector<1x128xf32> to vector<16x128xf32>
    %1660 = arith.mulf %1659, %1658 : vector<16x128xf32>
    %1661 = arith.addf %1653, %1660 : vector<16x128xf32>
    %1662 = vector.extract_strided_slice %10 {offsets = [12, 7, 0], sizes = [1, 1, 128], strides = [1, 1, 1]} : vector<16x16x128xf32> to vector<1x1x128xf32>
    %1663 = vector.shape_cast %1662 : vector<1x1x128xf32> to vector<128xf32>
    %1664 = vector.shape_cast %1663 : vector<128xf32> to vector<1x128xf32>
    %1665 = vector.extract_strided_slice %9 {offsets = [7, 0, 0], sizes = [1, 16, 128], strides = [1, 1, 1]} : vector<16x16x128xf32> to vector<1x16x128xf32>
    %1666 = vector.shape_cast %1665 : vector<1x16x128xf32> to vector<16x128xf32>
    %1667 = vector.broadcast %1664 : vector<1x128xf32> to vector<16x128xf32>
    %1668 = arith.mulf %1667, %1666 : vector<16x128xf32>
    %1669 = arith.addf %1661, %1668 : vector<16x128xf32>
    %1670 = vector.extract_strided_slice %10 {offsets = [12, 8, 0], sizes = [1, 1, 128], strides = [1, 1, 1]} : vector<16x16x128xf32> to vector<1x1x128xf32>
    %1671 = vector.shape_cast %1670 : vector<1x1x128xf32> to vector<128xf32>
    %1672 = vector.shape_cast %1671 : vector<128xf32> to vector<1x128xf32>
    %1673 = vector.extract_strided_slice %9 {offsets = [8, 0, 0], sizes = [1, 16, 128], strides = [1, 1, 1]} : vector<16x16x128xf32> to vector<1x16x128xf32>
    %1674 = vector.shape_cast %1673 : vector<1x16x128xf32> to vector<16x128xf32>
    %1675 = vector.broadcast %1672 : vector<1x128xf32> to vector<16x128xf32>
    %1676 = arith.mulf %1675, %1674 : vector<16x128xf32>
    %1677 = arith.addf %1669, %1676 : vector<16x128xf32>
    %1678 = vector.extract_strided_slice %10 {offsets = [12, 9, 0], sizes = [1, 1, 128], strides = [1, 1, 1]} : vector<16x16x128xf32> to vector<1x1x128xf32>
    %1679 = vector.shape_cast %1678 : vector<1x1x128xf32> to vector<128xf32>
    %1680 = vector.shape_cast %1679 : vector<128xf32> to vector<1x128xf32>
    %1681 = vector.extract_strided_slice %9 {offsets = [9, 0, 0], sizes = [1, 16, 128], strides = [1, 1, 1]} : vector<16x16x128xf32> to vector<1x16x128xf32>
    %1682 = vector.shape_cast %1681 : vector<1x16x128xf32> to vector<16x128xf32>
    %1683 = vector.broadcast %1680 : vector<1x128xf32> to vector<16x128xf32>
    %1684 = arith.mulf %1683, %1682 : vector<16x128xf32>
    %1685 = arith.addf %1677, %1684 : vector<16x128xf32>
    %1686 = vector.extract_strided_slice %10 {offsets = [12, 10, 0], sizes = [1, 1, 128], strides = [1, 1, 1]} : vector<16x16x128xf32> to vector<1x1x128xf32>
    %1687 = vector.shape_cast %1686 : vector<1x1x128xf32> to vector<128xf32>
    %1688 = vector.shape_cast %1687 : vector<128xf32> to vector<1x128xf32>
    %1689 = vector.extract_strided_slice %9 {offsets = [10, 0, 0], sizes = [1, 16, 128], strides = [1, 1, 1]} : vector<16x16x128xf32> to vector<1x16x128xf32>
    %1690 = vector.shape_cast %1689 : vector<1x16x128xf32> to vector<16x128xf32>
    %1691 = vector.broadcast %1688 : vector<1x128xf32> to vector<16x128xf32>
    %1692 = arith.mulf %1691, %1690 : vector<16x128xf32>
    %1693 = arith.addf %1685, %1692 : vector<16x128xf32>
    %1694 = vector.extract_strided_slice %10 {offsets = [12, 11, 0], sizes = [1, 1, 128], strides = [1, 1, 1]} : vector<16x16x128xf32> to vector<1x1x128xf32>
    %1695 = vector.shape_cast %1694 : vector<1x1x128xf32> to vector<128xf32>
    %1696 = vector.shape_cast %1695 : vector<128xf32> to vector<1x128xf32>
    %1697 = vector.extract_strided_slice %9 {offsets = [11, 0, 0], sizes = [1, 16, 128], strides = [1, 1, 1]} : vector<16x16x128xf32> to vector<1x16x128xf32>
    %1698 = vector.shape_cast %1697 : vector<1x16x128xf32> to vector<16x128xf32>
    %1699 = vector.broadcast %1696 : vector<1x128xf32> to vector<16x128xf32>
    %1700 = arith.mulf %1699, %1698 : vector<16x128xf32>
    %1701 = arith.addf %1693, %1700 : vector<16x128xf32>
    %1702 = vector.extract_strided_slice %10 {offsets = [12, 12, 0], sizes = [1, 1, 128], strides = [1, 1, 1]} : vector<16x16x128xf32> to vector<1x1x128xf32>
    %1703 = vector.shape_cast %1702 : vector<1x1x128xf32> to vector<128xf32>
    %1704 = vector.shape_cast %1703 : vector<128xf32> to vector<1x128xf32>
    %1705 = vector.extract_strided_slice %9 {offsets = [12, 0, 0], sizes = [1, 16, 128], strides = [1, 1, 1]} : vector<16x16x128xf32> to vector<1x16x128xf32>
    %1706 = vector.shape_cast %1705 : vector<1x16x128xf32> to vector<16x128xf32>
    %1707 = vector.broadcast %1704 : vector<1x128xf32> to vector<16x128xf32>
    %1708 = arith.mulf %1707, %1706 : vector<16x128xf32>
    %1709 = arith.addf %1701, %1708 : vector<16x128xf32>
    %1710 = vector.extract_strided_slice %10 {offsets = [12, 13, 0], sizes = [1, 1, 128], strides = [1, 1, 1]} : vector<16x16x128xf32> to vector<1x1x128xf32>
    %1711 = vector.shape_cast %1710 : vector<1x1x128xf32> to vector<128xf32>
    %1712 = vector.shape_cast %1711 : vector<128xf32> to vector<1x128xf32>
    %1713 = vector.extract_strided_slice %9 {offsets = [13, 0, 0], sizes = [1, 16, 128], strides = [1, 1, 1]} : vector<16x16x128xf32> to vector<1x16x128xf32>
    %1714 = vector.shape_cast %1713 : vector<1x16x128xf32> to vector<16x128xf32>
    %1715 = vector.broadcast %1712 : vector<1x128xf32> to vector<16x128xf32>
    %1716 = arith.mulf %1715, %1714 : vector<16x128xf32>
    %1717 = arith.addf %1709, %1716 : vector<16x128xf32>
    %1718 = vector.extract_strided_slice %10 {offsets = [12, 14, 0], sizes = [1, 1, 128], strides = [1, 1, 1]} : vector<16x16x128xf32> to vector<1x1x128xf32>
    %1719 = vector.shape_cast %1718 : vector<1x1x128xf32> to vector<128xf32>
    %1720 = vector.shape_cast %1719 : vector<128xf32> to vector<1x128xf32>
    %1721 = vector.extract_strided_slice %9 {offsets = [14, 0, 0], sizes = [1, 16, 128], strides = [1, 1, 1]} : vector<16x16x128xf32> to vector<1x16x128xf32>
    %1722 = vector.shape_cast %1721 : vector<1x16x128xf32> to vector<16x128xf32>
    %1723 = vector.broadcast %1720 : vector<1x128xf32> to vector<16x128xf32>
    %1724 = arith.mulf %1723, %1722 : vector<16x128xf32>
    %1725 = arith.addf %1717, %1724 : vector<16x128xf32>
    %1726 = vector.extract_strided_slice %10 {offsets = [12, 15, 0], sizes = [1, 1, 128], strides = [1, 1, 1]} : vector<16x16x128xf32> to vector<1x1x128xf32>
    %1727 = vector.shape_cast %1726 : vector<1x1x128xf32> to vector<128xf32>
    %1728 = vector.shape_cast %1727 : vector<128xf32> to vector<1x128xf32>
    %1729 = vector.extract_strided_slice %9 {offsets = [15, 0, 0], sizes = [1, 16, 128], strides = [1, 1, 1]} : vector<16x16x128xf32> to vector<1x16x128xf32>
    %1730 = vector.shape_cast %1729 : vector<1x16x128xf32> to vector<16x128xf32>
    %1731 = vector.broadcast %1728 : vector<1x128xf32> to vector<16x128xf32>
    %1732 = arith.mulf %1731, %1730 : vector<16x128xf32>
    %1733 = arith.addf %1725, %1732 : vector<16x128xf32>
    %c12 = arith.constant 12 : index
    %c0_69 = arith.constant 0 : index
    %c0_70 = arith.constant 0 : index
    %1734 = vector.load %arg5[%c12, %c0_69, %c0_70] : memref<16x16x128xf32, #tpu.memory_space<vmem>>, vector<1x16x128xf32>
    %1735 = vector.shape_cast %1734 : vector<1x16x128xf32> to vector<16x128xf32>
    %1736 = arith.subf %1733, %1735 : vector<16x128xf32>
    %c12_71 = arith.constant 12 : index
    %c0_72 = arith.constant 0 : index
    %c0_73 = arith.constant 0 : index
    %1737 = vector.load %arg6[%c12_71, %c0_72, %c0_73] : memref<16x16x128xf32, #tpu.memory_space<vmem>>, vector<1x16x128xf32>
    %1738 = vector.shape_cast %1737 : vector<1x16x128xf32> to vector<16x128xf32>
    %1739 = vector.shape_cast %1736 : vector<16x128xf32> to vector<1x16x128xf32>
    tpu.vector_store %arg6[%c12_71, %c0_72, %c0_73], %1739 {strides = array<i32>} : memref<16x16x128xf32, #tpu.memory_space<vmem>>, vector<1x16x128xf32>,
    %1740 = vector.extract_strided_slice %10 {offsets = [13, 0, 0], sizes = [1, 1, 128], strides = [1, 1, 1]} : vector<16x16x128xf32> to vector<1x1x128xf32>
    %1741 = vector.shape_cast %1740 : vector<1x1x128xf32> to vector<128xf32>
    %1742 = vector.shape_cast %1741 : vector<128xf32> to vector<1x128xf32>
    %1743 = vector.extract_strided_slice %9 {offsets = [0, 0, 0], sizes = [1, 16, 128], strides = [1, 1, 1]} : vector<16x16x128xf32> to vector<1x16x128xf32>
    %1744 = vector.shape_cast %1743 : vector<1x16x128xf32> to vector<16x128xf32>
    %1745 = vector.broadcast %1742 : vector<1x128xf32> to vector<16x128xf32>
    %1746 = arith.mulf %1745, %1744 : vector<16x128xf32>
    %1747 = vector.extract_strided_slice %10 {offsets = [13, 1, 0], sizes = [1, 1, 128], strides = [1, 1, 1]} : vector<16x16x128xf32> to vector<1x1x128xf32>
    %1748 = vector.shape_cast %1747 : vector<1x1x128xf32> to vector<128xf32>
    %1749 = vector.shape_cast %1748 : vector<128xf32> to vector<1x128xf32>
    %1750 = vector.extract_strided_slice %9 {offsets = [1, 0, 0], sizes = [1, 16, 128], strides = [1, 1, 1]} : vector<16x16x128xf32> to vector<1x16x128xf32>
    %1751 = vector.shape_cast %1750 : vector<1x16x128xf32> to vector<16x128xf32>
    %1752 = vector.broadcast %1749 : vector<1x128xf32> to vector<16x128xf32>
    %1753 = arith.mulf %1752, %1751 : vector<16x128xf32>
    %1754 = arith.addf %1746, %1753 : vector<16x128xf32>
    %1755 = vector.extract_strided_slice %10 {offsets = [13, 2, 0], sizes = [1, 1, 128], strides = [1, 1, 1]} : vector<16x16x128xf32> to vector<1x1x128xf32>
    %1756 = vector.shape_cast %1755 : vector<1x1x128xf32> to vector<128xf32>
    %1757 = vector.shape_cast %1756 : vector<128xf32> to vector<1x128xf32>
    %1758 = vector.extract_strided_slice %9 {offsets = [2, 0, 0], sizes = [1, 16, 128], strides = [1, 1, 1]} : vector<16x16x128xf32> to vector<1x16x128xf32>
    %1759 = vector.shape_cast %1758 : vector<1x16x128xf32> to vector<16x128xf32>
    %1760 = vector.broadcast %1757 : vector<1x128xf32> to vector<16x128xf32>
    %1761 = arith.mulf %1760, %1759 : vector<16x128xf32>
    %1762 = arith.addf %1754, %1761 : vector<16x128xf32>
    %1763 = vector.extract_strided_slice %10 {offsets = [13, 3, 0], sizes = [1, 1, 128], strides = [1, 1, 1]} : vector<16x16x128xf32> to vector<1x1x128xf32>
    %1764 = vector.shape_cast %1763 : vector<1x1x128xf32> to vector<128xf32>
    %1765 = vector.shape_cast %1764 : vector<128xf32> to vector<1x128xf32>
    %1766 = vector.extract_strided_slice %9 {offsets = [3, 0, 0], sizes = [1, 16, 128], strides = [1, 1, 1]} : vector<16x16x128xf32> to vector<1x16x128xf32>
    %1767 = vector.shape_cast %1766 : vector<1x16x128xf32> to vector<16x128xf32>
    %1768 = vector.broadcast %1765 : vector<1x128xf32> to vector<16x128xf32>
    %1769 = arith.mulf %1768, %1767 : vector<16x128xf32>
    %1770 = arith.addf %1762, %1769 : vector<16x128xf32>
    %1771 = vector.extract_strided_slice %10 {offsets = [13, 4, 0], sizes = [1, 1, 128], strides = [1, 1, 1]} : vector<16x16x128xf32> to vector<1x1x128xf32>
    %1772 = vector.shape_cast %1771 : vector<1x1x128xf32> to vector<128xf32>
    %1773 = vector.shape_cast %1772 : vector<128xf32> to vector<1x128xf32>
    %1774 = vector.extract_strided_slice %9 {offsets = [4, 0, 0], sizes = [1, 16, 128], strides = [1, 1, 1]} : vector<16x16x128xf32> to vector<1x16x128xf32>
    %1775 = vector.shape_cast %1774 : vector<1x16x128xf32> to vector<16x128xf32>
    %1776 = vector.broadcast %1773 : vector<1x128xf32> to vector<16x128xf32>
    %1777 = arith.mulf %1776, %1775 : vector<16x128xf32>
    %1778 = arith.addf %1770, %1777 : vector<16x128xf32>
    %1779 = vector.extract_strided_slice %10 {offsets = [13, 5, 0], sizes = [1, 1, 128], strides = [1, 1, 1]} : vector<16x16x128xf32> to vector<1x1x128xf32>
    %1780 = vector.shape_cast %1779 : vector<1x1x128xf32> to vector<128xf32>
    %1781 = vector.shape_cast %1780 : vector<128xf32> to vector<1x128xf32>
    %1782 = vector.extract_strided_slice %9 {offsets = [5, 0, 0], sizes = [1, 16, 128], strides = [1, 1, 1]} : vector<16x16x128xf32> to vector<1x16x128xf32>
    %1783 = vector.shape_cast %1782 : vector<1x16x128xf32> to vector<16x128xf32>
    %1784 = vector.broadcast %1781 : vector<1x128xf32> to vector<16x128xf32>
    %1785 = arith.mulf %1784, %1783 : vector<16x128xf32>
    %1786 = arith.addf %1778, %1785 : vector<16x128xf32>
    %1787 = vector.extract_strided_slice %10 {offsets = [13, 6, 0], sizes = [1, 1, 128], strides = [1, 1, 1]} : vector<16x16x128xf32> to vector<1x1x128xf32>
    %1788 = vector.shape_cast %1787 : vector<1x1x128xf32> to vector<128xf32>
    %1789 = vector.shape_cast %1788 : vector<128xf32> to vector<1x128xf32>
    %1790 = vector.extract_strided_slice %9 {offsets = [6, 0, 0], sizes = [1, 16, 128], strides = [1, 1, 1]} : vector<16x16x128xf32> to vector<1x16x128xf32>
    %1791 = vector.shape_cast %1790 : vector<1x16x128xf32> to vector<16x128xf32>
    %1792 = vector.broadcast %1789 : vector<1x128xf32> to vector<16x128xf32>
    %1793 = arith.mulf %1792, %1791 : vector<16x128xf32>
    %1794 = arith.addf %1786, %1793 : vector<16x128xf32>
    %1795 = vector.extract_strided_slice %10 {offsets = [13, 7, 0], sizes = [1, 1, 128], strides = [1, 1, 1]} : vector<16x16x128xf32> to vector<1x1x128xf32>
    %1796 = vector.shape_cast %1795 : vector<1x1x128xf32> to vector<128xf32>
    %1797 = vector.shape_cast %1796 : vector<128xf32> to vector<1x128xf32>
    %1798 = vector.extract_strided_slice %9 {offsets = [7, 0, 0], sizes = [1, 16, 128], strides = [1, 1, 1]} : vector<16x16x128xf32> to vector<1x16x128xf32>
    %1799 = vector.shape_cast %1798 : vector<1x16x128xf32> to vector<16x128xf32>
    %1800 = vector.broadcast %1797 : vector<1x128xf32> to vector<16x128xf32>
    %1801 = arith.mulf %1800, %1799 : vector<16x128xf32>
    %1802 = arith.addf %1794, %1801 : vector<16x128xf32>
    %1803 = vector.extract_strided_slice %10 {offsets = [13, 8, 0], sizes = [1, 1, 128], strides = [1, 1, 1]} : vector<16x16x128xf32> to vector<1x1x128xf32>
    %1804 = vector.shape_cast %1803 : vector<1x1x128xf32> to vector<128xf32>
    %1805 = vector.shape_cast %1804 : vector<128xf32> to vector<1x128xf32>
    %1806 = vector.extract_strided_slice %9 {offsets = [8, 0, 0], sizes = [1, 16, 128], strides = [1, 1, 1]} : vector<16x16x128xf32> to vector<1x16x128xf32>
    %1807 = vector.shape_cast %1806 : vector<1x16x128xf32> to vector<16x128xf32>
    %1808 = vector.broadcast %1805 : vector<1x128xf32> to vector<16x128xf32>
    %1809 = arith.mulf %1808, %1807 : vector<16x128xf32>
    %1810 = arith.addf %1802, %1809 : vector<16x128xf32>
    %1811 = vector.extract_strided_slice %10 {offsets = [13, 9, 0], sizes = [1, 1, 128], strides = [1, 1, 1]} : vector<16x16x128xf32> to vector<1x1x128xf32>
    %1812 = vector.shape_cast %1811 : vector<1x1x128xf32> to vector<128xf32>
    %1813 = vector.shape_cast %1812 : vector<128xf32> to vector<1x128xf32>
    %1814 = vector.extract_strided_slice %9 {offsets = [9, 0, 0], sizes = [1, 16, 128], strides = [1, 1, 1]} : vector<16x16x128xf32> to vector<1x16x128xf32>
    %1815 = vector.shape_cast %1814 : vector<1x16x128xf32> to vector<16x128xf32>
    %1816 = vector.broadcast %1813 : vector<1x128xf32> to vector<16x128xf32>
    %1817 = arith.mulf %1816, %1815 : vector<16x128xf32>
    %1818 = arith.addf %1810, %1817 : vector<16x128xf32>
    %1819 = vector.extract_strided_slice %10 {offsets = [13, 10, 0], sizes = [1, 1, 128], strides = [1, 1, 1]} : vector<16x16x128xf32> to vector<1x1x128xf32>
    %1820 = vector.shape_cast %1819 : vector<1x1x128xf32> to vector<128xf32>
    %1821 = vector.shape_cast %1820 : vector<128xf32> to vector<1x128xf32>
    %1822 = vector.extract_strided_slice %9 {offsets = [10, 0, 0], sizes = [1, 16, 128], strides = [1, 1, 1]} : vector<16x16x128xf32> to vector<1x16x128xf32>
    %1823 = vector.shape_cast %1822 : vector<1x16x128xf32> to vector<16x128xf32>
    %1824 = vector.broadcast %1821 : vector<1x128xf32> to vector<16x128xf32>
    %1825 = arith.mulf %1824, %1823 : vector<16x128xf32>
    %1826 = arith.addf %1818, %1825 : vector<16x128xf32>
    %1827 = vector.extract_strided_slice %10 {offsets = [13, 11, 0], sizes = [1, 1, 128], strides = [1, 1, 1]} : vector<16x16x128xf32> to vector<1x1x128xf32>
    %1828 = vector.shape_cast %1827 : vector<1x1x128xf32> to vector<128xf32>
    %1829 = vector.shape_cast %1828 : vector<128xf32> to vector<1x128xf32>
    %1830 = vector.extract_strided_slice %9 {offsets = [11, 0, 0], sizes = [1, 16, 128], strides = [1, 1, 1]} : vector<16x16x128xf32> to vector<1x16x128xf32>
    %1831 = vector.shape_cast %1830 : vector<1x16x128xf32> to vector<16x128xf32>
    %1832 = vector.broadcast %1829 : vector<1x128xf32> to vector<16x128xf32>
    %1833 = arith.mulf %1832, %1831 : vector<16x128xf32>
    %1834 = arith.addf %1826, %1833 : vector<16x128xf32>
    %1835 = vector.extract_strided_slice %10 {offsets = [13, 12, 0], sizes = [1, 1, 128], strides = [1, 1, 1]} : vector<16x16x128xf32> to vector<1x1x128xf32>
    %1836 = vector.shape_cast %1835 : vector<1x1x128xf32> to vector<128xf32>
    %1837 = vector.shape_cast %1836 : vector<128xf32> to vector<1x128xf32>
    %1838 = vector.extract_strided_slice %9 {offsets = [12, 0, 0], sizes = [1, 16, 128], strides = [1, 1, 1]} : vector<16x16x128xf32> to vector<1x16x128xf32>
    %1839 = vector.shape_cast %1838 : vector<1x16x128xf32> to vector<16x128xf32>
    %1840 = vector.broadcast %1837 : vector<1x128xf32> to vector<16x128xf32>
    %1841 = arith.mulf %1840, %1839 : vector<16x128xf32>
    %1842 = arith.addf %1834, %1841 : vector<16x128xf32>
    %1843 = vector.extract_strided_slice %10 {offsets = [13, 13, 0], sizes = [1, 1, 128], strides = [1, 1, 1]} : vector<16x16x128xf32> to vector<1x1x128xf32>
    %1844 = vector.shape_cast %1843 : vector<1x1x128xf32> to vector<128xf32>
    %1845 = vector.shape_cast %1844 : vector<128xf32> to vector<1x128xf32>
    %1846 = vector.extract_strided_slice %9 {offsets = [13, 0, 0], sizes = [1, 16, 128], strides = [1, 1, 1]} : vector<16x16x128xf32> to vector<1x16x128xf32>
    %1847 = vector.shape_cast %1846 : vector<1x16x128xf32> to vector<16x128xf32>
    %1848 = vector.broadcast %1845 : vector<1x128xf32> to vector<16x128xf32>
    %1849 = arith.mulf %1848, %1847 : vector<16x128xf32>
    %1850 = arith.addf %1842, %1849 : vector<16x128xf32>
    %1851 = vector.extract_strided_slice %10 {offsets = [13, 14, 0], sizes = [1, 1, 128], strides = [1, 1, 1]} : vector<16x16x128xf32> to vector<1x1x128xf32>
    %1852 = vector.shape_cast %1851 : vector<1x1x128xf32> to vector<128xf32>
    %1853 = vector.shape_cast %1852 : vector<128xf32> to vector<1x128xf32>
    %1854 = vector.extract_strided_slice %9 {offsets = [14, 0, 0], sizes = [1, 16, 128], strides = [1, 1, 1]} : vector<16x16x128xf32> to vector<1x16x128xf32>
    %1855 = vector.shape_cast %1854 : vector<1x16x128xf32> to vector<16x128xf32>
    %1856 = vector.broadcast %1853 : vector<1x128xf32> to vector<16x128xf32>
    %1857 = arith.mulf %1856, %1855 : vector<16x128xf32>
    %1858 = arith.addf %1850, %1857 : vector<16x128xf32>
    %1859 = vector.extract_strided_slice %10 {offsets = [13, 15, 0], sizes = [1, 1, 128], strides = [1, 1, 1]} : vector<16x16x128xf32> to vector<1x1x128xf32>
    %1860 = vector.shape_cast %1859 : vector<1x1x128xf32> to vector<128xf32>
    %1861 = vector.shape_cast %1860 : vector<128xf32> to vector<1x128xf32>
    %1862 = vector.extract_strided_slice %9 {offsets = [15, 0, 0], sizes = [1, 16, 128], strides = [1, 1, 1]} : vector<16x16x128xf32> to vector<1x16x128xf32>
    %1863 = vector.shape_cast %1862 : vector<1x16x128xf32> to vector<16x128xf32>
    %1864 = vector.broadcast %1861 : vector<1x128xf32> to vector<16x128xf32>
    %1865 = arith.mulf %1864, %1863 : vector<16x128xf32>
    %1866 = arith.addf %1858, %1865 : vector<16x128xf32>
    %c13 = arith.constant 13 : index
    %c0_74 = arith.constant 0 : index
    %c0_75 = arith.constant 0 : index
    %1867 = vector.load %arg5[%c13, %c0_74, %c0_75] : memref<16x16x128xf32, #tpu.memory_space<vmem>>, vector<1x16x128xf32>
    %1868 = vector.shape_cast %1867 : vector<1x16x128xf32> to vector<16x128xf32>
    %1869 = arith.subf %1866, %1868 : vector<16x128xf32>
    %c13_76 = arith.constant 13 : index
    %c0_77 = arith.constant 0 : index
    %c0_78 = arith.constant 0 : index
    %1870 = vector.load %arg6[%c13_76, %c0_77, %c0_78] : memref<16x16x128xf32, #tpu.memory_space<vmem>>, vector<1x16x128xf32>
    %1871 = vector.shape_cast %1870 : vector<1x16x128xf32> to vector<16x128xf32>
    %1872 = vector.shape_cast %1869 : vector<16x128xf32> to vector<1x16x128xf32>
    tpu.vector_store %arg6[%c13_76, %c0_77, %c0_78], %1872 {strides = array<i32>} : memref<16x16x128xf32, #tpu.memory_space<vmem>>, vector<1x16x128xf32>,
    %1873 = vector.extract_strided_slice %10 {offsets = [14, 0, 0], sizes = [1, 1, 128], strides = [1, 1, 1]} : vector<16x16x128xf32> to vector<1x1x128xf32>
    %1874 = vector.shape_cast %1873 : vector<1x1x128xf32> to vector<128xf32>
    %1875 = vector.shape_cast %1874 : vector<128xf32> to vector<1x128xf32>
    %1876 = vector.extract_strided_slice %9 {offsets = [0, 0, 0], sizes = [1, 16, 128], strides = [1, 1, 1]} : vector<16x16x128xf32> to vector<1x16x128xf32>
    %1877 = vector.shape_cast %1876 : vector<1x16x128xf32> to vector<16x128xf32>
    %1878 = vector.broadcast %1875 : vector<1x128xf32> to vector<16x128xf32>
    %1879 = arith.mulf %1878, %1877 : vector<16x128xf32>
    %1880 = vector.extract_strided_slice %10 {offsets = [14, 1, 0], sizes = [1, 1, 128], strides = [1, 1, 1]} : vector<16x16x128xf32> to vector<1x1x128xf32>
    %1881 = vector.shape_cast %1880 : vector<1x1x128xf32> to vector<128xf32>
    %1882 = vector.shape_cast %1881 : vector<128xf32> to vector<1x128xf32>
    %1883 = vector.extract_strided_slice %9 {offsets = [1, 0, 0], sizes = [1, 16, 128], strides = [1, 1, 1]} : vector<16x16x128xf32> to vector<1x16x128xf32>
    %1884 = vector.shape_cast %1883 : vector<1x16x128xf32> to vector<16x128xf32>
    %1885 = vector.broadcast %1882 : vector<1x128xf32> to vector<16x128xf32>
    %1886 = arith.mulf %1885, %1884 : vector<16x128xf32>
    %1887 = arith.addf %1879, %1886 : vector<16x128xf32>
    %1888 = vector.extract_strided_slice %10 {offsets = [14, 2, 0], sizes = [1, 1, 128], strides = [1, 1, 1]} : vector<16x16x128xf32> to vector<1x1x128xf32>
    %1889 = vector.shape_cast %1888 : vector<1x1x128xf32> to vector<128xf32>
    %1890 = vector.shape_cast %1889 : vector<128xf32> to vector<1x128xf32>
    %1891 = vector.extract_strided_slice %9 {offsets = [2, 0, 0], sizes = [1, 16, 128], strides = [1, 1, 1]} : vector<16x16x128xf32> to vector<1x16x128xf32>
    %1892 = vector.shape_cast %1891 : vector<1x16x128xf32> to vector<16x128xf32>
    %1893 = vector.broadcast %1890 : vector<1x128xf32> to vector<16x128xf32>
    %1894 = arith.mulf %1893, %1892 : vector<16x128xf32>
    %1895 = arith.addf %1887, %1894 : vector<16x128xf32>
    %1896 = vector.extract_strided_slice %10 {offsets = [14, 3, 0], sizes = [1, 1, 128], strides = [1, 1, 1]} : vector<16x16x128xf32> to vector<1x1x128xf32>
    %1897 = vector.shape_cast %1896 : vector<1x1x128xf32> to vector<128xf32>
    %1898 = vector.shape_cast %1897 : vector<128xf32> to vector<1x128xf32>
    %1899 = vector.extract_strided_slice %9 {offsets = [3, 0, 0], sizes = [1, 16, 128], strides = [1, 1, 1]} : vector<16x16x128xf32> to vector<1x16x128xf32>
    %1900 = vector.shape_cast %1899 : vector<1x16x128xf32> to vector<16x128xf32>
    %1901 = vector.broadcast %1898 : vector<1x128xf32> to vector<16x128xf32>
    %1902 = arith.mulf %1901, %1900 : vector<16x128xf32>
    %1903 = arith.addf %1895, %1902 : vector<16x128xf32>
    %1904 = vector.extract_strided_slice %10 {offsets = [14, 4, 0], sizes = [1, 1, 128], strides = [1, 1, 1]} : vector<16x16x128xf32> to vector<1x1x128xf32>
    %1905 = vector.shape_cast %1904 : vector<1x1x128xf32> to vector<128xf32>
    %1906 = vector.shape_cast %1905 : vector<128xf32> to vector<1x128xf32>
    %1907 = vector.extract_strided_slice %9 {offsets = [4, 0, 0], sizes = [1, 16, 128], strides = [1, 1, 1]} : vector<16x16x128xf32> to vector<1x16x128xf32>
    %1908 = vector.shape_cast %1907 : vector<1x16x128xf32> to vector<16x128xf32>
    %1909 = vector.broadcast %1906 : vector<1x128xf32> to vector<16x128xf32>
    %1910 = arith.mulf %1909, %1908 : vector<16x128xf32>
    %1911 = arith.addf %1903, %1910 : vector<16x128xf32>
    %1912 = vector.extract_strided_slice %10 {offsets = [14, 5, 0], sizes = [1, 1, 128], strides = [1, 1, 1]} : vector<16x16x128xf32> to vector<1x1x128xf32>
    %1913 = vector.shape_cast %1912 : vector<1x1x128xf32> to vector<128xf32>
    %1914 = vector.shape_cast %1913 : vector<128xf32> to vector<1x128xf32>
    %1915 = vector.extract_strided_slice %9 {offsets = [5, 0, 0], sizes = [1, 16, 128], strides = [1, 1, 1]} : vector<16x16x128xf32> to vector<1x16x128xf32>
    %1916 = vector.shape_cast %1915 : vector<1x16x128xf32> to vector<16x128xf32>
    %1917 = vector.broadcast %1914 : vector<1x128xf32> to vector<16x128xf32>
    %1918 = arith.mulf %1917, %1916 : vector<16x128xf32>
    %1919 = arith.addf %1911, %1918 : vector<16x128xf32>
    %1920 = vector.extract_strided_slice %10 {offsets = [14, 6, 0], sizes = [1, 1, 128], strides = [1, 1, 1]} : vector<16x16x128xf32> to vector<1x1x128xf32>
    %1921 = vector.shape_cast %1920 : vector<1x1x128xf32> to vector<128xf32>
    %1922 = vector.shape_cast %1921 : vector<128xf32> to vector<1x128xf32>
    %1923 = vector.extract_strided_slice %9 {offsets = [6, 0, 0], sizes = [1, 16, 128], strides = [1, 1, 1]} : vector<16x16x128xf32> to vector<1x16x128xf32>
    %1924 = vector.shape_cast %1923 : vector<1x16x128xf32> to vector<16x128xf32>
    %1925 = vector.broadcast %1922 : vector<1x128xf32> to vector<16x128xf32>
    %1926 = arith.mulf %1925, %1924 : vector<16x128xf32>
    %1927 = arith.addf %1919, %1926 : vector<16x128xf32>
    %1928 = vector.extract_strided_slice %10 {offsets = [14, 7, 0], sizes = [1, 1, 128], strides = [1, 1, 1]} : vector<16x16x128xf32> to vector<1x1x128xf32>
    %1929 = vector.shape_cast %1928 : vector<1x1x128xf32> to vector<128xf32>
    %1930 = vector.shape_cast %1929 : vector<128xf32> to vector<1x128xf32>
    %1931 = vector.extract_strided_slice %9 {offsets = [7, 0, 0], sizes = [1, 16, 128], strides = [1, 1, 1]} : vector<16x16x128xf32> to vector<1x16x128xf32>
    %1932 = vector.shape_cast %1931 : vector<1x16x128xf32> to vector<16x128xf32>
    %1933 = vector.broadcast %1930 : vector<1x128xf32> to vector<16x128xf32>
    %1934 = arith.mulf %1933, %1932 : vector<16x128xf32>
    %1935 = arith.addf %1927, %1934 : vector<16x128xf32>
    %1936 = vector.extract_strided_slice %10 {offsets = [14, 8, 0], sizes = [1, 1, 128], strides = [1, 1, 1]} : vector<16x16x128xf32> to vector<1x1x128xf32>
    %1937 = vector.shape_cast %1936 : vector<1x1x128xf32> to vector<128xf32>
    %1938 = vector.shape_cast %1937 : vector<128xf32> to vector<1x128xf32>
    %1939 = vector.extract_strided_slice %9 {offsets = [8, 0, 0], sizes = [1, 16, 128], strides = [1, 1, 1]} : vector<16x16x128xf32> to vector<1x16x128xf32>
    %1940 = vector.shape_cast %1939 : vector<1x16x128xf32> to vector<16x128xf32>
    %1941 = vector.broadcast %1938 : vector<1x128xf32> to vector<16x128xf32>
    %1942 = arith.mulf %1941, %1940 : vector<16x128xf32>
    %1943 = arith.addf %1935, %1942 : vector<16x128xf32>
    %1944 = vector.extract_strided_slice %10 {offsets = [14, 9, 0], sizes = [1, 1, 128], strides = [1, 1, 1]} : vector<16x16x128xf32> to vector<1x1x128xf32>
    %1945 = vector.shape_cast %1944 : vector<1x1x128xf32> to vector<128xf32>
    %1946 = vector.shape_cast %1945 : vector<128xf32> to vector<1x128xf32>
    %1947 = vector.extract_strided_slice %9 {offsets = [9, 0, 0], sizes = [1, 16, 128], strides = [1, 1, 1]} : vector<16x16x128xf32> to vector<1x16x128xf32>
    %1948 = vector.shape_cast %1947 : vector<1x16x128xf32> to vector<16x128xf32>
    %1949 = vector.broadcast %1946 : vector<1x128xf32> to vector<16x128xf32>
    %1950 = arith.mulf %1949, %1948 : vector<16x128xf32>
    %1951 = arith.addf %1943, %1950 : vector<16x128xf32>
    %1952 = vector.extract_strided_slice %10 {offsets = [14, 10, 0], sizes = [1, 1, 128], strides = [1, 1, 1]} : vector<16x16x128xf32> to vector<1x1x128xf32>
    %1953 = vector.shape_cast %1952 : vector<1x1x128xf32> to vector<128xf32>
    %1954 = vector.shape_cast %1953 : vector<128xf32> to vector<1x128xf32>
    %1955 = vector.extract_strided_slice %9 {offsets = [10, 0, 0], sizes = [1, 16, 128], strides = [1, 1, 1]} : vector<16x16x128xf32> to vector<1x16x128xf32>
    %1956 = vector.shape_cast %1955 : vector<1x16x128xf32> to vector<16x128xf32>
    %1957 = vector.broadcast %1954 : vector<1x128xf32> to vector<16x128xf32>
    %1958 = arith.mulf %1957, %1956 : vector<16x128xf32>
    %1959 = arith.addf %1951, %1958 : vector<16x128xf32>
    %1960 = vector.extract_strided_slice %10 {offsets = [14, 11, 0], sizes = [1, 1, 128], strides = [1, 1, 1]} : vector<16x16x128xf32> to vector<1x1x128xf32>
    %1961 = vector.shape_cast %1960 : vector<1x1x128xf32> to vector<128xf32>
    %1962 = vector.shape_cast %1961 : vector<128xf32> to vector<1x128xf32>
    %1963 = vector.extract_strided_slice %9 {offsets = [11, 0, 0], sizes = [1, 16, 128], strides = [1, 1, 1]} : vector<16x16x128xf32> to vector<1x16x128xf32>
    %1964 = vector.shape_cast %1963 : vector<1x16x128xf32> to vector<16x128xf32>
    %1965 = vector.broadcast %1962 : vector<1x128xf32> to vector<16x128xf32>
    %1966 = arith.mulf %1965, %1964 : vector<16x128xf32>
    %1967 = arith.addf %1959, %1966 : vector<16x128xf32>
    %1968 = vector.extract_strided_slice %10 {offsets = [14, 12, 0], sizes = [1, 1, 128], strides = [1, 1, 1]} : vector<16x16x128xf32> to vector<1x1x128xf32>
    %1969 = vector.shape_cast %1968 : vector<1x1x128xf32> to vector<128xf32>
    %1970 = vector.shape_cast %1969 : vector<128xf32> to vector<1x128xf32>
    %1971 = vector.extract_strided_slice %9 {offsets = [12, 0, 0], sizes = [1, 16, 128], strides = [1, 1, 1]} : vector<16x16x128xf32> to vector<1x16x128xf32>
    %1972 = vector.shape_cast %1971 : vector<1x16x128xf32> to vector<16x128xf32>
    %1973 = vector.broadcast %1970 : vector<1x128xf32> to vector<16x128xf32>
    %1974 = arith.mulf %1973, %1972 : vector<16x128xf32>
    %1975 = arith.addf %1967, %1974 : vector<16x128xf32>
    %1976 = vector.extract_strided_slice %10 {offsets = [14, 13, 0], sizes = [1, 1, 128], strides = [1, 1, 1]} : vector<16x16x128xf32> to vector<1x1x128xf32>
    %1977 = vector.shape_cast %1976 : vector<1x1x128xf32> to vector<128xf32>
    %1978 = vector.shape_cast %1977 : vector<128xf32> to vector<1x128xf32>
    %1979 = vector.extract_strided_slice %9 {offsets = [13, 0, 0], sizes = [1, 16, 128], strides = [1, 1, 1]} : vector<16x16x128xf32> to vector<1x16x128xf32>
    %1980 = vector.shape_cast %1979 : vector<1x16x128xf32> to vector<16x128xf32>
    %1981 = vector.broadcast %1978 : vector<1x128xf32> to vector<16x128xf32>
    %1982 = arith.mulf %1981, %1980 : vector<16x128xf32>
    %1983 = arith.addf %1975, %1982 : vector<16x128xf32>
    %1984 = vector.extract_strided_slice %10 {offsets = [14, 14, 0], sizes = [1, 1, 128], strides = [1, 1, 1]} : vector<16x16x128xf32> to vector<1x1x128xf32>
    %1985 = vector.shape_cast %1984 : vector<1x1x128xf32> to vector<128xf32>
    %1986 = vector.shape_cast %1985 : vector<128xf32> to vector<1x128xf32>
    %1987 = vector.extract_strided_slice %9 {offsets = [14, 0, 0], sizes = [1, 16, 128], strides = [1, 1, 1]} : vector<16x16x128xf32> to vector<1x16x128xf32>
    %1988 = vector.shape_cast %1987 : vector<1x16x128xf32> to vector<16x128xf32>
    %1989 = vector.broadcast %1986 : vector<1x128xf32> to vector<16x128xf32>
    %1990 = arith.mulf %1989, %1988 : vector<16x128xf32>
    %1991 = arith.addf %1983, %1990 : vector<16x128xf32>
    %1992 = vector.extract_strided_slice %10 {offsets = [14, 15, 0], sizes = [1, 1, 128], strides = [1, 1, 1]} : vector<16x16x128xf32> to vector<1x1x128xf32>
    %1993 = vector.shape_cast %1992 : vector<1x1x128xf32> to vector<128xf32>
    %1994 = vector.shape_cast %1993 : vector<128xf32> to vector<1x128xf32>
    %1995 = vector.extract_strided_slice %9 {offsets = [15, 0, 0], sizes = [1, 16, 128], strides = [1, 1, 1]} : vector<16x16x128xf32> to vector<1x16x128xf32>
    %1996 = vector.shape_cast %1995 : vector<1x16x128xf32> to vector<16x128xf32>
    %1997 = vector.broadcast %1994 : vector<1x128xf32> to vector<16x128xf32>
    %1998 = arith.mulf %1997, %1996 : vector<16x128xf32>
    %1999 = arith.addf %1991, %1998 : vector<16x128xf32>
    %c14 = arith.constant 14 : index
    %c0_79 = arith.constant 0 : index
    %c0_80 = arith.constant 0 : index
    %2000 = vector.load %arg5[%c14, %c0_79, %c0_80] : memref<16x16x128xf32, #tpu.memory_space<vmem>>, vector<1x16x128xf32>
    %2001 = vector.shape_cast %2000 : vector<1x16x128xf32> to vector<16x128xf32>
    %2002 = arith.subf %1999, %2001 : vector<16x128xf32>
    %c14_81 = arith.constant 14 : index
    %c0_82 = arith.constant 0 : index
    %c0_83 = arith.constant 0 : index
    %2003 = vector.load %arg6[%c14_81, %c0_82, %c0_83] : memref<16x16x128xf32, #tpu.memory_space<vmem>>, vector<1x16x128xf32>
    %2004 = vector.shape_cast %2003 : vector<1x16x128xf32> to vector<16x128xf32>
    %2005 = vector.shape_cast %2002 : vector<16x128xf32> to vector<1x16x128xf32>
    tpu.vector_store %arg6[%c14_81, %c0_82, %c0_83], %2005 {strides = array<i32>} : memref<16x16x128xf32, #tpu.memory_space<vmem>>, vector<1x16x128xf32>,
    %2006 = vector.extract_strided_slice %10 {offsets = [15, 0, 0], sizes = [1, 1, 128], strides = [1, 1, 1]} : vector<16x16x128xf32> to vector<1x1x128xf32>
    %2007 = vector.shape_cast %2006 : vector<1x1x128xf32> to vector<128xf32>
    %2008 = vector.shape_cast %2007 : vector<128xf32> to vector<1x128xf32>
    %2009 = vector.extract_strided_slice %9 {offsets = [0, 0, 0], sizes = [1, 16, 128], strides = [1, 1, 1]} : vector<16x16x128xf32> to vector<1x16x128xf32>
    %2010 = vector.shape_cast %2009 : vector<1x16x128xf32> to vector<16x128xf32>
    %2011 = vector.broadcast %2008 : vector<1x128xf32> to vector<16x128xf32>
    %2012 = arith.mulf %2011, %2010 : vector<16x128xf32>
    %2013 = vector.extract_strided_slice %10 {offsets = [15, 1, 0], sizes = [1, 1, 128], strides = [1, 1, 1]} : vector<16x16x128xf32> to vector<1x1x128xf32>
    %2014 = vector.shape_cast %2013 : vector<1x1x128xf32> to vector<128xf32>
    %2015 = vector.shape_cast %2014 : vector<128xf32> to vector<1x128xf32>
    %2016 = vector.extract_strided_slice %9 {offsets = [1, 0, 0], sizes = [1, 16, 128], strides = [1, 1, 1]} : vector<16x16x128xf32> to vector<1x16x128xf32>
    %2017 = vector.shape_cast %2016 : vector<1x16x128xf32> to vector<16x128xf32>
    %2018 = vector.broadcast %2015 : vector<1x128xf32> to vector<16x128xf32>
    %2019 = arith.mulf %2018, %2017 : vector<16x128xf32>
    %2020 = arith.addf %2012, %2019 : vector<16x128xf32>
    %2021 = vector.extract_strided_slice %10 {offsets = [15, 2, 0], sizes = [1, 1, 128], strides = [1, 1, 1]} : vector<16x16x128xf32> to vector<1x1x128xf32>
    %2022 = vector.shape_cast %2021 : vector<1x1x128xf32> to vector<128xf32>
    %2023 = vector.shape_cast %2022 : vector<128xf32> to vector<1x128xf32>
    %2024 = vector.extract_strided_slice %9 {offsets = [2, 0, 0], sizes = [1, 16, 128], strides = [1, 1, 1]} : vector<16x16x128xf32> to vector<1x16x128xf32>
    %2025 = vector.shape_cast %2024 : vector<1x16x128xf32> to vector<16x128xf32>
    %2026 = vector.broadcast %2023 : vector<1x128xf32> to vector<16x128xf32>
    %2027 = arith.mulf %2026, %2025 : vector<16x128xf32>
    %2028 = arith.addf %2020, %2027 : vector<16x128xf32>
    %2029 = vector.extract_strided_slice %10 {offsets = [15, 3, 0], sizes = [1, 1, 128], strides = [1, 1, 1]} : vector<16x16x128xf32> to vector<1x1x128xf32>
    %2030 = vector.shape_cast %2029 : vector<1x1x128xf32> to vector<128xf32>
    %2031 = vector.shape_cast %2030 : vector<128xf32> to vector<1x128xf32>
    %2032 = vector.extract_strided_slice %9 {offsets = [3, 0, 0], sizes = [1, 16, 128], strides = [1, 1, 1]} : vector<16x16x128xf32> to vector<1x16x128xf32>
    %2033 = vector.shape_cast %2032 : vector<1x16x128xf32> to vector<16x128xf32>
    %2034 = vector.broadcast %2031 : vector<1x128xf32> to vector<16x128xf32>
    %2035 = arith.mulf %2034, %2033 : vector<16x128xf32>
    %2036 = arith.addf %2028, %2035 : vector<16x128xf32>
    %2037 = vector.extract_strided_slice %10 {offsets = [15, 4, 0], sizes = [1, 1, 128], strides = [1, 1, 1]} : vector<16x16x128xf32> to vector<1x1x128xf32>
    %2038 = vector.shape_cast %2037 : vector<1x1x128xf32> to vector<128xf32>
    %2039 = vector.shape_cast %2038 : vector<128xf32> to vector<1x128xf32>
    %2040 = vector.extract_strided_slice %9 {offsets = [4, 0, 0], sizes = [1, 16, 128], strides = [1, 1, 1]} : vector<16x16x128xf32> to vector<1x16x128xf32>
    %2041 = vector.shape_cast %2040 : vector<1x16x128xf32> to vector<16x128xf32>
    %2042 = vector.broadcast %2039 : vector<1x128xf32> to vector<16x128xf32>
    %2043 = arith.mulf %2042, %2041 : vector<16x128xf32>
    %2044 = arith.addf %2036, %2043 : vector<16x128xf32>
    %2045 = vector.extract_strided_slice %10 {offsets = [15, 5, 0], sizes = [1, 1, 128], strides = [1, 1, 1]} : vector<16x16x128xf32> to vector<1x1x128xf32>
    %2046 = vector.shape_cast %2045 : vector<1x1x128xf32> to vector<128xf32>
    %2047 = vector.shape_cast %2046 : vector<128xf32> to vector<1x128xf32>
    %2048 = vector.extract_strided_slice %9 {offsets = [5, 0, 0], sizes = [1, 16, 128], strides = [1, 1, 1]} : vector<16x16x128xf32> to vector<1x16x128xf32>
    %2049 = vector.shape_cast %2048 : vector<1x16x128xf32> to vector<16x128xf32>
    %2050 = vector.broadcast %2047 : vector<1x128xf32> to vector<16x128xf32>
    %2051 = arith.mulf %2050, %2049 : vector<16x128xf32>
    %2052 = arith.addf %2044, %2051 : vector<16x128xf32>
    %2053 = vector.extract_strided_slice %10 {offsets = [15, 6, 0], sizes = [1, 1, 128], strides = [1, 1, 1]} : vector<16x16x128xf32> to vector<1x1x128xf32>
    %2054 = vector.shape_cast %2053 : vector<1x1x128xf32> to vector<128xf32>
    %2055 = vector.shape_cast %2054 : vector<128xf32> to vector<1x128xf32>
    %2056 = vector.extract_strided_slice %9 {offsets = [6, 0, 0], sizes = [1, 16, 128], strides = [1, 1, 1]} : vector<16x16x128xf32> to vector<1x16x128xf32>
    %2057 = vector.shape_cast %2056 : vector<1x16x128xf32> to vector<16x128xf32>
    %2058 = vector.broadcast %2055 : vector<1x128xf32> to vector<16x128xf32>
    %2059 = arith.mulf %2058, %2057 : vector<16x128xf32>
    %2060 = arith.addf %2052, %2059 : vector<16x128xf32>
    %2061 = vector.extract_strided_slice %10 {offsets = [15, 7, 0], sizes = [1, 1, 128], strides = [1, 1, 1]} : vector<16x16x128xf32> to vector<1x1x128xf32>
    %2062 = vector.shape_cast %2061 : vector<1x1x128xf32> to vector<128xf32>
    %2063 = vector.shape_cast %2062 : vector<128xf32> to vector<1x128xf32>
    %2064 = vector.extract_strided_slice %9 {offsets = [7, 0, 0], sizes = [1, 16, 128], strides = [1, 1, 1]} : vector<16x16x128xf32> to vector<1x16x128xf32>
    %2065 = vector.shape_cast %2064 : vector<1x16x128xf32> to vector<16x128xf32>
    %2066 = vector.broadcast %2063 : vector<1x128xf32> to vector<16x128xf32>
    %2067 = arith.mulf %2066, %2065 : vector<16x128xf32>
    %2068 = arith.addf %2060, %2067 : vector<16x128xf32>
    %2069 = vector.extract_strided_slice %10 {offsets = [15, 8, 0], sizes = [1, 1, 128], strides = [1, 1, 1]} : vector<16x16x128xf32> to vector<1x1x128xf32>
    %2070 = vector.shape_cast %2069 : vector<1x1x128xf32> to vector<128xf32>
    %2071 = vector.shape_cast %2070 : vector<128xf32> to vector<1x128xf32>
    %2072 = vector.extract_strided_slice %9 {offsets = [8, 0, 0], sizes = [1, 16, 128], strides = [1, 1, 1]} : vector<16x16x128xf32> to vector<1x16x128xf32>
    %2073 = vector.shape_cast %2072 : vector<1x16x128xf32> to vector<16x128xf32>
    %2074 = vector.broadcast %2071 : vector<1x128xf32> to vector<16x128xf32>
    %2075 = arith.mulf %2074, %2073 : vector<16x128xf32>
    %2076 = arith.addf %2068, %2075 : vector<16x128xf32>
    %2077 = vector.extract_strided_slice %10 {offsets = [15, 9, 0], sizes = [1, 1, 128], strides = [1, 1, 1]} : vector<16x16x128xf32> to vector<1x1x128xf32>
    %2078 = vector.shape_cast %2077 : vector<1x1x128xf32> to vector<128xf32>
    %2079 = vector.shape_cast %2078 : vector<128xf32> to vector<1x128xf32>
    %2080 = vector.extract_strided_slice %9 {offsets = [9, 0, 0], sizes = [1, 16, 128], strides = [1, 1, 1]} : vector<16x16x128xf32> to vector<1x16x128xf32>
    %2081 = vector.shape_cast %2080 : vector<1x16x128xf32> to vector<16x128xf32>
    %2082 = vector.broadcast %2079 : vector<1x128xf32> to vector<16x128xf32>
    %2083 = arith.mulf %2082, %2081 : vector<16x128xf32>
    %2084 = arith.addf %2076, %2083 : vector<16x128xf32>
    %2085 = vector.extract_strided_slice %10 {offsets = [15, 10, 0], sizes = [1, 1, 128], strides = [1, 1, 1]} : vector<16x16x128xf32> to vector<1x1x128xf32>
    %2086 = vector.shape_cast %2085 : vector<1x1x128xf32> to vector<128xf32>
    %2087 = vector.shape_cast %2086 : vector<128xf32> to vector<1x128xf32>
    %2088 = vector.extract_strided_slice %9 {offsets = [10, 0, 0], sizes = [1, 16, 128], strides = [1, 1, 1]} : vector<16x16x128xf32> to vector<1x16x128xf32>
    %2089 = vector.shape_cast %2088 : vector<1x16x128xf32> to vector<16x128xf32>
    %2090 = vector.broadcast %2087 : vector<1x128xf32> to vector<16x128xf32>
    %2091 = arith.mulf %2090, %2089 : vector<16x128xf32>
    %2092 = arith.addf %2084, %2091 : vector<16x128xf32>
    %2093 = vector.extract_strided_slice %10 {offsets = [15, 11, 0], sizes = [1, 1, 128], strides = [1, 1, 1]} : vector<16x16x128xf32> to vector<1x1x128xf32>
    %2094 = vector.shape_cast %2093 : vector<1x1x128xf32> to vector<128xf32>
    %2095 = vector.shape_cast %2094 : vector<128xf32> to vector<1x128xf32>
    %2096 = vector.extract_strided_slice %9 {offsets = [11, 0, 0], sizes = [1, 16, 128], strides = [1, 1, 1]} : vector<16x16x128xf32> to vector<1x16x128xf32>
    %2097 = vector.shape_cast %2096 : vector<1x16x128xf32> to vector<16x128xf32>
    %2098 = vector.broadcast %2095 : vector<1x128xf32> to vector<16x128xf32>
    %2099 = arith.mulf %2098, %2097 : vector<16x128xf32>
    %2100 = arith.addf %2092, %2099 : vector<16x128xf32>
    %2101 = vector.extract_strided_slice %10 {offsets = [15, 12, 0], sizes = [1, 1, 128], strides = [1, 1, 1]} : vector<16x16x128xf32> to vector<1x1x128xf32>
    %2102 = vector.shape_cast %2101 : vector<1x1x128xf32> to vector<128xf32>
    %2103 = vector.shape_cast %2102 : vector<128xf32> to vector<1x128xf32>
    %2104 = vector.extract_strided_slice %9 {offsets = [12, 0, 0], sizes = [1, 16, 128], strides = [1, 1, 1]} : vector<16x16x128xf32> to vector<1x16x128xf32>
    %2105 = vector.shape_cast %2104 : vector<1x16x128xf32> to vector<16x128xf32>
    %2106 = vector.broadcast %2103 : vector<1x128xf32> to vector<16x128xf32>
    %2107 = arith.mulf %2106, %2105 : vector<16x128xf32>
    %2108 = arith.addf %2100, %2107 : vector<16x128xf32>
    %2109 = vector.extract_strided_slice %10 {offsets = [15, 13, 0], sizes = [1, 1, 128], strides = [1, 1, 1]} : vector<16x16x128xf32> to vector<1x1x128xf32>
    %2110 = vector.shape_cast %2109 : vector<1x1x128xf32> to vector<128xf32>
    %2111 = vector.shape_cast %2110 : vector<128xf32> to vector<1x128xf32>
    %2112 = vector.extract_strided_slice %9 {offsets = [13, 0, 0], sizes = [1, 16, 128], strides = [1, 1, 1]} : vector<16x16x128xf32> to vector<1x16x128xf32>
    %2113 = vector.shape_cast %2112 : vector<1x16x128xf32> to vector<16x128xf32>
    %2114 = vector.broadcast %2111 : vector<1x128xf32> to vector<16x128xf32>
    %2115 = arith.mulf %2114, %2113 : vector<16x128xf32>
    %2116 = arith.addf %2108, %2115 : vector<16x128xf32>
    %2117 = vector.extract_strided_slice %10 {offsets = [15, 14, 0], sizes = [1, 1, 128], strides = [1, 1, 1]} : vector<16x16x128xf32> to vector<1x1x128xf32>
    %2118 = vector.shape_cast %2117 : vector<1x1x128xf32> to vector<128xf32>
    %2119 = vector.shape_cast %2118 : vector<128xf32> to vector<1x128xf32>
    %2120 = vector.extract_strided_slice %9 {offsets = [14, 0, 0], sizes = [1, 16, 128], strides = [1, 1, 1]} : vector<16x16x128xf32> to vector<1x16x128xf32>
    %2121 = vector.shape_cast %2120 : vector<1x16x128xf32> to vector<16x128xf32>
    %2122 = vector.broadcast %2119 : vector<1x128xf32> to vector<16x128xf32>
    %2123 = arith.mulf %2122, %2121 : vector<16x128xf32>
    %2124 = arith.addf %2116, %2123 : vector<16x128xf32>
    %2125 = vector.extract_strided_slice %10 {offsets = [15, 15, 0], sizes = [1, 1, 128], strides = [1, 1, 1]} : vector<16x16x128xf32> to vector<1x1x128xf32>
    %2126 = vector.shape_cast %2125 : vector<1x1x128xf32> to vector<128xf32>
    %2127 = vector.shape_cast %2126 : vector<128xf32> to vector<1x128xf32>
    %2128 = vector.extract_strided_slice %9 {offsets = [15, 0, 0], sizes = [1, 16, 128], strides = [1, 1, 1]} : vector<16x16x128xf32> to vector<1x16x128xf32>
    %2129 = vector.shape_cast %2128 : vector<1x16x128xf32> to vector<16x128xf32>
    %2130 = vector.broadcast %2127 : vector<1x128xf32> to vector<16x128xf32>
    %2131 = arith.mulf %2130, %2129 : vector<16x128xf32>
    %2132 = arith.addf %2124, %2131 : vector<16x128xf32>
    %c15 = arith.constant 15 : index
    %c0_84 = arith.constant 0 : index
    %c0_85 = arith.constant 0 : index
    %2133 = vector.load %arg5[%c15, %c0_84, %c0_85] : memref<16x16x128xf32, #tpu.memory_space<vmem>>, vector<1x16x128xf32>
    %2134 = vector.shape_cast %2133 : vector<1x16x128xf32> to vector<16x128xf32>
    %2135 = arith.subf %2132, %2134 : vector<16x128xf32>
    %c15_86 = arith.constant 15 : index
    %c0_87 = arith.constant 0 : index
    %c0_88 = arith.constant 0 : index
    %2136 = vector.load %arg6[%c15_86, %c0_87, %c0_88] : memref<16x16x128xf32, #tpu.memory_space<vmem>>, vector<1x16x128xf32>
    %2137 = vector.shape_cast %2136 : vector<1x16x128xf32> to vector<16x128xf32>
    %2138 = vector.shape_cast %2135 : vector<16x128xf32> to vector<1x16x128xf32>
    tpu.vector_store %arg6[%c15_86, %c0_87, %c0_88], %2138 {strides = array<i32>} : memref<16x16x128xf32, #tpu.memory_space<vmem>>, vector<1x16x128xf32>,
    return
  }
  func.func @transform_0(%arg0: i32) -> i32 {
    %c0_i32 = arith.constant 0 : i32
    %c0_i32_0 = arith.constant 0 : i32
    return %c0_i32 : i32
  }
  func.func @transform_1(%arg0: i32) -> (i32, i32, i32) {
    %c0_i32 = arith.constant 0 : i32
    %c0_i32_0 = arith.constant 0 : i32
    %c0_i32_1 = arith.constant 0 : i32
    return %c0_i32, %c0_i32_0, %arg0 : i32, i32, i32
  }
  func.func @transform_2(%arg0: i32) -> (i32, i32) {
    %c0_i32 = arith.constant 0 : i32
    %c0_i32_0 = arith.constant 0 : i32
    return %c0_i32, %arg0 : i32, i32
  }
  func.func @transform_3(%arg0: i32) -> (i32, i32, i32) {
    %c0_i32 = arith.constant 0 : i32
    %c0_i32_0 = arith.constant 0 : i32
    %c0_i32_1 = arith.constant 0 : i32
    return %c0_i32, %c0_i32_0, %arg0 : i32, i32, i32
  }
  func.func @transform_4(%arg0: i32) -> (i32, i32, i32) {
    %c0_i32 = arith.constant 0 : i32
    %c0_i32_0 = arith.constant 0 : i32
    %c0_i32_1 = arith.constant 0 : i32
    return %c0_i32, %c0_i32_0, %arg0 : i32, i32, i32
  }
  func.func @transform_5(%arg0: i32) -> (i32, i32, i32) {
    %c0_i32 = arith.constant 0 : i32
    %c0_i32_0 = arith.constant 0 : i32
    %c0_i32_1 = arith.constant 0 : i32
    return %c0_i32, %c0_i32_0, %arg0 : i32, i32, i32
  }
}

</mosaic_0001>

<llo_original>
// kernel: tpu_custom_call.1
$region0: #{tpu_custom_call.1}
  #allocation0 [shape = 'u32[]', space=smem, size = 0x4, offset = 0x4, fixed_abs, tag = 'smem constant byte address 0x4 - core index']
  #allocation1 [shape = 'u32[144,128]{1,0:T(1,128)}', space=vmem, size = 0x12000, scoped, tag = 'internal scratch']
  #allocation2 [shape = 'f32[1]{0:T(128)S(6)}', space=smem, size = 0x200, scoped, tag = 'scoped memory for tpu_custom_call.1']
  %s0 = inlined_call_operand.<no memory space> [shape: f32[1], index: 0, kind: input, shape index: {}]
  %s1 = inlined_call_operand.hbm [shape: f32[16,16,128], index: 1, kind: input, shape index: {}]
  %s2 = inlined_call_operand.hbm [shape: f32[16,128], index: 2, kind: input, shape index: {}]
  %s3 = inlined_call_operand.hbm [shape: f32[16,16,128], index: 3, kind: input, shape index: {}]
  %s4 = inlined_call_operand.hbm [shape: f32[16,16,128], index: 4, kind: input, shape index: {}]
  %s5 = inlined_call_operand.hbm [shape: f32[16,16,128], index: 5, kind: output, shape index: {}]
  %s6 = sld [smem:[#allocation0]]
  $region46: #{tpu_custom_call.1} parent=0
    _
  %s8 = ssub.s32 1, %s6
  %s9 = scalar_select 0, %s8, %s6
  %10 = sst [smem:[#allocation2]] %s0
  $region1: #{tpu_custom_call.1} parent=0
    #allocation3 [shape = 'u8[131072]{0}', space=vmem, size = 0x20000, scoped, tag = 'input window, operand 1, single buffered']
    #allocation4 [shape = 's32[1]{0}', space=sflag, size = 0x4, scoped, tag = 'scoped memory for tpu_custom_call.1']
    #allocation5 [shape = 's32[1]{0}', space=sflag, size = 0x4, scoped, tag = 'scoped memory for tpu_custom_call.1']
    #allocation6 [shape = 'u8[8192]{0}', space=vmem, size = 0x2000, scoped, tag = 'input window, operand 2, single buffered']
    #allocation7 [shape = 's32[1]{0}', space=sflag, size = 0x4, scoped, tag = 'scoped memory for tpu_custom_call.1']
    #allocation8 [shape = 'u8[131072]{0}', space=vmem, size = 0x20000, scoped, tag = 'input window, operand 3, single buffered']
    #allocation9 [shape = 'u8[131072]{0}', space=vmem, size = 0x20000, scoped, tag = 'input window, operand 4, single buffered']
    #allocation10 [shape = 's32[1]{0}', space=sflag, size = 0x4, scoped, tag = 'scoped memory for tpu_custom_call.1']
    #allocation11 [shape = 'u8[131072]{0}', space=vmem, size = 0x20000, scoped, tag = 'output window, operand 0, single buffered']
    %11 = vsyncpa [#allocation4], 0
    %12 = vsyncpa [#allocation7], 0
    %13 = vsyncpa [#allocation10], 0
    %14 = vsyncpa [#allocation5], 0
    // Predicated region
    $region2: #{tpu_custom_call.1} parent=1 // pred_check
      _
    $region3: #{tpu_custom_call.1} parent=1 // pred_check_branch
      %16 = sbr.rel (0) target = $region5
    $region4: #{tpu_custom_call.1} parent=1 // pred_region
      _
    $region5: #{tpu_custom_call.1} parent=1 // pred_fallthru
      _
    // Predicated region
    $region6: #{tpu_custom_call.1} parent=1 // pred_check
      _
    $region7: #{tpu_custom_call.1} parent=1 // pred_check_branch
      %18 = sbr.rel (0) target = $region9
    $region8: #{tpu_custom_call.1} parent=1 // pred_region
      %s20 = ssub.s32 4096, 4096
      %21 = vsyncadd [#allocation4], %s20
      %s22 = sshll.u32 [#allocation3], 4
      %s23 = int_to_ptr.vmem [resolvable:$true] %s22
      %28 = dma.hbm_to_vmem [thread:$0]  %s1, 4096, %s23, [#allocation4], 128, 128, 8
    $region9: #{tpu_custom_call.1} parent=1 // pred_fallthru
      _
    // Predicated region
    $region10: #{tpu_custom_call.1} parent=1 // pred_check
      _
    $region11: #{tpu_custom_call.1} parent=1 // pred_check_branch
      %30 = sbr.rel (0) target = $region13
    $region12: #{tpu_custom_call.1} parent=1 // pred_region
      %s32 = ssub.s32 256, 256
      %33 = vsyncadd [#allocation7], %s32
      %s34 = sshll.u32 [#allocation6], 4
      %s35 = int_to_ptr.vmem [resolvable:$true] %s34
      %40 = dma.hbm_to_vmem [thread:$0]  %s2, 256, %s35, [#allocation7], 128, 128, 8
    $region13: #{tpu_custom_call.1} parent=1 // pred_fallthru
      _
    // Predicated region
    $region14: #{tpu_custom_call.1} parent=1 // pred_check
      _
    $region15: #{tpu_custom_call.1} parent=1 // pred_check_branch
      %42 = sbr.rel (0) target = $region17
    $region16: #{tpu_custom_call.1} parent=1 // pred_region
      %s44 = ssub.s32 4096, 4096
      %45 = vsyncadd [#allocation7], %s44
      %s46 = sshll.u32 [#allocation8], 4
      %s47 = int_to_ptr.vmem [resolvable:$true] %s46
      %52 = dma.hbm_to_vmem [thread:$0]  %s3, 4096, %s47, [#allocation7], 128, 128, 8
    $region17: #{tpu_custom_call.1} parent=1 // pred_fallthru
      _
    // Predicated region
    $region18: #{tpu_custom_call.1} parent=1 // pred_check
      _
    $region19: #{tpu_custom_call.1} parent=1 // pred_check_branch
      %54 = sbr.rel (0) target = $region21
    $region20: #{tpu_custom_call.1} parent=1 // pred_region
      %s56 = ssub.s32 4096, 4096
      %57 = vsyncadd [#allocation10], %s56
      %s58 = sshll.u32 [#allocation9], 4
      %s59 = int_to_ptr.vmem [resolvable:$true] %s58
      %64 = dma.hbm_to_vmem [thread:$0]  %s4, 4096, %s59, [#allocation10], 128, 128, 8
    $region21: #{tpu_custom_call.1} parent=1 // pred_fallthru
      _
    // Predicated region
    $region22: #{tpu_custom_call.1} parent=1 // pred_check
      _
    $region23: #{tpu_custom_call.1} parent=1 // pred_check_branch
      %66 = sbr.rel (0) target = $region25
    $region24: #{tpu_custom_call.1} parent=1 // pred_region
      %67 = dma.done [#allocation4], 4096
    $region25: #{tpu_custom_call.1} parent=1 // pred_fallthru
      _
    // Predicated region
    $region26: #{tpu_custom_call.1} parent=1 // pred_check
      _
    $region27: #{tpu_custom_call.1} parent=1 // pred_check_branch
      %69 = sbr.rel (0) target = $region29
    $region28: #{tpu_custom_call.1} parent=1 // pred_region
      %70 = dma.done [#allocation7], 256
    $region29: #{tpu_custom_call.1} parent=1 // pred_fallthru
      _
    // Predicated region
    $region30: #{tpu_custom_call.1} parent=1 // pred_check
      _
    $region31: #{tpu_custom_call.1} parent=1 // pred_check_branch
      %72 = sbr.rel (0) target = $region33
    $region32: #{tpu_custom_call.1} parent=1 // pred_region
      %73 = dma.done [#allocation7], 4096
    $region33: #{tpu_custom_call.1} parent=1 // pred_fallthru
      _
    // Predicated region
    $region34: #{tpu_custom_call.1} parent=1 // pred_check
      _
    $region35: #{tpu_custom_call.1} parent=1 // pred_check_branch
      %75 = sbr.rel (0) target = $region37
    $region36: #{tpu_custom_call.1} parent=1 // pred_region
      %76 = dma.done [#allocation10], 4096
    $region37: #{tpu_custom_call.1} parent=1 // pred_fallthru
      _
    %s77 = sld [smem:[#allocation2]]
    %v78 = vld [vmem:[#allocation6] sm:$0xff]
    %v79 = vld [vmem:[#allocation6 + $0x8] sm:$0xff]
    %v80 = vstv %s77
    %v81 = vsub.f32 %v78, %v80
    %v82 = vsub.f32 %v79, %v80
    %v83 = vmax.f32 %v81, 0.0
    %v84 = vmax.f32 %v82, 0.0
    %v85 = vld [vmem:[#allocation8] sm:$0xff]
    %v86 = vld [vmem:[#allocation8 + $0x8] sm:$0xff]
    %v87 = vld [vmem:[#allocation8 + $0x10] sm:$0xff]
    %v88 = vld [vmem:[#allocation8 + $0x18] sm:$0xff]
    %v89 = vld [vmem:[#allocation8 + $0x20] sm:$0xff]
    %v90 = vld [vmem:[#allocation8 + $0x28] sm:$0xff]
    %v91 = vld [vmem:[#allocation8 + $0x30] sm:$0xff]
    %v92 = vld [vmem:[#allocation8 + $0x38] sm:$0xff]
    %v93 = vld [vmem:[#allocation8 + $0x40] sm:$0xff]
    %v94 = vld [vmem:[#allocation8 + $0x48] sm:$0xff]
    %v95 = vld [vmem:[#allocation8 + $0x50] sm:$0xff]
    %v96 = vld [vmem:[#allocation8 + $0x58] sm:$0xff]
    %v97 = vld [vmem:[#allocation8 + $0x60] sm:$0xff]
    %v98 = vld [vmem:[#allocation8 + $0x68] sm:$0xff]
    %v99 = vld [vmem:[#allocation8 + $0x70] sm:$0xff]
    %v100 = vld [vmem:[#allocation8 + $0x78] sm:$0xff]
    %v101 = vld [vmem:[#allocation8 + $0x80] sm:$0xff]
    %v102 = vld [vmem:[#allocation8 + $0x88] sm:$0xff]
    %v103 = vld [vmem:[#allocation8 + $0x90] sm:$0xff]
    %v104 = vld [vmem:[#allocation8 + $0x98] sm:$0xff]
    %v105 = vld [vmem:[#allocation8 + $0xa0] sm:$0xff]
    %v106 = vld [vmem:[#allocation8 + $0xa8] sm:$0xff]
    %v107 = vld [vmem:[#allocation8 + $0xb0] sm:$0xff]
    %v108 = vld [vmem:[#allocation8 + $0xb8] sm:$0xff]
    %v109 = vld [vmem:[#allocation8 + $0xc0] sm:$0xff]
    %v110 = vld [vmem:[#allocation8 + $0xc8] sm:$0xff]
    %v111 = vld [vmem:[#allocation8 + $0xd0] sm:$0xff]
    %v112 = vld [vmem:[#allocation8 + $0xd8] sm:$0xff]
    %v113 = vld [vmem:[#allocation8 + $0xe0] sm:$0xff]
    %v114 = vld [vmem:[#allocation8 + $0xe8] sm:$0xff]
    %v115 = vld [vmem:[#allocation8 + $0xf0] sm:$0xff]
    %v116 = vld [vmem:[#allocation8 + $0xf8] sm:$0xff]
    %v119 = vcombine.high %v83, %v83
    %v121 = vunpack.c.l.s4 1966171168
    %v122 = vunpack.c.0.s8 %v121
    %v123 = vlaneseq
    %v124 = vshrl.u32 %v123, 7
    %v125 = vsub.s32 %v122, %v124
    %v126 = vrot.slane %v83, %v125
    %v128 = vunpack.c.l.s4 1966171168
    %v129 = vunpack.c.0.s8 %v128
    %v130 = vlaneseq
    %v131 = vshrl.u32 %v130, 7
    %v132 = vsub.s32 %v129, %v131
    %v133 = vrot.slane %v119, %v132
    %v134 = vcombine.high %v126, %v126
    %v135 = vcombine.high %v133, %v133
    %v137 = vunpack.c.l.s4 1966171168
    %v138 = vunpack.c.0.s8 %v137
    %v139 = vlaneseq
    %v140 = vshrl.u32 %v139, 7
    %v141 = vsub.s32 %v138, %v140
    %v142 = vrot.slane %v126, %v141
    %v144 = vunpack.c.l.s4 1966171168
    %v145 = vunpack.c.0.s8 %v144
    %v146 = vlaneseq
    %v147 = vshrl.u32 %v146, 7
    %v148 = vsub.s32 %v145, %v147
    %v149 = vrot.slane %v133, %v148
    %v151 = vunpack.c.l.s4 1966171168
    %v152 = vunpack.c.0.s8 %v151
    %v153 = vlaneseq
    %v154 = vshrl.u32 %v153, 7
    %v155 = vsub.s32 %v152, %v154
    %v156 = vrot.slane %v134, %v155
    %v158 = vunpack.c.l.s4 1966171168
    %v159 = vunpack.c.0.s8 %v158
    %v160 = vlaneseq
    %v161 = vshrl.u32 %v160, 7
    %v162 = vsub.s32 %v159, %v161
    %v163 = vrot.slane %v135, %v162
    %v164 = vcombine.high %v142, %v142
    %v165 = vcombine.high %v149, %v149
    %v166 = vcombine.high %v156, %v156
    %v167 = vcombine.high %v163, %v163
    %v168 = vcombine.high %v84, %v84
    %v170 = vunpack.c.l.s4 1966171168
    %v171 = vunpack.c.0.s8 %v170
    %v172 = vlaneseq
    %v173 = vshrl.u32 %v172, 7
    %v174 = vsub.s32 %v171, %v173
    %v175 = vrot.slane %v84, %v174
    %v177 = vunpack.c.l.s4 1966171168
    %v178 = vunpack.c.0.s8 %v177
    %v179 = vlaneseq
    %v180 = vshrl.u32 %v179, 7
    %v181 = vsub.s32 %v178, %v180
    %v182 = vrot.slane %v168, %v181
    %v183 = vcombine.high %v175, %v175
    %v184 = vcombine.high %v182, %v182
    %v186 = vunpack.c.l.s4 1966171168
    %v187 = vunpack.c.0.s8 %v186
    %v188 = vlaneseq
    %v189 = vshrl.u32 %v188, 7
    %v190 = vsub.s32 %v187, %v189
    %v191 = vrot.slane %v175, %v190
    %v193 = vunpack.c.l.s4 1966171168
    %v194 = vunpack.c.0.s8 %v193
    %v195 = vlaneseq
    %v196 = vshrl.u32 %v195, 7
    %v197 = vsub.s32 %v194, %v196
    %v198 = vrot.slane %v182, %v197
    %v200 = vunpack.c.l.s4 1966171168
    %v201 = vunpack.c.0.s8 %v200
    %v202 = vlaneseq
    %v203 = vshrl.u32 %v202, 7
    %v204 = vsub.s32 %v201, %v203
    %v205 = vrot.slane %v183, %v204
    %v207 = vunpack.c.l.s4 1966171168
    %v208 = vunpack.c.0.s8 %v207
    %v209 = vlaneseq
    %v210 = vshrl.u32 %v209, 7
    %v211 = vsub.s32 %v208, %v210
    %v212 = vrot.slane %v184, %v211
    %v213 = vcombine.high %v191, %v191
    %v214 = vcombine.high %v198, %v198
    %v215 = vcombine.high %v205, %v205
    %v216 = vcombine.high %v212, %v212
    %v217 = vlaneseq
    %v218 = vshrl.u32 %v217, 7
    %v219 = vsub.s32 0, %v218
    %v220 = vrot.slane %v142, %v219
    %v221 = vlaneseq
    %v222 = vshrl.u32 %v221, 7
    %v223 = vsub.s32 0, %v222
    %v224 = vrot.slane %v156, %v223
    %v225 = vlaneseq
    %v226 = vshrl.u32 %v225, 7
    %v227 = vsub.s32 0, %v226
    %v228 = vrot.slane %v164, %v227
    %v229 = vlaneseq
    %v230 = vshrl.u32 %v229, 7
    %v231 = vsub.s32 0, %v230
    %v232 = vrot.slane %v166, %v231
    %v233 = vlaneseq
    %v234 = vshrl.u32 %v233, 7
    %v235 = vsub.s32 0, %v234
    %v236 = vrot.slane %v149, %v235
    %v237 = vlaneseq
    %v238 = vshrl.u32 %v237, 7
    %v239 = vsub.s32 0, %v238
    %v240 = vrot.slane %v163, %v239
    %v241 = vlaneseq
    %v242 = vshrl.u32 %v241, 7
    %v243 = vsub.s32 0, %v242
    %v244 = vrot.slane %v165, %v243
    %v245 = vlaneseq
    %v246 = vshrl.u32 %v245, 7
    %v247 = vsub.s32 0, %v246
    %v248 = vrot.slane %v167, %v247
    %v249 = vlaneseq
    %v250 = vshrl.u32 %v249, 7
    %v251 = vsub.s32 0, %v250
    %v252 = vrot.slane %v191, %v251
    %v253 = vlaneseq
    %v254 = vshrl.u32 %v253, 7
    %v255 = vsub.s32 0, %v254
    %v256 = vrot.slane %v205, %v255
    %v257 = vlaneseq
    %v258 = vshrl.u32 %v257, 7
    %v259 = vsub.s32 0, %v258
    %v260 = vrot.slane %v213, %v259
    %v261 = vlaneseq
    %v262 = vshrl.u32 %v261, 7
    %v263 = vsub.s32 0, %v262
    %v264 = vrot.slane %v215, %v263
    %v265 = vlaneseq
    %v266 = vshrl.u32 %v265, 7
    %v267 = vsub.s32 0, %v266
    %v268 = vrot.slane %v198, %v267
    %v269 = vlaneseq
    %v270 = vshrl.u32 %v269, 7
    %v271 = vsub.s32 0, %v270
    %v272 = vrot.slane %v212, %v271
    %v273 = vlaneseq
    %v274 = vshrl.u32 %v273, 7
    %v275 = vsub.s32 0, %v274
    %v276 = vrot.slane %v214, %v275
    %v277 = vlaneseq
    %v278 = vshrl.u32 %v277, 7
    %v279 = vsub.s32 0, %v278
    %v280 = vrot.slane %v216, %v279
    %v297 = vmul.f32 %v85, %v220
    %v298 = vmul.f32 %v86, %v220
    %v299 = vmul.f32 %v87, %v224
    %v300 = vmul.f32 %v88, %v224
    %v301 = vmul.f32 %v89, %v228
    %v302 = vmul.f32 %v90, %v228
    %v303 = vmul.f32 %v91, %v232
    %v304 = vmul.f32 %v92, %v232
    %v305 = vmul.f32 %v93, %v236
    %v306 = vmul.f32 %v94, %v236
    %v307 = vmul.f32 %v95, %v240
    %v308 = vmul.f32 %v96, %v240
    %v309 = vmul.f32 %v97, %v244
    %v310 = vmul.f32 %v98, %v244
    %v311 = vmul.f32 %v99, %v248
    %v312 = vmul.f32 %v100, %v248
    %v313 = vmul.f32 %v101, %v252
    %v314 = vmul.f32 %v102, %v252
    %v315 = vmul.f32 %v103, %v256
    %v316 = vmul.f32 %v104, %v256
    %v317 = vmul.f32 %v105, %v260
    %v318 = vmul.f32 %v106, %v260
    %v319 = vmul.f32 %v107, %v264
    %v320 = vmul.f32 %v108, %v264
    %v321 = vmul.f32 %v109, %v268
    %v322 = vmul.f32 %v110, %v268
    %v323 = vmul.f32 %v111, %v272
    %v324 = vmul.f32 %v112, %v272
    %v325 = vmul.f32 %v113, %v276
    %v326 = vmul.f32 %v114, %v276
    %v327 = vmul.f32 %v115, %v280
    %v328 = vmul.f32 %v116, %v280
    %v329 = vld [vmem:[#allocation3] sm:$0xff]
    %v330 = vld [vmem:[#allocation3 + $0x8] sm:$0xff]
    %v331 = vld [vmem:[#allocation3 + $0x10] sm:$0xff]
    %v332 = vld [vmem:[#allocation3 + $0x18] sm:$0xff]
    %v333 = vld [vmem:[#allocation3 + $0x20] sm:$0xff]
    %v334 = vld [vmem:[#allocation3 + $0x28] sm:$0xff]
    %v335 = vld [vmem:[#allocation3 + $0x30] sm:$0xff]
    %v336 = vld [vmem:[#allocation3 + $0x38] sm:$0xff]
    %v337 = vld [vmem:[#allocation3 + $0x40] sm:$0xff]
    %v338 = vld [vmem:[#allocation3 + $0x48] sm:$0xff]
    %v339 = vld [vmem:[#allocation3 + $0x50] sm:$0xff]
    %v340 = vld [vmem:[#allocation3 + $0x58] sm:$0xff]
    %v341 = vld [vmem:[#allocation3 + $0x60] sm:$0xff]
    %v342 = vld [vmem:[#allocation3 + $0x68] sm:$0xff]
    %v343 = vld [vmem:[#allocation3 + $0x70] sm:$0xff]
    %v344 = vld [vmem:[#allocation3 + $0x78] sm:$0xff]
    %v345 = vld [vmem:[#allocation3 + $0x80] sm:$0xff]
    %v346 = vld [vmem:[#allocation3 + $0x88] sm:$0xff]
    %v347 = vld [vmem:[#allocation3 + $0x90] sm:$0xff]
    %v348 = vld [vmem:[#allocation3 + $0x98] sm:$0xff]
    %v349 = vld [vmem:[#allocation3 + $0xa0] sm:$0xff]
    %v350 = vld [vmem:[#allocation3 + $0xa8] sm:$0xff]
    %v351 = vld [vmem:[#allocation3 + $0xb0] sm:$0xff]
    %v352 = vld [vmem:[#allocation3 + $0xb8] sm:$0xff]
    %v353 = vld [vmem:[#allocation3 + $0xc0] sm:$0xff]
    %v354 = vld [vmem:[#allocation3 + $0xc8] sm:$0xff]
    %v355 = vld [vmem:[#allocation3 + $0xd0] sm:$0xff]
    %v356 = vld [vmem:[#allocation3 + $0xd8] sm:$0xff]
    %v357 = vld [vmem:[#allocation3 + $0xe0] sm:$0xff]
    %v358 = vld [vmem:[#allocation3 + $0xe8] sm:$0xff]
    %v359 = vld [vmem:[#allocation3 + $0xf0] sm:$0xff]
    %v360 = vld [vmem:[#allocation3 + $0xf8] sm:$0xff]
    %v361 = vlaneseq
    %v362 = vshrl.u32 %v361, 7
    %v363 = vsub.s32 0, %v362
    %v364 = vrot.slane %v329, %v363
    %v365 = vmul.f32 %v364, %v297
    %v366 = vmul.f32 %v364, %v298
    %v367 = vlaneseq
    %v368 = vshrl.u32 %v367, 7
    %v369 = vsub.s32 1, %v368
    %v370 = vrot.slane %v329, %v369
    %v371 = vmul.f32 %v370, %v299
    %v372 = vmul.f32 %v370, %v300
    %v373 = vadd.f32 %v365, %v371
    %v374 = vadd.f32 %v366, %v372
    %v375 = vlaneseq
    %v376 = vshrl.u32 %v375, 7
    %v377 = vsub.s32 2, %v376
    %v378 = vrot.slane %v329, %v377
    %v379 = vmul.f32 %v378, %v301
    %v380 = vmul.f32 %v378, %v302
    %v381 = vadd.f32 %v373, %v379
    %v382 = vadd.f32 %v374, %v380
    %v383 = vlaneseq
    %v384 = vshrl.u32 %v383, 7
    %v385 = vsub.s32 3, %v384
    %v386 = vrot.slane %v329, %v385
    %v387 = vmul.f32 %v386, %v303
    %v388 = vmul.f32 %v386, %v304
    %v389 = vadd.f32 %v381, %v387
    %v390 = vadd.f32 %v382, %v388
    %v391 = vlaneseq
    %v392 = vshrl.u32 %v391, 7
    %v393 = vsub.s32 4, %v392
    %v394 = vrot.slane %v329, %v393
    %v395 = vmul.f32 %v394, %v305
    %v396 = vmul.f32 %v394, %v306
    %v397 = vadd.f32 %v389, %v395
    %v398 = vadd.f32 %v390, %v396
    %v399 = vlaneseq
    %v400 = vshrl.u32 %v399, 7
    %v401 = vsub.s32 5, %v400
    %v402 = vrot.slane %v329, %v401
    %v403 = vmul.f32 %v402, %v307
    %v404 = vmul.f32 %v402, %v308
    %v405 = vadd.f32 %v397, %v403
    %v406 = vadd.f32 %v398, %v404
    %v407 = vlaneseq
    %v408 = vshrl.u32 %v407, 7
    %v409 = vsub.s32 6, %v408
    %v410 = vrot.slane %v329, %v409
    %v411 = vmul.f32 %v410, %v309
    %v412 = vmul.f32 %v410, %v310
    %v413 = vadd.f32 %v405, %v411
    %v414 = vadd.f32 %v406, %v412
    %v415 = vlaneseq
    %v416 = vshrl.u32 %v415, 7
    %v417 = vsub.s32 7, %v416
    %v418 = vrot.slane %v329, %v417
    %v419 = vmul.f32 %v418, %v311
    %v420 = vmul.f32 %v418, %v312
    %v421 = vadd.f32 %v413, %v419
    %v422 = vadd.f32 %v414, %v420
    %v423 = vlaneseq
    %v424 = vshrl.u32 %v423, 7
    %v425 = vsub.s32 0, %v424
    %v426 = vrot.slane %v330, %v425
    %v427 = vmul.f32 %v426, %v313
    %v428 = vmul.f32 %v426, %v314
    %v429 = vadd.f32 %v421, %v427
    %v430 = vadd.f32 %v422, %v428
    %v431 = vlaneseq
    %v432 = vshrl.u32 %v431, 7
    %v433 = vsub.s32 1, %v432
    %v434 = vrot.slane %v330, %v433
    %v435 = vmul.f32 %v434, %v315
    %v436 = vmul.f32 %v434, %v316
    %v437 = vadd.f32 %v429, %v435
    %v438 = vadd.f32 %v430, %v436
    %v439 = vlaneseq
    %v440 = vshrl.u32 %v439, 7
    %v441 = vsub.s32 2, %v440
    %v442 = vrot.slane %v330, %v441
    %v443 = vmul.f32 %v442, %v317
    %v444 = vmul.f32 %v442, %v318
    %v445 = vadd.f32 %v437, %v443
    %v446 = vadd.f32 %v438, %v444
    %v447 = vlaneseq
    %v448 = vshrl.u32 %v447, 7
    %v449 = vsub.s32 3, %v448
    %v450 = vrot.slane %v330, %v449
    %v451 = vmul.f32 %v450, %v319
    %v452 = vmul.f32 %v450, %v320
    %v453 = vadd.f32 %v445, %v451
    %v454 = vadd.f32 %v446, %v452
    %v455 = vlaneseq
    %v456 = vshrl.u32 %v455, 7
    %v457 = vsub.s32 4, %v456
    %v458 = vrot.slane %v330, %v457
    %v459 = vmul.f32 %v458, %v321
    %v460 = vmul.f32 %v458, %v322
    %v461 = vadd.f32 %v453, %v459
    %v462 = vadd.f32 %v454, %v460
    %v463 = vlaneseq
    %v464 = vshrl.u32 %v463, 7
    %v465 = vsub.s32 5, %v464
    %v466 = vrot.slane %v330, %v465
    %v467 = vmul.f32 %v466, %v323
    %v468 = vmul.f32 %v466, %v324
    %v469 = vadd.f32 %v461, %v467
    %v470 = vadd.f32 %v462, %v468
    %v471 = vlaneseq
    %v472 = vshrl.u32 %v471, 7
    %v473 = vsub.s32 6, %v472
    %v474 = vrot.slane %v330, %v473
    %v475 = vmul.f32 %v474, %v325
    %v476 = vmul.f32 %v474, %v326
    %v477 = vadd.f32 %v469, %v475
    %v478 = vadd.f32 %v470, %v476
    %v479 = vlaneseq
    %v480 = vshrl.u32 %v479, 7
    %v481 = vsub.s32 7, %v480
    %v482 = vrot.slane %v330, %v481
    %v483 = vmul.f32 %v482, %v327
    %v484 = vmul.f32 %v482, %v328
    %v485 = vadd.f32 %v477, %v483
    %v486 = vadd.f32 %v478, %v484
    %v487 = vld [vmem:[#allocation9] sm:$0xff]
    %v488 = vld [vmem:[#allocation9 + $0x8] sm:$0xff]
    %v489 = vsub.f32 %v485, %v487
    %v490 = vsub.f32 %v486, %v488
    %491 = vst [vmem:[#allocation11] sm:$0xff] %v489
    %492 = vst [vmem:[#allocation11 + $0x8] sm:$0xff] %v490
    %v493 = vlaneseq
    %v494 = vshrl.u32 %v493, 7
    %v495 = vsub.s32 0, %v494
    %v496 = vrot.slane %v331, %v495
    %v497 = vmul.f32 %v496, %v297
    %v498 = vmul.f32 %v496, %v298
    %v499 = vlaneseq
    %v500 = vshrl.u32 %v499, 7
    %v501 = vsub.s32 1, %v500
    %v502 = vrot.slane %v331, %v501
    %v503 = vmul.f32 %v502, %v299
    %v504 = vmul.f32 %v502, %v300
    %v505 = vadd.f32 %v497, %v503
    %v506 = vadd.f32 %v498, %v504
    %v507 = vlaneseq
    %v508 = vshrl.u32 %v507, 7
    %v509 = vsub.s32 2, %v508
    %v510 = vrot.slane %v331, %v509
    %v511 = vmul.f32 %v510, %v301
    %v512 = vmul.f32 %v510, %v302
    %v513 = vadd.f32 %v505, %v511
    %v514 = vadd.f32 %v506, %v512
    %v515 = vlaneseq
    %v516 = vshrl.u32 %v515, 7
    %v517 = vsub.s32 3, %v516
    %v518 = vrot.slane %v331, %v517
    %v519 = vmul.f32 %v518, %v303
    %v520 = vmul.f32 %v518, %v304
    %v521 = vadd.f32 %v513, %v519
    %v522 = vadd.f32 %v514, %v520
    %v523 = vlaneseq
    %v524 = vshrl.u32 %v523, 7
    %v525 = vsub.s32 4, %v524
    %v526 = vrot.slane %v331, %v525
    %v527 = vmul.f32 %v526, %v305
    %v528 = vmul.f32 %v526, %v306
    %v529 = vadd.f32 %v521, %v527
    %v530 = vadd.f32 %v522, %v528
    %v531 = vlaneseq
    %v532 = vshrl.u32 %v531, 7
    %v533 = vsub.s32 5, %v532
    %v534 = vrot.slane %v331, %v533
    %v535 = vmul.f32 %v534, %v307
    %v536 = vmul.f32 %v534, %v308
    %v537 = vadd.f32 %v529, %v535
    %v538 = vadd.f32 %v530, %v536
    %v539 = vlaneseq
    %v540 = vshrl.u32 %v539, 7
    %v541 = vsub.s32 6, %v540
    %v542 = vrot.slane %v331, %v541
    %v543 = vmul.f32 %v542, %v309
    %v544 = vmul.f32 %v542, %v310
    %v545 = vadd.f32 %v537, %v543
    %v546 = vadd.f32 %v538, %v544
    %v547 = vlaneseq
    %v548 = vshrl.u32 %v547, 7
    %v549 = vsub.s32 7, %v548
    %v550 = vrot.slane %v331, %v549
    %v551 = vmul.f32 %v550, %v311
    %v552 = vmul.f32 %v550, %v312
    %v553 = vadd.f32 %v545, %v551
    %v554 = vadd.f32 %v546, %v552
    %v555 = vlaneseq
    %v556 = vshrl.u32 %v555, 7
    %v557 = vsub.s32 0, %v556
    %v558 = vrot.slane %v332, %v557
    %v559 = vmul.f32 %v558, %v313
    %v560 = vmul.f32 %v558, %v314
    %v561 = vadd.f32 %v553, %v559
    %v562 = vadd.f32 %v554, %v560
    %v563 = vlaneseq
    %v564 = vshrl.u32 %v563, 7
    %v565 = vsub.s32 1, %v564
    %v566 = vrot.slane %v332, %v565
    %v567 = vmul.f32 %v566, %v315
    %v568 = vmul.f32 %v566, %v316
    %v569 = vadd.f32 %v561, %v567
    %v570 = vadd.f32 %v562, %v568
    %v571 = vlaneseq
    %v572 = vshrl.u32 %v571, 7
    %v573 = vsub.s32 2, %v572
    %v574 = vrot.slane %v332, %v573
    %v575 = vmul.f32 %v574, %v317
    %v576 = vmul.f32 %v574, %v318
    %v577 = vadd.f32 %v569, %v575
    %v578 = vadd.f32 %v570, %v576
    %v579 = vlaneseq
    %v580 = vshrl.u32 %v579, 7
    %v581 = vsub.s32 3, %v580
    %v582 = vrot.slane %v332, %v581
    %v583 = vmul.f32 %v582, %v319
    %v584 = vmul.f32 %v582, %v320
    %v585 = vadd.f32 %v577, %v583
    %v586 = vadd.f32 %v578, %v584
    %v587 = vlaneseq
    %v588 = vshrl.u32 %v587, 7
    %v589 = vsub.s32 4, %v588
    %v590 = vrot.slane %v332, %v589
    %v591 = vmul.f32 %v590, %v321
    %v592 = vmul.f32 %v590, %v322
    %v593 = vadd.f32 %v585, %v591
    %v594 = vadd.f32 %v586, %v592
    %v595 = vlaneseq
    %v596 = vshrl.u32 %v595, 7
    %v597 = vsub.s32 5, %v596
    %v598 = vrot.slane %v332, %v597
    %v599 = vmul.f32 %v598, %v323
    %v600 = vmul.f32 %v598, %v324
    %v601 = vadd.f32 %v593, %v599
    %v602 = vadd.f32 %v594, %v600
    %v603 = vlaneseq
    %v604 = vshrl.u32 %v603, 7
    %v605 = vsub.s32 6, %v604
    %v606 = vrot.slane %v332, %v605
    %v607 = vmul.f32 %v606, %v325
    %v608 = vmul.f32 %v606, %v326
    %v609 = vadd.f32 %v601, %v607
    %v610 = vadd.f32 %v602, %v608
    %v611 = vlaneseq
    %v612 = vshrl.u32 %v611, 7
    %v613 = vsub.s32 7, %v612
    %v614 = vrot.slane %v332, %v613
    %v615 = vmul.f32 %v614, %v327
    %v616 = vmul.f32 %v614, %v328
    %v617 = vadd.f32 %v609, %v615
    %v618 = vadd.f32 %v610, %v616
    %s619 = scalar_lea.vmem [#allocation9], 16
    %v620 = vld [vmem:[%s619] sm:$0xff]
    %v621 = vld [vmem:[%s619 + $0x8] sm:$0xff]
    %v622 = vsub.f32 %v617, %v620
    %v623 = vsub.f32 %v618, %v621
    %s624 = scalar_lea.vmem [#allocation11], 16
    %625 = vst [vmem:[%s624] sm:$0xff] %v622
    %626 = vst [vmem:[%s624 + $0x8] sm:$0xff] %v623
    %v627 = vlaneseq
    %v628 = vshrl.u32 %v627, 7
    %v629 = vsub.s32 0, %v628
    %v630 = vrot.slane %v333, %v629
    %v631 = vmul.f32 %v630, %v297
    %v632 = vmul.f32 %v630, %v298
    %v633 = vlaneseq
    %v634 = vshrl.u32 %v633, 7
    %v635 = vsub.s32 1, %v634
    %v636 = vrot.slane %v333, %v635
    %v637 = vmul.f32 %v636, %v299
    %v638 = vmul.f32 %v636, %v300
    %v639 = vadd.f32 %v631, %v637
    %v640 = vadd.f32 %v632, %v638
    %v641 = vlaneseq
    %v642 = vshrl.u32 %v641, 7
    %v643 = vsub.s32 2, %v642
    %v644 = vrot.slane %v333, %v643
    %v645 = vmul.f32 %v644, %v301
    %v646 = vmul.f32 %v644, %v302
    %v647 = vadd.f32 %v639, %v645
    %v648 = vadd.f32 %v640, %v646
    %v649 = vlaneseq
    %v650 = vshrl.u32 %v649, 7
    %v651 = vsub.s32 3, %v650
    %v652 = vrot.slane %v333, %v651
    %v653 = vmul.f32 %v652, %v303
    %v654 = vmul.f32 %v652, %v304
    %v655 = vadd.f32 %v647, %v653
    %v656 = vadd.f32 %v648, %v654
    %v657 = vlaneseq
    %v658 = vshrl.u32 %v657, 7
    %v659 = vsub.s32 4, %v658
    %v660 = vrot.slane %v333, %v659
    %v661 = vmul.f32 %v660, %v305
    %v662 = vmul.f32 %v660, %v306
    %v663 = vadd.f32 %v655, %v661
    %v664 = vadd.f32 %v656, %v662
    %v665 = vlaneseq
    %v666 = vshrl.u32 %v665, 7
    %v667 = vsub.s32 5, %v666
    %v668 = vrot.slane %v333, %v667
    %v669 = vmul.f32 %v668, %v307
    %v670 = vmul.f32 %v668, %v308
    %v671 = vadd.f32 %v663, %v669
    %v672 = vadd.f32 %v664, %v670
    %v673 = vlaneseq
    %v674 = vshrl.u32 %v673, 7
    %v675 = vsub.s32 6, %v674
    %v676 = vrot.slane %v333, %v675
    %v677 = vmul.f32 %v676, %v309
    %v678 = vmul.f32 %v676, %v310
    %v679 = vadd.f32 %v671, %v677
    %v680 = vadd.f32 %v672, %v678
    %v681 = vlaneseq
    %v682 = vshrl.u32 %v681, 7
    %v683 = vsub.s32 7, %v682
    %v684 = vrot.slane %v333, %v683
    %v685 = vmul.f32 %v684, %v311
    %v686 = vmul.f32 %v684, %v312
    %v687 = vadd.f32 %v679, %v685
    %v688 = vadd.f32 %v680, %v686
    %v689 = vlaneseq
    %v690 = vshrl.u32 %v689, 7
    %v691 = vsub.s32 0, %v690
    %v692 = vrot.slane %v334, %v691
    %v693 = vmul.f32 %v692, %v313
    %v694 = vmul.f32 %v692, %v314
    %v695 = vadd.f32 %v687, %v693
    %v696 = vadd.f32 %v688, %v694
    %v697 = vlaneseq
    %v698 = vshrl.u32 %v697, 7
    %v699 = vsub.s32 1, %v698
    %v700 = vrot.slane %v334, %v699
    %v701 = vmul.f32 %v700, %v315
    %v702 = vmul.f32 %v700, %v316
    %v703 = vadd.f32 %v695, %v701
    %v704 = vadd.f32 %v696, %v702
    %v705 = vlaneseq
    %v706 = vshrl.u32 %v705, 7
    %v707 = vsub.s32 2, %v706
    %v708 = vrot.slane %v334, %v707
    %v709 = vmul.f32 %v708, %v317
    %v710 = vmul.f32 %v708, %v318
    %v711 = vadd.f32 %v703, %v709
    %v712 = vadd.f32 %v704, %v710
    %v713 = vlaneseq
    %v714 = vshrl.u32 %v713, 7
    %v715 = vsub.s32 3, %v714
    %v716 = vrot.slane %v334, %v715
    %v717 = vmul.f32 %v716, %v319
    %v718 = vmul.f32 %v716, %v320
    %v719 = vadd.f32 %v711, %v717
    %v720 = vadd.f32 %v712, %v718
    %v721 = vlaneseq
    %v722 = vshrl.u32 %v721, 7
    %v723 = vsub.s32 4, %v722
    %v724 = vrot.slane %v334, %v723
    %v725 = vmul.f32 %v724, %v321
    %v726 = vmul.f32 %v724, %v322
    %v727 = vadd.f32 %v719, %v725
    %v728 = vadd.f32 %v720, %v726
    %v729 = vlaneseq
    %v730 = vshrl.u32 %v729, 7
    %v731 = vsub.s32 5, %v730
    %v732 = vrot.slane %v334, %v731
    %v733 = vmul.f32 %v732, %v323
    %v734 = vmul.f32 %v732, %v324
    %v735 = vadd.f32 %v727, %v733
    %v736 = vadd.f32 %v728, %v734
    %v737 = vlaneseq
    %v738 = vshrl.u32 %v737, 7
    %v739 = vsub.s32 6, %v738
    %v740 = vrot.slane %v334, %v739
    %v741 = vmul.f32 %v740, %v325
    %v742 = vmul.f32 %v740, %v326
    %v743 = vadd.f32 %v735, %v741
    %v744 = vadd.f32 %v736, %v742
    %v745 = vlaneseq
    %v746 = vshrl.u32 %v745, 7
    %v747 = vsub.s32 7, %v746
    %v748 = vrot.slane %v334, %v747
    %v749 = vmul.f32 %v748, %v327
    %v750 = vmul.f32 %v748, %v328
    %v751 = vadd.f32 %v743, %v749
    %v752 = vadd.f32 %v744, %v750
    %s753 = scalar_lea.vmem [#allocation9], 32
    %v754 = vld [vmem:[%s753] sm:$0xff]
    %v755 = vld [vmem:[%s753 + $0x8] sm:$0xff]
    %v756 = vsub.f32 %v751, %v754
    %v757 = vsub.f32 %v752, %v755
    %s758 = scalar_lea.vmem [#allocation11], 32
    %759 = vst [vmem:[%s758] sm:$0xff] %v756
    %760 = vst [vmem:[%s758 + $0x8] sm:$0xff] %v757
    %v761 = vlaneseq
    %v762 = vshrl.u32 %v761, 7
    %v763 = vsub.s32 0, %v762
    %v764 = vrot.slane %v335, %v763
    %v765 = vmul.f32 %v764, %v297
    %v766 = vmul.f32 %v764, %v298
    %v767 = vlaneseq
    %v768 = vshrl.u32 %v767, 7
    %v769 = vsub.s32 1, %v768
    %v770 = vrot.slane %v335, %v769
    %v771 = vmul.f32 %v770, %v299
    %v772 = vmul.f32 %v770, %v300
    %v773 = vadd.f32 %v765, %v771
    %v774 = vadd.f32 %v766, %v772
    %v775 = vlaneseq
    %v776 = vshrl.u32 %v775, 7
    %v777 = vsub.s32 2, %v776
    %v778 = vrot.slane %v335, %v777
    %v779 = vmul.f32 %v778, %v301
    %v780 = vmul.f32 %v778, %v302
    %v781 = vadd.f32 %v773, %v779
    %v782 = vadd.f32 %v774, %v780
    %v783 = vlaneseq
    %v784 = vshrl.u32 %v783, 7
    %v785 = vsub.s32 3, %v784
    %v786 = vrot.slane %v335, %v785
    %v787 = vmul.f32 %v786, %v303
    %v788 = vmul.f32 %v786, %v304
    %v789 = vadd.f32 %v781, %v787
    %v790 = vadd.f32 %v782, %v788
    %v791 = vlaneseq
    %v792 = vshrl.u32 %v791, 7
    %v793 = vsub.s32 4, %v792
    %v794 = vrot.slane %v335, %v793
    %v795 = vmul.f32 %v794, %v305
    %v796 = vmul.f32 %v794, %v306
    %v797 = vadd.f32 %v789, %v795
    %v798 = vadd.f32 %v790, %v796
    %v799 = vlaneseq
    %v800 = vshrl.u32 %v799, 7
    %v801 = vsub.s32 5, %v800
    %v802 = vrot.slane %v335, %v801
    %v803 = vmul.f32 %v802, %v307
    %v804 = vmul.f32 %v802, %v308
    %v805 = vadd.f32 %v797, %v803
    %v806 = vadd.f32 %v798, %v804
    %v807 = vlaneseq
    %v808 = vshrl.u32 %v807, 7
    %v809 = vsub.s32 6, %v808
    %v810 = vrot.slane %v335, %v809
    %v811 = vmul.f32 %v810, %v309
    %v812 = vmul.f32 %v810, %v310
    %v813 = vadd.f32 %v805, %v811
    %v814 = vadd.f32 %v806, %v812
    %v815 = vlaneseq
    %v816 = vshrl.u32 %v815, 7
    %v817 = vsub.s32 7, %v816
    %v818 = vrot.slane %v335, %v817
    %v819 = vmul.f32 %v818, %v311
    %v820 = vmul.f32 %v818, %v312
    %v821 = vadd.f32 %v813, %v819
    %v822 = vadd.f32 %v814, %v820
    %v823 = vlaneseq
    %v824 = vshrl.u32 %v823, 7
    %v825 = vsub.s32 0, %v824
    %v826 = vrot.slane %v336, %v825
    %v827 = vmul.f32 %v826, %v313
    %v828 = vmul.f32 %v826, %v314
    %v829 = vadd.f32 %v821, %v827
    %v830 = vadd.f32 %v822, %v828
    %v831 = vlaneseq
    %v832 = vshrl.u32 %v831, 7
    %v833 = vsub.s32 1, %v832
    %v834 = vrot.slane %v336, %v833
    %v835 = vmul.f32 %v834, %v315
    %v836 = vmul.f32 %v834, %v316
    %v837 = vadd.f32 %v829, %v835
    %v838 = vadd.f32 %v830, %v836
    %v839 = vlaneseq
    %v840 = vshrl.u32 %v839, 7
    %v841 = vsub.s32 2, %v840
    %v842 = vrot.slane %v336, %v841
    %v843 = vmul.f32 %v842, %v317
    %v844 = vmul.f32 %v842, %v318
    %v845 = vadd.f32 %v837, %v843
    %v846 = vadd.f32 %v838, %v844
    %v847 = vlaneseq
    %v848 = vshrl.u32 %v847, 7
    %v849 = vsub.s32 3, %v848
    %v850 = vrot.slane %v336, %v849
    %v851 = vmul.f32 %v850, %v319
    %v852 = vmul.f32 %v850, %v320
    %v853 = vadd.f32 %v845, %v851
    %v854 = vadd.f32 %v846, %v852
    %v855 = vlaneseq
    %v856 = vshrl.u32 %v855, 7
    %v857 = vsub.s32 4, %v856
    %v858 = vrot.slane %v336, %v857
    %v859 = vmul.f32 %v858, %v321
    %v860 = vmul.f32 %v858, %v322
    %v861 = vadd.f32 %v853, %v859
    %v862 = vadd.f32 %v854, %v860
    %v863 = vlaneseq
    %v864 = vshrl.u32 %v863, 7
    %v865 = vsub.s32 5, %v864
    %v866 = vrot.slane %v336, %v865
    %v867 = vmul.f32 %v866, %v323
    %v868 = vmul.f32 %v866, %v324
    %v869 = vadd.f32 %v861, %v867
    %v870 = vadd.f32 %v862, %v868
    %v871 = vlaneseq
    %v872 = vshrl.u32 %v871, 7
    %v873 = vsub.s32 6, %v872
    %v874 = vrot.slane %v336, %v873
    %v875 = vmul.f32 %v874, %v325
    %v876 = vmul.f32 %v874, %v326
    %v877 = vadd.f32 %v869, %v875
    %v878 = vadd.f32 %v870, %v876
    %v879 = vlaneseq
    %v880 = vshrl.u32 %v879, 7
    %v881 = vsub.s32 7, %v880
    %v882 = vrot.slane %v336, %v881
    %v883 = vmul.f32 %v882, %v327
    %v884 = vmul.f32 %v882, %v328
    %v885 = vadd.f32 %v877, %v883
    %v886 = vadd.f32 %v878, %v884
    %s887 = scalar_lea.vmem [#allocation9], 48
    %v888 = vld [vmem:[%s887] sm:$0xff]
    %v889 = vld [vmem:[%s887 + $0x8] sm:$0xff]
    %v890 = vsub.f32 %v885, %v888
    %v891 = vsub.f32 %v886, %v889
    %s892 = scalar_lea.vmem [#allocation11], 48
    %893 = vst [vmem:[%s892] sm:$0xff] %v890
    %894 = vst [vmem:[%s892 + $0x8] sm:$0xff] %v891
    %v895 = vlaneseq
    %v896 = vshrl.u32 %v895, 7
    %v897 = vsub.s32 0, %v896
    %v898 = vrot.slane %v337, %v897
    %v899 = vmul.f32 %v898, %v297
    %v900 = vmul.f32 %v898, %v298
    %v901 = vlaneseq
    %v902 = vshrl.u32 %v901, 7
    %v903 = vsub.s32 1, %v902
    %v904 = vrot.slane %v337, %v903
    %v905 = vmul.f32 %v904, %v299
    %v906 = vmul.f32 %v904, %v300
    %v907 = vadd.f32 %v899, %v905
    %v908 = vadd.f32 %v900, %v906
    %v909 = vlaneseq
    %v910 = vshrl.u32 %v909, 7
    %v911 = vsub.s32 2, %v910
    %v912 = vrot.slane %v337, %v911
    %v913 = vmul.f32 %v912, %v301
    %v914 = vmul.f32 %v912, %v302
    %v915 = vadd.f32 %v907, %v913
    %v916 = vadd.f32 %v908, %v914
    %v917 = vlaneseq
    %v918 = vshrl.u32 %v917, 7
    %v919 = vsub.s32 3, %v918
    %v920 = vrot.slane %v337, %v919
    %v921 = vmul.f32 %v920, %v303
    %v922 = vmul.f32 %v920, %v304
    %v923 = vadd.f32 %v915, %v921
    %v924 = vadd.f32 %v916, %v922
    %v925 = vlaneseq
    %v926 = vshrl.u32 %v925, 7
    %v927 = vsub.s32 4, %v926
    %v928 = vrot.slane %v337, %v927
    %v929 = vmul.f32 %v928, %v305
    %v930 = vmul.f32 %v928, %v306
    %v931 = vadd.f32 %v923, %v929
    %v932 = vadd.f32 %v924, %v930
    %v933 = vlaneseq
    %v934 = vshrl.u32 %v933, 7
    %v935 = vsub.s32 5, %v934
    %v936 = vrot.slane %v337, %v935
    %v937 = vmul.f32 %v936, %v307
    %v938 = vmul.f32 %v936, %v308
    %v939 = vadd.f32 %v931, %v937
    %v940 = vadd.f32 %v932, %v938
    %v941 = vlaneseq
    %v942 = vshrl.u32 %v941, 7
    %v943 = vsub.s32 6, %v942
    %v944 = vrot.slane %v337, %v943
    %v945 = vmul.f32 %v944, %v309
    %v946 = vmul.f32 %v944, %v310
    %v947 = vadd.f32 %v939, %v945
    %v948 = vadd.f32 %v940, %v946
    %v949 = vlaneseq
    %v950 = vshrl.u32 %v949, 7
    %v951 = vsub.s32 7, %v950
    %v952 = vrot.slane %v337, %v951
    %v953 = vmul.f32 %v952, %v311
    %v954 = vmul.f32 %v952, %v312
    %v955 = vadd.f32 %v947, %v953
    %v956 = vadd.f32 %v948, %v954
    %v957 = vlaneseq
    %v958 = vshrl.u32 %v957, 7
    %v959 = vsub.s32 0, %v958
    %v960 = vrot.slane %v338, %v959
    %v961 = vmul.f32 %v960, %v313
    %v962 = vmul.f32 %v960, %v314
    %v963 = vadd.f32 %v955, %v961
    %v964 = vadd.f32 %v956, %v962
    %v965 = vlaneseq
    %v966 = vshrl.u32 %v965, 7
    %v967 = vsub.s32 1, %v966
    %v968 = vrot.slane %v338, %v967
    %v969 = vmul.f32 %v968, %v315
    %v970 = vmul.f32 %v968, %v316
    %v971 = vadd.f32 %v963, %v969
    %v972 = vadd.f32 %v964, %v970
    %v973 = vlaneseq
    %v974 = vshrl.u32 %v973, 7
    %v975 = vsub.s32 2, %v974
    %v976 = vrot.slane %v338, %v975
    %v977 = vmul.f32 %v976, %v317
    %v978 = vmul.f32 %v976, %v318
    %v979 = vadd.f32 %v971, %v977
    %v980 = vadd.f32 %v972, %v978
    %v981 = vlaneseq
    %v982 = vshrl.u32 %v981, 7
    %v983 = vsub.s32 3, %v982
    %v984 = vrot.slane %v338, %v983
    %v985 = vmul.f32 %v984, %v319
    %v986 = vmul.f32 %v984, %v320
    %v987 = vadd.f32 %v979, %v985
    %v988 = vadd.f32 %v980, %v986
    %v989 = vlaneseq
    %v990 = vshrl.u32 %v989, 7
    %v991 = vsub.s32 4, %v990
    %v992 = vrot.slane %v338, %v991
    %v993 = vmul.f32 %v992, %v321
    %v994 = vmul.f32 %v992, %v322
    %v995 = vadd.f32 %v987, %v993
    %v996 = vadd.f32 %v988, %v994
    %v997 = vlaneseq
    %v998 = vshrl.u32 %v997, 7
    %v999 = vsub.s32 5, %v998
    %v1000 = vrot.slane %v338, %v999
    %v1001 = vmul.f32 %v1000, %v323
    %v1002 = vmul.f32 %v1000, %v324
    %v1003 = vadd.f32 %v995, %v1001
    %v1004 = vadd.f32 %v996, %v1002
    %v1005 = vlaneseq
    %v1006 = vshrl.u32 %v1005, 7
    %v1007 = vsub.s32 6, %v1006
    %v1008 = vrot.slane %v338, %v1007
    %v1009 = vmul.f32 %v1008, %v325
    %v1010 = vmul.f32 %v1008, %v326
    %v1011 = vadd.f32 %v1003, %v1009
    %v1012 = vadd.f32 %v1004, %v1010
    %v1013 = vlaneseq
    %v1014 = vshrl.u32 %v1013, 7
    %v1015 = vsub.s32 7, %v1014
    %v1016 = vrot.slane %v338, %v1015
    %v1017 = vmul.f32 %v1016, %v327
    %v1018 = vmul.f32 %v1016, %v328
    %v1019 = vadd.f32 %v1011, %v1017
    %v1020 = vadd.f32 %v1012, %v1018
    %s1021 = scalar_lea.vmem [#allocation9], 64
    %v1022 = vld [vmem:[%s1021] sm:$0xff]
    %v1023 = vld [vmem:[%s1021 + $0x8] sm:$0xff]
    %v1024 = vsub.f32 %v1019, %v1022
    %v1025 = vsub.f32 %v1020, %v1023
    %s1026 = scalar_lea.vmem [#allocation11], 64
    %1027 = vst [vmem:[%s1026] sm:$0xff] %v1024
    %1028 = vst [vmem:[%s1026 + $0x8] sm:$0xff] %v1025
    %v1029 = vlaneseq
    %v1030 = vshrl.u32 %v1029, 7
    %v1031 = vsub.s32 0, %v1030
    %v1032 = vrot.slane %v339, %v1031
    %v1033 = vmul.f32 %v1032, %v297
    %v1034 = vmul.f32 %v1032, %v298
    %v1035 = vlaneseq
    %v1036 = vshrl.u32 %v1035, 7
    %v1037 = vsub.s32 1, %v1036
    %v1038 = vrot.slane %v339, %v1037
    %v1039 = vmul.f32 %v1038, %v299
    %v1040 = vmul.f32 %v1038, %v300
    %v1041 = vadd.f32 %v1033, %v1039
    %v1042 = vadd.f32 %v1034, %v1040
    %v1043 = vlaneseq
    %v1044 = vshrl.u32 %v1043, 7
    %v1045 = vsub.s32 2, %v1044
    %v1046 = vrot.slane %v339, %v1045
    %v1047 = vmul.f32 %v1046, %v301
    %v1048 = vmul.f32 %v1046, %v302
    %v1049 = vadd.f32 %v1041, %v1047
    %v1050 = vadd.f32 %v1042, %v1048
    %v1051 = vlaneseq
    %v1052 = vshrl.u32 %v1051, 7
    %v1053 = vsub.s32 3, %v1052
    %v1054 = vrot.slane %v339, %v1053
    %v1055 = vmul.f32 %v1054, %v303
    %v1056 = vmul.f32 %v1054, %v304
    %v1057 = vadd.f32 %v1049, %v1055
    %v1058 = vadd.f32 %v1050, %v1056
    %v1059 = vlaneseq
    %v1060 = vshrl.u32 %v1059, 7
    %v1061 = vsub.s32 4, %v1060
    %v1062 = vrot.slane %v339, %v1061
    %v1063 = vmul.f32 %v1062, %v305
    %v1064 = vmul.f32 %v1062, %v306
    %v1065 = vadd.f32 %v1057, %v1063
    %v1066 = vadd.f32 %v1058, %v1064
    %v1067 = vlaneseq
    %v1068 = vshrl.u32 %v1067, 7
    %v1069 = vsub.s32 5, %v1068
    %v1070 = vrot.slane %v339, %v1069
    %v1071 = vmul.f32 %v1070, %v307
    %v1072 = vmul.f32 %v1070, %v308
    %v1073 = vadd.f32 %v1065, %v1071
    %v1074 = vadd.f32 %v1066, %v1072
    %v1075 = vlaneseq
    %v1076 = vshrl.u32 %v1075, 7
    %v1077 = vsub.s32 6, %v1076
    %v1078 = vrot.slane %v339, %v1077
    %v1079 = vmul.f32 %v1078, %v309
    %v1080 = vmul.f32 %v1078, %v310
    %v1081 = vadd.f32 %v1073, %v1079
    %v1082 = vadd.f32 %v1074, %v1080
    %v1083 = vlaneseq
    %v1084 = vshrl.u32 %v1083, 7
    %v1085 = vsub.s32 7, %v1084
    %v1086 = vrot.slane %v339, %v1085
    %v1087 = vmul.f32 %v1086, %v311
    %v1088 = vmul.f32 %v1086, %v312
    %v1089 = vadd.f32 %v1081, %v1087
    %v1090 = vadd.f32 %v1082, %v1088
    %v1091 = vlaneseq
    %v1092 = vshrl.u32 %v1091, 7
    %v1093 = vsub.s32 0, %v1092
    %v1094 = vrot.slane %v340, %v1093
    %v1095 = vmul.f32 %v1094, %v313
    %v1096 = vmul.f32 %v1094, %v314
    %v1097 = vadd.f32 %v1089, %v1095
    %v1098 = vadd.f32 %v1090, %v1096
    %v1099 = vlaneseq
    %v1100 = vshrl.u32 %v1099, 7
    %v1101 = vsub.s32 1, %v1100
    %v1102 = vrot.slane %v340, %v1101
    %v1103 = vmul.f32 %v1102, %v315
    %v1104 = vmul.f32 %v1102, %v316
    %v1105 = vadd.f32 %v1097, %v1103
    %v1106 = vadd.f32 %v1098, %v1104
    %v1107 = vlaneseq
    %v1108 = vshrl.u32 %v1107, 7
    %v1109 = vsub.s32 2, %v1108
    %v1110 = vrot.slane %v340, %v1109
    %v1111 = vmul.f32 %v1110, %v317
    %v1112 = vmul.f32 %v1110, %v318
    %v1113 = vadd.f32 %v1105, %v1111
    %v1114 = vadd.f32 %v1106, %v1112
    %v1115 = vlaneseq
    %v1116 = vshrl.u32 %v1115, 7
    %v1117 = vsub.s32 3, %v1116
    %v1118 = vrot.slane %v340, %v1117
    %v1119 = vmul.f32 %v1118, %v319
    %v1120 = vmul.f32 %v1118, %v320
    %v1121 = vadd.f32 %v1113, %v1119
    %v1122 = vadd.f32 %v1114, %v1120
    %v1123 = vlaneseq
    %v1124 = vshrl.u32 %v1123, 7
    %v1125 = vsub.s32 4, %v1124
    %v1126 = vrot.slane %v340, %v1125
    %v1127 = vmul.f32 %v1126, %v321
    %v1128 = vmul.f32 %v1126, %v322
    %v1129 = vadd.f32 %v1121, %v1127
    %v1130 = vadd.f32 %v1122, %v1128
    %v1131 = vlaneseq
    %v1132 = vshrl.u32 %v1131, 7
    %v1133 = vsub.s32 5, %v1132
    %v1134 = vrot.slane %v340, %v1133
    %v1135 = vmul.f32 %v1134, %v323
    %v1136 = vmul.f32 %v1134, %v324
    %v1137 = vadd.f32 %v1129, %v1135
    %v1138 = vadd.f32 %v1130, %v1136
    %v1139 = vlaneseq
    %v1140 = vshrl.u32 %v1139, 7
    %v1141 = vsub.s32 6, %v1140
    %v1142 = vrot.slane %v340, %v1141
    %v1143 = vmul.f32 %v1142, %v325
    %v1144 = vmul.f32 %v1142, %v326
    %v1145 = vadd.f32 %v1137, %v1143
    %v1146 = vadd.f32 %v1138, %v1144
    %v1147 = vlaneseq
    %v1148 = vshrl.u32 %v1147, 7
    %v1149 = vsub.s32 7, %v1148
    %v1150 = vrot.slane %v340, %v1149
    %v1151 = vmul.f32 %v1150, %v327
    %v1152 = vmul.f32 %v1150, %v328
    %v1153 = vadd.f32 %v1145, %v1151
    %v1154 = vadd.f32 %v1146, %v1152
    %s1155 = scalar_lea.vmem [#allocation9], 80
    %v1156 = vld [vmem:[%s1155] sm:$0xff]
    %v1157 = vld [vmem:[%s1155 + $0x8] sm:$0xff]
    %v1158 = vsub.f32 %v1153, %v1156
    %v1159 = vsub.f32 %v1154, %v1157
    %s1160 = scalar_lea.vmem [#allocation11], 80
    %1161 = vst [vmem:[%s1160] sm:$0xff] %v1158
    %1162 = vst [vmem:[%s1160 + $0x8] sm:$0xff] %v1159
    %v1163 = vlaneseq
    %v1164 = vshrl.u32 %v1163, 7
    %v1165 = vsub.s32 0, %v1164
    %v1166 = vrot.slane %v341, %v1165
    %v1167 = vmul.f32 %v1166, %v297
    %v1168 = vmul.f32 %v1166, %v298
    %v1169 = vlaneseq
    %v1170 = vshrl.u32 %v1169, 7
    %v1171 = vsub.s32 1, %v1170
    %v1172 = vrot.slane %v341, %v1171
    %v1173 = vmul.f32 %v1172, %v299
    %v1174 = vmul.f32 %v1172, %v300
    %v1175 = vadd.f32 %v1167, %v1173
    %v1176 = vadd.f32 %v1168, %v1174
    %v1177 = vlaneseq
    %v1178 = vshrl.u32 %v1177, 7
    %v1179 = vsub.s32 2, %v1178
    %v1180 = vrot.slane %v341, %v1179
    %v1181 = vmul.f32 %v1180, %v301
    %v1182 = vmul.f32 %v1180, %v302
    %v1183 = vadd.f32 %v1175, %v1181
    %v1184 = vadd.f32 %v1176, %v1182
    %v1185 = vlaneseq
    %v1186 = vshrl.u32 %v1185, 7
    %v1187 = vsub.s32 3, %v1186
    %v1188 = vrot.slane %v341, %v1187
    %v1189 = vmul.f32 %v1188, %v303
    %v1190 = vmul.f32 %v1188, %v304
    %v1191 = vadd.f32 %v1183, %v1189
    %v1192 = vadd.f32 %v1184, %v1190
    %v1193 = vlaneseq
    %v1194 = vshrl.u32 %v1193, 7
    %v1195 = vsub.s32 4, %v1194
    %v1196 = vrot.slane %v341, %v1195
    %v1197 = vmul.f32 %v1196, %v305
    %v1198 = vmul.f32 %v1196, %v306
    %v1199 = vadd.f32 %v1191, %v1197
    %v1200 = vadd.f32 %v1192, %v1198
    %v1201 = vlaneseq
    %v1202 = vshrl.u32 %v1201, 7
    %v1203 = vsub.s32 5, %v1202
    %v1204 = vrot.slane %v341, %v1203
    %v1205 = vmul.f32 %v1204, %v307
    %v1206 = vmul.f32 %v1204, %v308
    %v1207 = vadd.f32 %v1199, %v1205
    %v1208 = vadd.f32 %v1200, %v1206
    %v1209 = vlaneseq
    %v1210 = vshrl.u32 %v1209, 7
    %v1211 = vsub.s32 6, %v1210
    %v1212 = vrot.slane %v341, %v1211
    %v1213 = vmul.f32 %v1212, %v309
    %v1214 = vmul.f32 %v1212, %v310
    %v1215 = vadd.f32 %v1207, %v1213
    %v1216 = vadd.f32 %v1208, %v1214
    %v1217 = vlaneseq
    %v1218 = vshrl.u32 %v1217, 7
    %v1219 = vsub.s32 7, %v1218
    %v1220 = vrot.slane %v341, %v1219
    %v1221 = vmul.f32 %v1220, %v311
    %v1222 = vmul.f32 %v1220, %v312
    %v1223 = vadd.f32 %v1215, %v1221
    %v1224 = vadd.f32 %v1216, %v1222
    %v1225 = vlaneseq
    %v1226 = vshrl.u32 %v1225, 7
    %v1227 = vsub.s32 0, %v1226
    %v1228 = vrot.slane %v342, %v1227
    %v1229 = vmul.f32 %v1228, %v313
    %v1230 = vmul.f32 %v1228, %v314
    %v1231 = vadd.f32 %v1223, %v1229
    %v1232 = vadd.f32 %v1224, %v1230
    %v1233 = vlaneseq
    %v1234 = vshrl.u32 %v1233, 7
    %v1235 = vsub.s32 1, %v1234
    %v1236 = vrot.slane %v342, %v1235
    %v1237 = vmul.f32 %v1236, %v315
    %v1238 = vmul.f32 %v1236, %v316
    %v1239 = vadd.f32 %v1231, %v1237
    %v1240 = vadd.f32 %v1232, %v1238
    %v1241 = vlaneseq
    %v1242 = vshrl.u32 %v1241, 7
    %v1243 = vsub.s32 2, %v1242
    %v1244 = vrot.slane %v342, %v1243
    %v1245 = vmul.f32 %v1244, %v317
    %v1246 = vmul.f32 %v1244, %v318
    %v1247 = vadd.f32 %v1239, %v1245
    %v1248 = vadd.f32 %v1240, %v1246
    %v1249 = vlaneseq
    %v1250 = vshrl.u32 %v1249, 7
    %v1251 = vsub.s32 3, %v1250
    %v1252 = vrot.slane %v342, %v1251
    %v1253 = vmul.f32 %v1252, %v319
    %v1254 = vmul.f32 %v1252, %v320
    %v1255 = vadd.f32 %v1247, %v1253
    %v1256 = vadd.f32 %v1248, %v1254
    %v1257 = vlaneseq
    %v1258 = vshrl.u32 %v1257, 7
    %v1259 = vsub.s32 4, %v1258
    %v1260 = vrot.slane %v342, %v1259
    %v1261 = vmul.f32 %v1260, %v321
    %v1262 = vmul.f32 %v1260, %v322
    %v1263 = vadd.f32 %v1255, %v1261
    %v1264 = vadd.f32 %v1256, %v1262
    %v1265 = vlaneseq
    %v1266 = vshrl.u32 %v1265, 7
    %v1267 = vsub.s32 5, %v1266
    %v1268 = vrot.slane %v342, %v1267
    %v1269 = vmul.f32 %v1268, %v323
    %v1270 = vmul.f32 %v1268, %v324
    %v1271 = vadd.f32 %v1263, %v1269
    %v1272 = vadd.f32 %v1264, %v1270
    %v1273 = vlaneseq
    %v1274 = vshrl.u32 %v1273, 7
    %v1275 = vsub.s32 6, %v1274
    %v1276 = vrot.slane %v342, %v1275
    %v1277 = vmul.f32 %v1276, %v325
    %v1278 = vmul.f32 %v1276, %v326
    %v1279 = vadd.f32 %v1271, %v1277
    %v1280 = vadd.f32 %v1272, %v1278
    %v1281 = vlaneseq
    %v1282 = vshrl.u32 %v1281, 7
    %v1283 = vsub.s32 7, %v1282
    %v1284 = vrot.slane %v342, %v1283
    %v1285 = vmul.f32 %v1284, %v327
    %v1286 = vmul.f32 %v1284, %v328
    %v1287 = vadd.f32 %v1279, %v1285
    %v1288 = vadd.f32 %v1280, %v1286
    %s1289 = scalar_lea.vmem [#allocation9], 96
    %v1290 = vld [vmem:[%s1289] sm:$0xff]
    %v1291 = vld [vmem:[%s1289 + $0x8] sm:$0xff]
    %v1292 = vsub.f32 %v1287, %v1290
    %v1293 = vsub.f32 %v1288, %v1291
    %s1294 = scalar_lea.vmem [#allocation11], 96
    %1295 = vst [vmem:[%s1294] sm:$0xff] %v1292
    %1296 = vst [vmem:[%s1294 + $0x8] sm:$0xff] %v1293
    %v1297 = vlaneseq
    %v1298 = vshrl.u32 %v1297, 7
    %v1299 = vsub.s32 0, %v1298
    %v1300 = vrot.slane %v343, %v1299
    %v1301 = vmul.f32 %v1300, %v297
    %v1302 = vmul.f32 %v1300, %v298
    %v1303 = vlaneseq
    %v1304 = vshrl.u32 %v1303, 7
    %v1305 = vsub.s32 1, %v1304
    %v1306 = vrot.slane %v343, %v1305
    %v1307 = vmul.f32 %v1306, %v299
    %v1308 = vmul.f32 %v1306, %v300
    %v1309 = vadd.f32 %v1301, %v1307
    %v1310 = vadd.f32 %v1302, %v1308
    %v1311 = vlaneseq
    %v1312 = vshrl.u32 %v1311, 7
    %v1313 = vsub.s32 2, %v1312
    %v1314 = vrot.slane %v343, %v1313
    %v1315 = vmul.f32 %v1314, %v301
    %v1316 = vmul.f32 %v1314, %v302
    %v1317 = vadd.f32 %v1309, %v1315
    %v1318 = vadd.f32 %v1310, %v1316
    %v1319 = vlaneseq
    %v1320 = vshrl.u32 %v1319, 7
    %v1321 = vsub.s32 3, %v1320
    %v1322 = vrot.slane %v343, %v1321
    %v1323 = vmul.f32 %v1322, %v303
    %v1324 = vmul.f32 %v1322, %v304
    %v1325 = vadd.f32 %v1317, %v1323
    %v1326 = vadd.f32 %v1318, %v1324
    %v1327 = vlaneseq
    %v1328 = vshrl.u32 %v1327, 7
    %v1329 = vsub.s32 4, %v1328
    %v1330 = vrot.slane %v343, %v1329
    %v1331 = vmul.f32 %v1330, %v305
    %v1332 = vmul.f32 %v1330, %v306
    %v1333 = vadd.f32 %v1325, %v1331
    %v1334 = vadd.f32 %v1326, %v1332
    %v1335 = vlaneseq
    %v1336 = vshrl.u32 %v1335, 7
    %v1337 = vsub.s32 5, %v1336
    %v1338 = vrot.slane %v343, %v1337
    %v1339 = vmul.f32 %v1338, %v307
    %v1340 = vmul.f32 %v1338, %v308
    %v1341 = vadd.f32 %v1333, %v1339
    %v1342 = vadd.f32 %v1334, %v1340
    %v1343 = vlaneseq
    %v1344 = vshrl.u32 %v1343, 7
    %v1345 = vsub.s32 6, %v1344
    %v1346 = vrot.slane %v343, %v1345
    %v1347 = vmul.f32 %v1346, %v309
    %v1348 = vmul.f32 %v1346, %v310
    %v1349 = vadd.f32 %v1341, %v1347
    %v1350 = vadd.f32 %v1342, %v1348
    %v1351 = vlaneseq
    %v1352 = vshrl.u32 %v1351, 7
    %v1353 = vsub.s32 7, %v1352
    %v1354 = vrot.slane %v343, %v1353
    %v1355 = vmul.f32 %v1354, %v311
    %v1356 = vmul.f32 %v1354, %v312
    %v1357 = vadd.f32 %v1349, %v1355
    %v1358 = vadd.f32 %v1350, %v1356
    %v1359 = vlaneseq
    %v1360 = vshrl.u32 %v1359, 7
    %v1361 = vsub.s32 0, %v1360
    %v1362 = vrot.slane %v344, %v1361
    %v1363 = vmul.f32 %v1362, %v313
    %v1364 = vmul.f32 %v1362, %v314
    %v1365 = vadd.f32 %v1357, %v1363
    %v1366 = vadd.f32 %v1358, %v1364
    %v1367 = vlaneseq
    %v1368 = vshrl.u32 %v1367, 7
    %v1369 = vsub.s32 1, %v1368
    %v1370 = vrot.slane %v344, %v1369
    %v1371 = vmul.f32 %v1370, %v315
    %v1372 = vmul.f32 %v1370, %v316
    %v1373 = vadd.f32 %v1365, %v1371
    %v1374 = vadd.f32 %v1366, %v1372
    %v1375 = vlaneseq
    %v1376 = vshrl.u32 %v1375, 7
    %v1377 = vsub.s32 2, %v1376
    %v1378 = vrot.slane %v344, %v1377
    %v1379 = vmul.f32 %v1378, %v317
    %v1380 = vmul.f32 %v1378, %v318
    %v1381 = vadd.f32 %v1373, %v1379
    %v1382 = vadd.f32 %v1374, %v1380
    %v1383 = vlaneseq
    %v1384 = vshrl.u32 %v1383, 7
    %v1385 = vsub.s32 3, %v1384
    %v1386 = vrot.slane %v344, %v1385
    %v1387 = vmul.f32 %v1386, %v319
    %v1388 = vmul.f32 %v1386, %v320
    %v1389 = vadd.f32 %v1381, %v1387
    %v1390 = vadd.f32 %v1382, %v1388
    %v1391 = vlaneseq
    %v1392 = vshrl.u32 %v1391, 7
    %v1393 = vsub.s32 4, %v1392
    %v1394 = vrot.slane %v344, %v1393
    %v1395 = vmul.f32 %v1394, %v321
    %v1396 = vmul.f32 %v1394, %v322
    %v1397 = vadd.f32 %v1389, %v1395
    %v1398 = vadd.f32 %v1390, %v1396
    %v1399 = vlaneseq
    %v1400 = vshrl.u32 %v1399, 7
    %v1401 = vsub.s32 5, %v1400
    %v1402 = vrot.slane %v344, %v1401
    %v1403 = vmul.f32 %v1402, %v323
    %v1404 = vmul.f32 %v1402, %v324
    %v1405 = vadd.f32 %v1397, %v1403
    %v1406 = vadd.f32 %v1398, %v1404
    %v1407 = vlaneseq
    %v1408 = vshrl.u32 %v1407, 7
    %v1409 = vsub.s32 6, %v1408
    %v1410 = vrot.slane %v344, %v1409
    %v1411 = vmul.f32 %v1410, %v325
    %v1412 = vmul.f32 %v1410, %v326
    %v1413 = vadd.f32 %v1405, %v1411
    %v1414 = vadd.f32 %v1406, %v1412
    %v1415 = vlaneseq
    %v1416 = vshrl.u32 %v1415, 7
    %v1417 = vsub.s32 7, %v1416
    %v1418 = vrot.slane %v344, %v1417
    %v1419 = vmul.f32 %v1418, %v327
    %v1420 = vmul.f32 %v1418, %v328
    %v1421 = vadd.f32 %v1413, %v1419
    %v1422 = vadd.f32 %v1414, %v1420
    %s1423 = scalar_lea.vmem [#allocation9], 112
    %v1424 = vld [vmem:[%s1423] sm:$0xff]
    %v1425 = vld [vmem:[%s1423 + $0x8] sm:$0xff]
    %v1426 = vsub.f32 %v1421, %v1424
    %v1427 = vsub.f32 %v1422, %v1425
    %s1428 = scalar_lea.vmem [#allocation11], 112
    %1429 = vst [vmem:[%s1428] sm:$0xff] %v1426
    %1430 = vst [vmem:[%s1428 + $0x8] sm:$0xff] %v1427
    %v1431 = vlaneseq
    %v1432 = vshrl.u32 %v1431, 7
    %v1433 = vsub.s32 0, %v1432
    %v1434 = vrot.slane %v345, %v1433
    %v1435 = vmul.f32 %v1434, %v297
    %v1436 = vmul.f32 %v1434, %v298
    %v1437 = vlaneseq
    %v1438 = vshrl.u32 %v1437, 7
    %v1439 = vsub.s32 1, %v1438
    %v1440 = vrot.slane %v345, %v1439
    %v1441 = vmul.f32 %v1440, %v299
    %v1442 = vmul.f32 %v1440, %v300
    %v1443 = vadd.f32 %v1435, %v1441
    %v1444 = vadd.f32 %v1436, %v1442
    %v1445 = vlaneseq
    %v1446 = vshrl.u32 %v1445, 7
    %v1447 = vsub.s32 2, %v1446
    %v1448 = vrot.slane %v345, %v1447
    %v1449 = vmul.f32 %v1448, %v301
    %v1450 = vmul.f32 %v1448, %v302
    %v1451 = vadd.f32 %v1443, %v1449
    %v1452 = vadd.f32 %v1444, %v1450
    %v1453 = vlaneseq
    %v1454 = vshrl.u32 %v1453, 7
    %v1455 = vsub.s32 3, %v1454
    %v1456 = vrot.slane %v345, %v1455
    %v1457 = vmul.f32 %v1456, %v303
    %v1458 = vmul.f32 %v1456, %v304
    %v1459 = vadd.f32 %v1451, %v1457
    %v1460 = vadd.f32 %v1452, %v1458
    %v1461 = vlaneseq
    %v1462 = vshrl.u32 %v1461, 7
    %v1463 = vsub.s32 4, %v1462
    %v1464 = vrot.slane %v345, %v1463
    %v1465 = vmul.f32 %v1464, %v305
    %v1466 = vmul.f32 %v1464, %v306
    %v1467 = vadd.f32 %v1459, %v1465
    %v1468 = vadd.f32 %v1460, %v1466
    %v1469 = vlaneseq
    %v1470 = vshrl.u32 %v1469, 7
    %v1471 = vsub.s32 5, %v1470
    %v1472 = vrot.slane %v345, %v1471
    %v1473 = vmul.f32 %v1472, %v307
    %v1474 = vmul.f32 %v1472, %v308
    %v1475 = vadd.f32 %v1467, %v1473
    %v1476 = vadd.f32 %v1468, %v1474
    %v1477 = vlaneseq
    %v1478 = vshrl.u32 %v1477, 7
    %v1479 = vsub.s32 6, %v1478
    %v1480 = vrot.slane %v345, %v1479
    %v1481 = vmul.f32 %v1480, %v309
    %v1482 = vmul.f32 %v1480, %v310
    %v1483 = vadd.f32 %v1475, %v1481
    %v1484 = vadd.f32 %v1476, %v1482
    %v1485 = vlaneseq
    %v1486 = vshrl.u32 %v1485, 7
    %v1487 = vsub.s32 7, %v1486
    %v1488 = vrot.slane %v345, %v1487
    %v1489 = vmul.f32 %v1488, %v311
    %v1490 = vmul.f32 %v1488, %v312
    %v1491 = vadd.f32 %v1483, %v1489
    %v1492 = vadd.f32 %v1484, %v1490
    %v1493 = vlaneseq
    %v1494 = vshrl.u32 %v1493, 7
    %v1495 = vsub.s32 0, %v1494
    %v1496 = vrot.slane %v346, %v1495
    %v1497 = vmul.f32 %v1496, %v313
    %v1498 = vmul.f32 %v1496, %v314
    %v1499 = vadd.f32 %v1491, %v1497
    %v1500 = vadd.f32 %v1492, %v1498
    %v1501 = vlaneseq
    %v1502 = vshrl.u32 %v1501, 7
    %v1503 = vsub.s32 1, %v1502
    %v1504 = vrot.slane %v346, %v1503
    %v1505 = vmul.f32 %v1504, %v315
    %v1506 = vmul.f32 %v1504, %v316
    %v1507 = vadd.f32 %v1499, %v1505
    %v1508 = vadd.f32 %v1500, %v1506
    %v1509 = vlaneseq
    %v1510 = vshrl.u32 %v1509, 7
    %v1511 = vsub.s32 2, %v1510
    %v1512 = vrot.slane %v346, %v1511
    %v1513 = vmul.f32 %v1512, %v317
    %v1514 = vmul.f32 %v1512, %v318
    %v1515 = vadd.f32 %v1507, %v1513
    %v1516 = vadd.f32 %v1508, %v1514
    %v1517 = vlaneseq
    %v1518 = vshrl.u32 %v1517, 7
    %v1519 = vsub.s32 3, %v1518
    %v1520 = vrot.slane %v346, %v1519
    %v1521 = vmul.f32 %v1520, %v319
    %v1522 = vmul.f32 %v1520, %v320
    %v1523 = vadd.f32 %v1515, %v1521
    %v1524 = vadd.f32 %v1516, %v1522
    %v1525 = vlaneseq
    %v1526 = vshrl.u32 %v1525, 7
    %v1527 = vsub.s32 4, %v1526
    %v1528 = vrot.slane %v346, %v1527
    %v1529 = vmul.f32 %v1528, %v321
    %v1530 = vmul.f32 %v1528, %v322
    %v1531 = vadd.f32 %v1523, %v1529
    %v1532 = vadd.f32 %v1524, %v1530
    %v1533 = vlaneseq
    %v1534 = vshrl.u32 %v1533, 7
    %v1535 = vsub.s32 5, %v1534
    %v1536 = vrot.slane %v346, %v1535
    %v1537 = vmul.f32 %v1536, %v323
    %v1538 = vmul.f32 %v1536, %v324
    %v1539 = vadd.f32 %v1531, %v1537
    %v1540 = vadd.f32 %v1532, %v1538
    %v1541 = vlaneseq
    %v1542 = vshrl.u32 %v1541, 7
    %v1543 = vsub.s32 6, %v1542
    %v1544 = vrot.slane %v346, %v1543
    %v1545 = vmul.f32 %v1544, %v325
    %v1546 = vmul.f32 %v1544, %v326
    %v1547 = vadd.f32 %v1539, %v1545
    %v1548 = vadd.f32 %v1540, %v1546
    %v1549 = vlaneseq
    %v1550 = vshrl.u32 %v1549, 7
    %v1551 = vsub.s32 7, %v1550
    %v1552 = vrot.slane %v346, %v1551
    %v1553 = vmul.f32 %v1552, %v327
    %v1554 = vmul.f32 %v1552, %v328
    %v1555 = vadd.f32 %v1547, %v1553
    %v1556 = vadd.f32 %v1548, %v1554
    %s1557 = scalar_lea.vmem [#allocation9], 128
    %v1558 = vld [vmem:[%s1557] sm:$0xff]
    %v1559 = vld [vmem:[%s1557 + $0x8] sm:$0xff]
    %v1560 = vsub.f32 %v1555, %v1558
    %v1561 = vsub.f32 %v1556, %v1559
    %s1562 = scalar_lea.vmem [#allocation11], 128
    %1563 = vst [vmem:[%s1562] sm:$0xff] %v1560
    %1564 = vst [vmem:[%s1562 + $0x8] sm:$0xff] %v1561
    %v1565 = vlaneseq
    %v1566 = vshrl.u32 %v1565, 7
    %v1567 = vsub.s32 0, %v1566
    %v1568 = vrot.slane %v347, %v1567
    %v1569 = vmul.f32 %v1568, %v297
    %v1570 = vmul.f32 %v1568, %v298
    %v1571 = vlaneseq
    %v1572 = vshrl.u32 %v1571, 7
    %v1573 = vsub.s32 1, %v1572
    %v1574 = vrot.slane %v347, %v1573
    %v1575 = vmul.f32 %v1574, %v299
    %v1576 = vmul.f32 %v1574, %v300
    %v1577 = vadd.f32 %v1569, %v1575
    %v1578 = vadd.f32 %v1570, %v1576
    %v1579 = vlaneseq
    %v1580 = vshrl.u32 %v1579, 7
    %v1581 = vsub.s32 2, %v1580
    %v1582 = vrot.slane %v347, %v1581
    %v1583 = vmul.f32 %v1582, %v301
    %v1584 = vmul.f32 %v1582, %v302
    %v1585 = vadd.f32 %v1577, %v1583
    %v1586 = vadd.f32 %v1578, %v1584
    %v1587 = vlaneseq
    %v1588 = vshrl.u32 %v1587, 7
    %v1589 = vsub.s32 3, %v1588
    %v1590 = vrot.slane %v347, %v1589
    %v1591 = vmul.f32 %v1590, %v303
    %v1592 = vmul.f32 %v1590, %v304
    %v1593 = vadd.f32 %v1585, %v1591
    %v1594 = vadd.f32 %v1586, %v1592
    %v1595 = vlaneseq
    %v1596 = vshrl.u32 %v1595, 7
    %v1597 = vsub.s32 4, %v1596
    %v1598 = vrot.slane %v347, %v1597
    %v1599 = vmul.f32 %v1598, %v305
    %v1600 = vmul.f32 %v1598, %v306
    %v1601 = vadd.f32 %v1593, %v1599
    %v1602 = vadd.f32 %v1594, %v1600
    %v1603 = vlaneseq
    %v1604 = vshrl.u32 %v1603, 7
    %v1605 = vsub.s32 5, %v1604
    %v1606 = vrot.slane %v347, %v1605
    %v1607 = vmul.f32 %v1606, %v307
    %v1608 = vmul.f32 %v1606, %v308
    %v1609 = vadd.f32 %v1601, %v1607
    %v1610 = vadd.f32 %v1602, %v1608
    %v1611 = vlaneseq
    %v1612 = vshrl.u32 %v1611, 7
    %v1613 = vsub.s32 6, %v1612
    %v1614 = vrot.slane %v347, %v1613
    %v1615 = vmul.f32 %v1614, %v309
    %v1616 = vmul.f32 %v1614, %v310
    %v1617 = vadd.f32 %v1609, %v1615
    %v1618 = vadd.f32 %v1610, %v1616
    %v1619 = vlaneseq
    %v1620 = vshrl.u32 %v1619, 7
    %v1621 = vsub.s32 7, %v1620
    %v1622 = vrot.slane %v347, %v1621
    %v1623 = vmul.f32 %v1622, %v311
    %v1624 = vmul.f32 %v1622, %v312
    %v1625 = vadd.f32 %v1617, %v1623
    %v1626 = vadd.f32 %v1618, %v1624
    %v1627 = vlaneseq
    %v1628 = vshrl.u32 %v1627, 7
    %v1629 = vsub.s32 0, %v1628
    %v1630 = vrot.slane %v348, %v1629
    %v1631 = vmul.f32 %v1630, %v313
    %v1632 = vmul.f32 %v1630, %v314
    %v1633 = vadd.f32 %v1625, %v1631
    %v1634 = vadd.f32 %v1626, %v1632
    %v1635 = vlaneseq
    %v1636 = vshrl.u32 %v1635, 7
    %v1637 = vsub.s32 1, %v1636
    %v1638 = vrot.slane %v348, %v1637
    %v1639 = vmul.f32 %v1638, %v315
    %v1640 = vmul.f32 %v1638, %v316
    %v1641 = vadd.f32 %v1633, %v1639
    %v1642 = vadd.f32 %v1634, %v1640
    %v1643 = vlaneseq
    %v1644 = vshrl.u32 %v1643, 7
    %v1645 = vsub.s32 2, %v1644
    %v1646 = vrot.slane %v348, %v1645
    %v1647 = vmul.f32 %v1646, %v317
    %v1648 = vmul.f32 %v1646, %v318
    %v1649 = vadd.f32 %v1641, %v1647
    %v1650 = vadd.f32 %v1642, %v1648
    %v1651 = vlaneseq
    %v1652 = vshrl.u32 %v1651, 7
    %v1653 = vsub.s32 3, %v1652
    %v1654 = vrot.slane %v348, %v1653
    %v1655 = vmul.f32 %v1654, %v319
    %v1656 = vmul.f32 %v1654, %v320
    %v1657 = vadd.f32 %v1649, %v1655
    %v1658 = vadd.f32 %v1650, %v1656
    %v1659 = vlaneseq
    %v1660 = vshrl.u32 %v1659, 7
    %v1661 = vsub.s32 4, %v1660
    %v1662 = vrot.slane %v348, %v1661
    %v1663 = vmul.f32 %v1662, %v321
    %v1664 = vmul.f32 %v1662, %v322
    %v1665 = vadd.f32 %v1657, %v1663
    %v1666 = vadd.f32 %v1658, %v1664
    %v1667 = vlaneseq
    %v1668 = vshrl.u32 %v1667, 7
    %v1669 = vsub.s32 5, %v1668
    %v1670 = vrot.slane %v348, %v1669
    %v1671 = vmul.f32 %v1670, %v323
    %v1672 = vmul.f32 %v1670, %v324
    %v1673 = vadd.f32 %v1665, %v1671
    %v1674 = vadd.f32 %v1666, %v1672
    %v1675 = vlaneseq
    %v1676 = vshrl.u32 %v1675, 7
    %v1677 = vsub.s32 6, %v1676
    %v1678 = vrot.slane %v348, %v1677
    %v1679 = vmul.f32 %v1678, %v325
    %v1680 = vmul.f32 %v1678, %v326
    %v1681 = vadd.f32 %v1673, %v1679
    %v1682 = vadd.f32 %v1674, %v1680
    %v1683 = vlaneseq
    %v1684 = vshrl.u32 %v1683, 7
    %v1685 = vsub.s32 7, %v1684
    %v1686 = vrot.slane %v348, %v1685
    %v1687 = vmul.f32 %v1686, %v327
    %v1688 = vmul.f32 %v1686, %v328
    %v1689 = vadd.f32 %v1681, %v1687
    %v1690 = vadd.f32 %v1682, %v1688
    %s1691 = scalar_lea.vmem [#allocation9], 144
    %v1692 = vld [vmem:[%s1691] sm:$0xff]
    %v1693 = vld [vmem:[%s1691 + $0x8] sm:$0xff]
    %v1694 = vsub.f32 %v1689, %v1692
    %v1695 = vsub.f32 %v1690, %v1693
    %s1696 = scalar_lea.vmem [#allocation11], 144
    %1697 = vst [vmem:[%s1696] sm:$0xff] %v1694
    %1698 = vst [vmem:[%s1696 + $0x8] sm:$0xff] %v1695
    %v1699 = vlaneseq
    %v1700 = vshrl.u32 %v1699, 7
    %v1701 = vsub.s32 0, %v1700
    %v1702 = vrot.slane %v349, %v1701
    %v1703 = vmul.f32 %v1702, %v297
    %v1704 = vmul.f32 %v1702, %v298
    %v1705 = vlaneseq
    %v1706 = vshrl.u32 %v1705, 7
    %v1707 = vsub.s32 1, %v1706
    %v1708 = vrot.slane %v349, %v1707
    %v1709 = vmul.f32 %v1708, %v299
    %v1710 = vmul.f32 %v1708, %v300
    %v1711 = vadd.f32 %v1703, %v1709
    %v1712 = vadd.f32 %v1704, %v1710
    %v1713 = vlaneseq
    %v1714 = vshrl.u32 %v1713, 7
    %v1715 = vsub.s32 2, %v1714
    %v1716 = vrot.slane %v349, %v1715
    %v1717 = vmul.f32 %v1716, %v301
    %v1718 = vmul.f32 %v1716, %v302
    %v1719 = vadd.f32 %v1711, %v1717
    %v1720 = vadd.f32 %v1712, %v1718
    %v1721 = vlaneseq
    %v1722 = vshrl.u32 %v1721, 7
    %v1723 = vsub.s32 3, %v1722
    %v1724 = vrot.slane %v349, %v1723
    %v1725 = vmul.f32 %v1724, %v303
    %v1726 = vmul.f32 %v1724, %v304
    %v1727 = vadd.f32 %v1719, %v1725
    %v1728 = vadd.f32 %v1720, %v1726
    %v1729 = vlaneseq
    %v1730 = vshrl.u32 %v1729, 7
    %v1731 = vsub.s32 4, %v1730
    %v1732 = vrot.slane %v349, %v1731
    %v1733 = vmul.f32 %v1732, %v305
    %v1734 = vmul.f32 %v1732, %v306
    %v1735 = vadd.f32 %v1727, %v1733
    %v1736 = vadd.f32 %v1728, %v1734
    %v1737 = vlaneseq
    %v1738 = vshrl.u32 %v1737, 7
    %v1739 = vsub.s32 5, %v1738
    %v1740 = vrot.slane %v349, %v1739
    %v1741 = vmul.f32 %v1740, %v307
    %v1742 = vmul.f32 %v1740, %v308
    %v1743 = vadd.f32 %v1735, %v1741
    %v1744 = vadd.f32 %v1736, %v1742
    %v1745 = vlaneseq
    %v1746 = vshrl.u32 %v1745, 7
    %v1747 = vsub.s32 6, %v1746
    %v1748 = vrot.slane %v349, %v1747
    %v1749 = vmul.f32 %v1748, %v309
    %v1750 = vmul.f32 %v1748, %v310
    %v1751 = vadd.f32 %v1743, %v1749
    %v1752 = vadd.f32 %v1744, %v1750
    %v1753 = vlaneseq
    %v1754 = vshrl.u32 %v1753, 7
    %v1755 = vsub.s32 7, %v1754
    %v1756 = vrot.slane %v349, %v1755
    %v1757 = vmul.f32 %v1756, %v311
    %v1758 = vmul.f32 %v1756, %v312
    %v1759 = vadd.f32 %v1751, %v1757
    %v1760 = vadd.f32 %v1752, %v1758
    %v1761 = vlaneseq
    %v1762 = vshrl.u32 %v1761, 7
    %v1763 = vsub.s32 0, %v1762
    %v1764 = vrot.slane %v350, %v1763
    %v1765 = vmul.f32 %v1764, %v313
    %v1766 = vmul.f32 %v1764, %v314
    %v1767 = vadd.f32 %v1759, %v1765
    %v1768 = vadd.f32 %v1760, %v1766
    %v1769 = vlaneseq
    %v1770 = vshrl.u32 %v1769, 7
    %v1771 = vsub.s32 1, %v1770
    %v1772 = vrot.slane %v350, %v1771
    %v1773 = vmul.f32 %v1772, %v315
    %v1774 = vmul.f32 %v1772, %v316
    %v1775 = vadd.f32 %v1767, %v1773
    %v1776 = vadd.f32 %v1768, %v1774
    %v1777 = vlaneseq
    %v1778 = vshrl.u32 %v1777, 7
    %v1779 = vsub.s32 2, %v1778
    %v1780 = vrot.slane %v350, %v1779
    %v1781 = vmul.f32 %v1780, %v317
    %v1782 = vmul.f32 %v1780, %v318
    %v1783 = vadd.f32 %v1775, %v1781
    %v1784 = vadd.f32 %v1776, %v1782
    %v1785 = vlaneseq
    %v1786 = vshrl.u32 %v1785, 7
    %v1787 = vsub.s32 3, %v1786
    %v1788 = vrot.slane %v350, %v1787
    %v1789 = vmul.f32 %v1788, %v319
    %v1790 = vmul.f32 %v1788, %v320
    %v1791 = vadd.f32 %v1783, %v1789
    %v1792 = vadd.f32 %v1784, %v1790
    %v1793 = vlaneseq
    %v1794 = vshrl.u32 %v1793, 7
    %v1795 = vsub.s32 4, %v1794
    %v1796 = vrot.slane %v350, %v1795
    %v1797 = vmul.f32 %v1796, %v321
    %v1798 = vmul.f32 %v1796, %v322
    %v1799 = vadd.f32 %v1791, %v1797
    %v1800 = vadd.f32 %v1792, %v1798
    %v1801 = vlaneseq
    %v1802 = vshrl.u32 %v1801, 7
    %v1803 = vsub.s32 5, %v1802
    %v1804 = vrot.slane %v350, %v1803
    %v1805 = vmul.f32 %v1804, %v323
    %v1806 = vmul.f32 %v1804, %v324
    %v1807 = vadd.f32 %v1799, %v1805
    %v1808 = vadd.f32 %v1800, %v1806
    %v1809 = vlaneseq
    %v1810 = vshrl.u32 %v1809, 7
    %v1811 = vsub.s32 6, %v1810
    %v1812 = vrot.slane %v350, %v1811
    %v1813 = vmul.f32 %v1812, %v325
    %v1814 = vmul.f32 %v1812, %v326
    %v1815 = vadd.f32 %v1807, %v1813
    %v1816 = vadd.f32 %v1808, %v1814
    %v1817 = vlaneseq
    %v1818 = vshrl.u32 %v1817, 7
    %v1819 = vsub.s32 7, %v1818
    %v1820 = vrot.slane %v350, %v1819
    %v1821 = vmul.f32 %v1820, %v327
    %v1822 = vmul.f32 %v1820, %v328
    %v1823 = vadd.f32 %v1815, %v1821
    %v1824 = vadd.f32 %v1816, %v1822
    %s1825 = scalar_lea.vmem [#allocation9], 160
    %v1826 = vld [vmem:[%s1825] sm:$0xff]
    %v1827 = vld [vmem:[%s1825 + $0x8] sm:$0xff]
    %v1828 = vsub.f32 %v1823, %v1826
    %v1829 = vsub.f32 %v1824, %v1827
    %s1830 = scalar_lea.vmem [#allocation11], 160
    %1831 = vst [vmem:[%s1830] sm:$0xff] %v1828
    %1832 = vst [vmem:[%s1830 + $0x8] sm:$0xff] %v1829
    %v1833 = vlaneseq
    %v1834 = vshrl.u32 %v1833, 7
    %v1835 = vsub.s32 0, %v1834
    %v1836 = vrot.slane %v351, %v1835
    %v1837 = vmul.f32 %v1836, %v297
    %v1838 = vmul.f32 %v1836, %v298
    %v1839 = vlaneseq
    %v1840 = vshrl.u32 %v1839, 7
    %v1841 = vsub.s32 1, %v1840
    %v1842 = vrot.slane %v351, %v1841
    %v1843 = vmul.f32 %v1842, %v299
    %v1844 = vmul.f32 %v1842, %v300
    %v1845 = vadd.f32 %v1837, %v1843
    %v1846 = vadd.f32 %v1838, %v1844
    %v1847 = vlaneseq
    %v1848 = vshrl.u32 %v1847, 7
    %v1849 = vsub.s32 2, %v1848
    %v1850 = vrot.slane %v351, %v1849
    %v1851 = vmul.f32 %v1850, %v301
    %v1852 = vmul.f32 %v1850, %v302
    %v1853 = vadd.f32 %v1845, %v1851
    %v1854 = vadd.f32 %v1846, %v1852
    %v1855 = vlaneseq
    %v1856 = vshrl.u32 %v1855, 7
    %v1857 = vsub.s32 3, %v1856
    %v1858 = vrot.slane %v351, %v1857
    %v1859 = vmul.f32 %v1858, %v303
    %v1860 = vmul.f32 %v1858, %v304
    %v1861 = vadd.f32 %v1853, %v1859
    %v1862 = vadd.f32 %v1854, %v1860
    %v1863 = vlaneseq
    %v1864 = vshrl.u32 %v1863, 7
    %v1865 = vsub.s32 4, %v1864
    %v1866 = vrot.slane %v351, %v1865
    %v1867 = vmul.f32 %v1866, %v305
    %v1868 = vmul.f32 %v1866, %v306
    %v1869 = vadd.f32 %v1861, %v1867
    %v1870 = vadd.f32 %v1862, %v1868
    %v1871 = vlaneseq
    %v1872 = vshrl.u32 %v1871, 7
    %v1873 = vsub.s32 5, %v1872
    %v1874 = vrot.slane %v351, %v1873
    %v1875 = vmul.f32 %v1874, %v307
    %v1876 = vmul.f32 %v1874, %v308
    %v1877 = vadd.f32 %v1869, %v1875
    %v1878 = vadd.f32 %v1870, %v1876
    %v1879 = vlaneseq
    %v1880 = vshrl.u32 %v1879, 7
    %v1881 = vsub.s32 6, %v1880
    %v1882 = vrot.slane %v351, %v1881
    %v1883 = vmul.f32 %v1882, %v309
    %v1884 = vmul.f32 %v1882, %v310
    %v1885 = vadd.f32 %v1877, %v1883
    %v1886 = vadd.f32 %v1878, %v1884
    %v1887 = vlaneseq
    %v1888 = vshrl.u32 %v1887, 7
    %v1889 = vsub.s32 7, %v1888
    %v1890 = vrot.slane %v351, %v1889
    %v1891 = vmul.f32 %v1890, %v311
    %v1892 = vmul.f32 %v1890, %v312
    %v1893 = vadd.f32 %v1885, %v1891
    %v1894 = vadd.f32 %v1886, %v1892
    %v1895 = vlaneseq
    %v1896 = vshrl.u32 %v1895, 7
    %v1897 = vsub.s32 0, %v1896
    %v1898 = vrot.slane %v352, %v1897
    %v1899 = vmul.f32 %v1898, %v313
    %v1900 = vmul.f32 %v1898, %v314
    %v1901 = vadd.f32 %v1893, %v1899
    %v1902 = vadd.f32 %v1894, %v1900
    %v1903 = vlaneseq
    %v1904 = vshrl.u32 %v1903, 7
    %v1905 = vsub.s32 1, %v1904
    %v1906 = vrot.slane %v352, %v1905
    %v1907 = vmul.f32 %v1906, %v315
    %v1908 = vmul.f32 %v1906, %v316
    %v1909 = vadd.f32 %v1901, %v1907
    %v1910 = vadd.f32 %v1902, %v1908
    %v1911 = vlaneseq
    %v1912 = vshrl.u32 %v1911, 7
    %v1913 = vsub.s32 2, %v1912
    %v1914 = vrot.slane %v352, %v1913
    %v1915 = vmul.f32 %v1914, %v317
    %v1916 = vmul.f32 %v1914, %v318
    %v1917 = vadd.f32 %v1909, %v1915
    %v1918 = vadd.f32 %v1910, %v1916
    %v1919 = vlaneseq
    %v1920 = vshrl.u32 %v1919, 7
    %v1921 = vsub.s32 3, %v1920
    %v1922 = vrot.slane %v352, %v1921
    %v1923 = vmul.f32 %v1922, %v319
    %v1924 = vmul.f32 %v1922, %v320
    %v1925 = vadd.f32 %v1917, %v1923
    %v1926 = vadd.f32 %v1918, %v1924
    %v1927 = vlaneseq
    %v1928 = vshrl.u32 %v1927, 7
    %v1929 = vsub.s32 4, %v1928
    %v1930 = vrot.slane %v352, %v1929
    %v1931 = vmul.f32 %v1930, %v321
    %v1932 = vmul.f32 %v1930, %v322
    %v1933 = vadd.f32 %v1925, %v1931
    %v1934 = vadd.f32 %v1926, %v1932
    %v1935 = vlaneseq
    %v1936 = vshrl.u32 %v1935, 7
    %v1937 = vsub.s32 5, %v1936
    %v1938 = vrot.slane %v352, %v1937
    %v1939 = vmul.f32 %v1938, %v323
    %v1940 = vmul.f32 %v1938, %v324
    %v1941 = vadd.f32 %v1933, %v1939
    %v1942 = vadd.f32 %v1934, %v1940
    %v1943 = vlaneseq
    %v1944 = vshrl.u32 %v1943, 7
    %v1945 = vsub.s32 6, %v1944
    %v1946 = vrot.slane %v352, %v1945
    %v1947 = vmul.f32 %v1946, %v325
    %v1948 = vmul.f32 %v1946, %v326
    %v1949 = vadd.f32 %v1941, %v1947
    %v1950 = vadd.f32 %v1942, %v1948
    %v1951 = vlaneseq
    %v1952 = vshrl.u32 %v1951, 7
    %v1953 = vsub.s32 7, %v1952
    %v1954 = vrot.slane %v352, %v1953
    %v1955 = vmul.f32 %v1954, %v327
    %v1956 = vmul.f32 %v1954, %v328
    %v1957 = vadd.f32 %v1949, %v1955
    %v1958 = vadd.f32 %v1950, %v1956
    %s1959 = scalar_lea.vmem [#allocation9], 176
    %v1960 = vld [vmem:[%s1959] sm:$0xff]
    %v1961 = vld [vmem:[%s1959 + $0x8] sm:$0xff]
    %v1962 = vsub.f32 %v1957, %v1960
    %v1963 = vsub.f32 %v1958, %v1961
    %s1964 = scalar_lea.vmem [#allocation11], 176
    %1965 = vst [vmem:[%s1964] sm:$0xff] %v1962
    %1966 = vst [vmem:[%s1964 + $0x8] sm:$0xff] %v1963
    %v1967 = vlaneseq
    %v1968 = vshrl.u32 %v1967, 7
    %v1969 = vsub.s32 0, %v1968
    %v1970 = vrot.slane %v353, %v1969
    %v1971 = vmul.f32 %v1970, %v297
    %v1972 = vmul.f32 %v1970, %v298
    %v1973 = vlaneseq
    %v1974 = vshrl.u32 %v1973, 7
    %v1975 = vsub.s32 1, %v1974
    %v1976 = vrot.slane %v353, %v1975
    %v1977 = vmul.f32 %v1976, %v299
    %v1978 = vmul.f32 %v1976, %v300
    %v1979 = vadd.f32 %v1971, %v1977
    %v1980 = vadd.f32 %v1972, %v1978
    %v1981 = vlaneseq
    %v1982 = vshrl.u32 %v1981, 7
    %v1983 = vsub.s32 2, %v1982
    %v1984 = vrot.slane %v353, %v1983
    %v1985 = vmul.f32 %v1984, %v301
    %v1986 = vmul.f32 %v1984, %v302
    %v1987 = vadd.f32 %v1979, %v1985
    %v1988 = vadd.f32 %v1980, %v1986
    %v1989 = vlaneseq
    %v1990 = vshrl.u32 %v1989, 7
    %v1991 = vsub.s32 3, %v1990
    %v1992 = vrot.slane %v353, %v1991
    %v1993 = vmul.f32 %v1992, %v303
    %v1994 = vmul.f32 %v1992, %v304
    %v1995 = vadd.f32 %v1987, %v1993
    %v1996 = vadd.f32 %v1988, %v1994
    %v1997 = vlaneseq
    %v1998 = vshrl.u32 %v1997, 7
    %v1999 = vsub.s32 4, %v1998
    %v2000 = vrot.slane %v353, %v1999
    %v2001 = vmul.f32 %v2000, %v305
    %v2002 = vmul.f32 %v2000, %v306
    %v2003 = vadd.f32 %v1995, %v2001
    %v2004 = vadd.f32 %v1996, %v2002
    %v2005 = vlaneseq
    %v2006 = vshrl.u32 %v2005, 7
    %v2007 = vsub.s32 5, %v2006
    %v2008 = vrot.slane %v353, %v2007
    %v2009 = vmul.f32 %v2008, %v307
    %v2010 = vmul.f32 %v2008, %v308
    %v2011 = vadd.f32 %v2003, %v2009
    %v2012 = vadd.f32 %v2004, %v2010
    %v2013 = vlaneseq
    %v2014 = vshrl.u32 %v2013, 7
    %v2015 = vsub.s32 6, %v2014
    %v2016 = vrot.slane %v353, %v2015
    %v2017 = vmul.f32 %v2016, %v309
    %v2018 = vmul.f32 %v2016, %v310
    %v2019 = vadd.f32 %v2011, %v2017
    %v2020 = vadd.f32 %v2012, %v2018
    %v2021 = vlaneseq
    %v2022 = vshrl.u32 %v2021, 7
    %v2023 = vsub.s32 7, %v2022
    %v2024 = vrot.slane %v353, %v2023
    %v2025 = vmul.f32 %v2024, %v311
    %v2026 = vmul.f32 %v2024, %v312
    %v2027 = vadd.f32 %v2019, %v2025
    %v2028 = vadd.f32 %v2020, %v2026
    %v2029 = vlaneseq
    %v2030 = vshrl.u32 %v2029, 7
    %v2031 = vsub.s32 0, %v2030
    %v2032 = vrot.slane %v354, %v2031
    %v2033 = vmul.f32 %v2032, %v313
    %v2034 = vmul.f32 %v2032, %v314
    %v2035 = vadd.f32 %v2027, %v2033
    %v2036 = vadd.f32 %v2028, %v2034
    %v2037 = vlaneseq
    %v2038 = vshrl.u32 %v2037, 7
    %v2039 = vsub.s32 1, %v2038
    %v2040 = vrot.slane %v354, %v2039
    %v2041 = vmul.f32 %v2040, %v315
    %v2042 = vmul.f32 %v2040, %v316
    %v2043 = vadd.f32 %v2035, %v2041
    %v2044 = vadd.f32 %v2036, %v2042
    %v2045 = vlaneseq
    %v2046 = vshrl.u32 %v2045, 7
    %v2047 = vsub.s32 2, %v2046
    %v2048 = vrot.slane %v354, %v2047
    %v2049 = vmul.f32 %v2048, %v317
    %v2050 = vmul.f32 %v2048, %v318
    %v2051 = vadd.f32 %v2043, %v2049
    %v2052 = vadd.f32 %v2044, %v2050
    %v2053 = vlaneseq
    %v2054 = vshrl.u32 %v2053, 7
    %v2055 = vsub.s32 3, %v2054
    %v2056 = vrot.slane %v354, %v2055
    %v2057 = vmul.f32 %v2056, %v319
    %v2058 = vmul.f32 %v2056, %v320
    %v2059 = vadd.f32 %v2051, %v2057
    %v2060 = vadd.f32 %v2052, %v2058
    %v2061 = vlaneseq
    %v2062 = vshrl.u32 %v2061, 7
    %v2063 = vsub.s32 4, %v2062
    %v2064 = vrot.slane %v354, %v2063
    %v2065 = vmul.f32 %v2064, %v321
    %v2066 = vmul.f32 %v2064, %v322
    %v2067 = vadd.f32 %v2059, %v2065
    %v2068 = vadd.f32 %v2060, %v2066
    %v2069 = vlaneseq
    %v2070 = vshrl.u32 %v2069, 7
    %v2071 = vsub.s32 5, %v2070
    %v2072 = vrot.slane %v354, %v2071
    %v2073 = vmul.f32 %v2072, %v323
    %v2074 = vmul.f32 %v2072, %v324
    %v2075 = vadd.f32 %v2067, %v2073
    %v2076 = vadd.f32 %v2068, %v2074
    %v2077 = vlaneseq
    %v2078 = vshrl.u32 %v2077, 7
    %v2079 = vsub.s32 6, %v2078
    %v2080 = vrot.slane %v354, %v2079
    %v2081 = vmul.f32 %v2080, %v325
    %v2082 = vmul.f32 %v2080, %v326
    %v2083 = vadd.f32 %v2075, %v2081
    %v2084 = vadd.f32 %v2076, %v2082
    %v2085 = vlaneseq
    %v2086 = vshrl.u32 %v2085, 7
    %v2087 = vsub.s32 7, %v2086
    %v2088 = vrot.slane %v354, %v2087
    %v2089 = vmul.f32 %v2088, %v327
    %v2090 = vmul.f32 %v2088, %v328
    %v2091 = vadd.f32 %v2083, %v2089
    %v2092 = vadd.f32 %v2084, %v2090
    %s2093 = scalar_lea.vmem [#allocation9], 192
    %v2094 = vld [vmem:[%s2093] sm:$0xff]
    %v2095 = vld [vmem:[%s2093 + $0x8] sm:$0xff]
    %v2096 = vsub.f32 %v2091, %v2094
    %v2097 = vsub.f32 %v2092, %v2095
    %s2098 = scalar_lea.vmem [#allocation11], 192
    %2099 = vst [vmem:[%s2098] sm:$0xff] %v2096
    %2100 = vst [vmem:[%s2098 + $0x8] sm:$0xff] %v2097
    %v2101 = vlaneseq
    %v2102 = vshrl.u32 %v2101, 7
    %v2103 = vsub.s32 0, %v2102
    %v2104 = vrot.slane %v355, %v2103
    %v2105 = vmul.f32 %v2104, %v297
    %v2106 = vmul.f32 %v2104, %v298
    %v2107 = vlaneseq
    %v2108 = vshrl.u32 %v2107, 7
    %v2109 = vsub.s32 1, %v2108
    %v2110 = vrot.slane %v355, %v2109
    %v2111 = vmul.f32 %v2110, %v299
    %v2112 = vmul.f32 %v2110, %v300
    %v2113 = vadd.f32 %v2105, %v2111
    %v2114 = vadd.f32 %v2106, %v2112
    %v2115 = vlaneseq
    %v2116 = vshrl.u32 %v2115, 7
    %v2117 = vsub.s32 2, %v2116
    %v2118 = vrot.slane %v355, %v2117
    %v2119 = vmul.f32 %v2118, %v301
    %v2120 = vmul.f32 %v2118, %v302
    %v2121 = vadd.f32 %v2113, %v2119
    %v2122 = vadd.f32 %v2114, %v2120
    %v2123 = vlaneseq
    %v2124 = vshrl.u32 %v2123, 7
    %v2125 = vsub.s32 3, %v2124
    %v2126 = vrot.slane %v355, %v2125
    %v2127 = vmul.f32 %v2126, %v303
    %v2128 = vmul.f32 %v2126, %v304
    %v2129 = vadd.f32 %v2121, %v2127
    %v2130 = vadd.f32 %v2122, %v2128
    %v2131 = vlaneseq
    %v2132 = vshrl.u32 %v2131, 7
    %v2133 = vsub.s32 4, %v2132
    %v2134 = vrot.slane %v355, %v2133
    %v2135 = vmul.f32 %v2134, %v305
    %v2136 = vmul.f32 %v2134, %v306
    %v2137 = vadd.f32 %v2129, %v2135
    %v2138 = vadd.f32 %v2130, %v2136
    %v2139 = vlaneseq
    %v2140 = vshrl.u32 %v2139, 7
    %v2141 = vsub.s32 5, %v2140
    %v2142 = vrot.slane %v355, %v2141
    %v2143 = vmul.f32 %v2142, %v307
    %v2144 = vmul.f32 %v2142, %v308
    %v2145 = vadd.f32 %v2137, %v2143
    %v2146 = vadd.f32 %v2138, %v2144
    %v2147 = vlaneseq
    %v2148 = vshrl.u32 %v2147, 7
    %v2149 = vsub.s32 6, %v2148
    %v2150 = vrot.slane %v355, %v2149
    %v2151 = vmul.f32 %v2150, %v309
    %v2152 = vmul.f32 %v2150, %v310
    %v2153 = vadd.f32 %v2145, %v2151
    %v2154 = vadd.f32 %v2146, %v2152
    %v2155 = vlaneseq
    %v2156 = vshrl.u32 %v2155, 7
    %v2157 = vsub.s32 7, %v2156
    %v2158 = vrot.slane %v355, %v2157
    %v2159 = vmul.f32 %v2158, %v311
    %v2160 = vmul.f32 %v2158, %v312
    %v2161 = vadd.f32 %v2153, %v2159
    %v2162 = vadd.f32 %v2154, %v2160
    %v2163 = vlaneseq
    %v2164 = vshrl.u32 %v2163, 7
    %v2165 = vsub.s32 0, %v2164
    %v2166 = vrot.slane %v356, %v2165
    %v2167 = vmul.f32 %v2166, %v313
    %v2168 = vmul.f32 %v2166, %v314
    %v2169 = vadd.f32 %v2161, %v2167
    %v2170 = vadd.f32 %v2162, %v2168
    %v2171 = vlaneseq
    %v2172 = vshrl.u32 %v2171, 7
    %v2173 = vsub.s32 1, %v2172
    %v2174 = vrot.slane %v356, %v2173
    %v2175 = vmul.f32 %v2174, %v315
    %v2176 = vmul.f32 %v2174, %v316
    %v2177 = vadd.f32 %v2169, %v2175
    %v2178 = vadd.f32 %v2170, %v2176
    %v2179 = vlaneseq
    %v2180 = vshrl.u32 %v2179, 7
    %v2181 = vsub.s32 2, %v2180
    %v2182 = vrot.slane %v356, %v2181
    %v2183 = vmul.f32 %v2182, %v317
    %v2184 = vmul.f32 %v2182, %v318
    %v2185 = vadd.f32 %v2177, %v2183
    %v2186 = vadd.f32 %v2178, %v2184
    %v2187 = vlaneseq
    %v2188 = vshrl.u32 %v2187, 7
    %v2189 = vsub.s32 3, %v2188
    %v2190 = vrot.slane %v356, %v2189
    %v2191 = vmul.f32 %v2190, %v319
    %v2192 = vmul.f32 %v2190, %v320
    %v2193 = vadd.f32 %v2185, %v2191
    %v2194 = vadd.f32 %v2186, %v2192
    %v2195 = vlaneseq
    %v2196 = vshrl.u32 %v2195, 7
    %v2197 = vsub.s32 4, %v2196
    %v2198 = vrot.slane %v356, %v2197
    %v2199 = vmul.f32 %v2198, %v321
    %v2200 = vmul.f32 %v2198, %v322
    %v2201 = vadd.f32 %v2193, %v2199
    %v2202 = vadd.f32 %v2194, %v2200
    %v2203 = vlaneseq
    %v2204 = vshrl.u32 %v2203, 7
    %v2205 = vsub.s32 5, %v2204
    %v2206 = vrot.slane %v356, %v2205
    %v2207 = vmul.f32 %v2206, %v323
    %v2208 = vmul.f32 %v2206, %v324
    %v2209 = vadd.f32 %v2201, %v2207
    %v2210 = vadd.f32 %v2202, %v2208
    %v2211 = vlaneseq
    %v2212 = vshrl.u32 %v2211, 7
    %v2213 = vsub.s32 6, %v2212
    %v2214 = vrot.slane %v356, %v2213
    %v2215 = vmul.f32 %v2214, %v325
    %v2216 = vmul.f32 %v2214, %v326
    %v2217 = vadd.f32 %v2209, %v2215
    %v2218 = vadd.f32 %v2210, %v2216
    %v2219 = vlaneseq
    %v2220 = vshrl.u32 %v2219, 7
    %v2221 = vsub.s32 7, %v2220
    %v2222 = vrot.slane %v356, %v2221
    %v2223 = vmul.f32 %v2222, %v327
    %v2224 = vmul.f32 %v2222, %v328
    %v2225 = vadd.f32 %v2217, %v2223
    %v2226 = vadd.f32 %v2218, %v2224
    %s2227 = scalar_lea.vmem [#allocation9], 208
    %v2228 = vld [vmem:[%s2227] sm:$0xff]
    %v2229 = vld [vmem:[%s2227 + $0x8] sm:$0xff]
    %v2230 = vsub.f32 %v2225, %v2228
    %v2231 = vsub.f32 %v2226, %v2229
    %s2232 = scalar_lea.vmem [#allocation11], 208
    %2233 = vst [vmem:[%s2232] sm:$0xff] %v2230
    %2234 = vst [vmem:[%s2232 + $0x8] sm:$0xff] %v2231
    %v2235 = vlaneseq
    %v2236 = vshrl.u32 %v2235, 7
    %v2237 = vsub.s32 0, %v2236
    %v2238 = vrot.slane %v357, %v2237
    %v2239 = vmul.f32 %v2238, %v297
    %v2240 = vmul.f32 %v2238, %v298
    %v2241 = vlaneseq
    %v2242 = vshrl.u32 %v2241, 7
    %v2243 = vsub.s32 1, %v2242
    %v2244 = vrot.slane %v357, %v2243
    %v2245 = vmul.f32 %v2244, %v299
    %v2246 = vmul.f32 %v2244, %v300
    %v2247 = vadd.f32 %v2239, %v2245
    %v2248 = vadd.f32 %v2240, %v2246
    %v2249 = vlaneseq
    %v2250 = vshrl.u32 %v2249, 7
    %v2251 = vsub.s32 2, %v2250
    %v2252 = vrot.slane %v357, %v2251
    %v2253 = vmul.f32 %v2252, %v301
    %v2254 = vmul.f32 %v2252, %v302
    %v2255 = vadd.f32 %v2247, %v2253
    %v2256 = vadd.f32 %v2248, %v2254
    %v2257 = vlaneseq
    %v2258 = vshrl.u32 %v2257, 7
    %v2259 = vsub.s32 3, %v2258
    %v2260 = vrot.slane %v357, %v2259
    %v2261 = vmul.f32 %v2260, %v303
    %v2262 = vmul.f32 %v2260, %v304
    %v2263 = vadd.f32 %v2255, %v2261
    %v2264 = vadd.f32 %v2256, %v2262
    %v2265 = vlaneseq
    %v2266 = vshrl.u32 %v2265, 7
    %v2267 = vsub.s32 4, %v2266
    %v2268 = vrot.slane %v357, %v2267
    %v2269 = vmul.f32 %v2268, %v305
    %v2270 = vmul.f32 %v2268, %v306
    %v2271 = vadd.f32 %v2263, %v2269
    %v2272 = vadd.f32 %v2264, %v2270
    %v2273 = vlaneseq
    %v2274 = vshrl.u32 %v2273, 7
    %v2275 = vsub.s32 5, %v2274
    %v2276 = vrot.slane %v357, %v2275
    %v2277 = vmul.f32 %v2276, %v307
    %v2278 = vmul.f32 %v2276, %v308
    %v2279 = vadd.f32 %v2271, %v2277
    %v2280 = vadd.f32 %v2272, %v2278
    %v2281 = vlaneseq
    %v2282 = vshrl.u32 %v2281, 7
    %v2283 = vsub.s32 6, %v2282
    %v2284 = vrot.slane %v357, %v2283
    %v2285 = vmul.f32 %v2284, %v309
    %v2286 = vmul.f32 %v2284, %v310
    %v2287 = vadd.f32 %v2279, %v2285
    %v2288 = vadd.f32 %v2280, %v2286
    %v2289 = vlaneseq
    %v2290 = vshrl.u32 %v2289, 7
    %v2291 = vsub.s32 7, %v2290
    %v2292 = vrot.slane %v357, %v2291
    %v2293 = vmul.f32 %v2292, %v311
    %v2294 = vmul.f32 %v2292, %v312
    %v2295 = vadd.f32 %v2287, %v2293
    %v2296 = vadd.f32 %v2288, %v2294
    %v2297 = vlaneseq
    %v2298 = vshrl.u32 %v2297, 7
    %v2299 = vsub.s32 0, %v2298
    %v2300 = vrot.slane %v358, %v2299
    %v2301 = vmul.f32 %v2300, %v313
    %v2302 = vmul.f32 %v2300, %v314
    %v2303 = vadd.f32 %v2295, %v2301
    %v2304 = vadd.f32 %v2296, %v2302
    %v2305 = vlaneseq
    %v2306 = vshrl.u32 %v2305, 7
    %v2307 = vsub.s32 1, %v2306
    %v2308 = vrot.slane %v358, %v2307
    %v2309 = vmul.f32 %v2308, %v315
    %v2310 = vmul.f32 %v2308, %v316
    %v2311 = vadd.f32 %v2303, %v2309
    %v2312 = vadd.f32 %v2304, %v2310
    %v2313 = vlaneseq
    %v2314 = vshrl.u32 %v2313, 7
    %v2315 = vsub.s32 2, %v2314
    %v2316 = vrot.slane %v358, %v2315
    %v2317 = vmul.f32 %v2316, %v317
    %v2318 = vmul.f32 %v2316, %v318
    %v2319 = vadd.f32 %v2311, %v2317
    %v2320 = vadd.f32 %v2312, %v2318
    %v2321 = vlaneseq
    %v2322 = vshrl.u32 %v2321, 7
    %v2323 = vsub.s32 3, %v2322
    %v2324 = vrot.slane %v358, %v2323
    %v2325 = vmul.f32 %v2324, %v319
    %v2326 = vmul.f32 %v2324, %v320
    %v2327 = vadd.f32 %v2319, %v2325
    %v2328 = vadd.f32 %v2320, %v2326
    %v2329 = vlaneseq
    %v2330 = vshrl.u32 %v2329, 7
    %v2331 = vsub.s32 4, %v2330
    %v2332 = vrot.slane %v358, %v2331
    %v2333 = vmul.f32 %v2332, %v321
    %v2334 = vmul.f32 %v2332, %v322
    %v2335 = vadd.f32 %v2327, %v2333
    %v2336 = vadd.f32 %v2328, %v2334
    %v2337 = vlaneseq
    %v2338 = vshrl.u32 %v2337, 7
    %v2339 = vsub.s32 5, %v2338
    %v2340 = vrot.slane %v358, %v2339
    %v2341 = vmul.f32 %v2340, %v323
    %v2342 = vmul.f32 %v2340, %v324
    %v2343 = vadd.f32 %v2335, %v2341
    %v2344 = vadd.f32 %v2336, %v2342
    %v2345 = vlaneseq
    %v2346 = vshrl.u32 %v2345, 7
    %v2347 = vsub.s32 6, %v2346
    %v2348 = vrot.slane %v358, %v2347
    %v2349 = vmul.f32 %v2348, %v325
    %v2350 = vmul.f32 %v2348, %v326
    %v2351 = vadd.f32 %v2343, %v2349
    %v2352 = vadd.f32 %v2344, %v2350
    %v2353 = vlaneseq
    %v2354 = vshrl.u32 %v2353, 7
    %v2355 = vsub.s32 7, %v2354
    %v2356 = vrot.slane %v358, %v2355
    %v2357 = vmul.f32 %v2356, %v327
    %v2358 = vmul.f32 %v2356, %v328
    %v2359 = vadd.f32 %v2351, %v2357
    %v2360 = vadd.f32 %v2352, %v2358
    %s2361 = scalar_lea.vmem [#allocation9], 224
    %v2362 = vld [vmem:[%s2361] sm:$0xff]
    %v2363 = vld [vmem:[%s2361 + $0x8] sm:$0xff]
    %v2364 = vsub.f32 %v2359, %v2362
    %v2365 = vsub.f32 %v2360, %v2363
    %s2366 = scalar_lea.vmem [#allocation11], 224
    %2367 = vst [vmem:[%s2366] sm:$0xff] %v2364
    %2368 = vst [vmem:[%s2366 + $0x8] sm:$0xff] %v2365
    %v2369 = vlaneseq
    %v2370 = vshrl.u32 %v2369, 7
    %v2371 = vsub.s32 0, %v2370
    %v2372 = vrot.slane %v359, %v2371
    %v2373 = vmul.f32 %v2372, %v297
    %v2374 = vmul.f32 %v2372, %v298
    %v2375 = vlaneseq
    %v2376 = vshrl.u32 %v2375, 7
    %v2377 = vsub.s32 1, %v2376
    %v2378 = vrot.slane %v359, %v2377
    %v2379 = vmul.f32 %v2378, %v299
    %v2380 = vmul.f32 %v2378, %v300
    %v2381 = vadd.f32 %v2373, %v2379
    %v2382 = vadd.f32 %v2374, %v2380
    %v2383 = vlaneseq
    %v2384 = vshrl.u32 %v2383, 7
    %v2385 = vsub.s32 2, %v2384
    %v2386 = vrot.slane %v359, %v2385
    %v2387 = vmul.f32 %v2386, %v301
    %v2388 = vmul.f32 %v2386, %v302
    %v2389 = vadd.f32 %v2381, %v2387
    %v2390 = vadd.f32 %v2382, %v2388
    %v2391 = vlaneseq
    %v2392 = vshrl.u32 %v2391, 7
    %v2393 = vsub.s32 3, %v2392
    %v2394 = vrot.slane %v359, %v2393
    %v2395 = vmul.f32 %v2394, %v303
    %v2396 = vmul.f32 %v2394, %v304
    %v2397 = vadd.f32 %v2389, %v2395
    %v2398 = vadd.f32 %v2390, %v2396
    %v2399 = vlaneseq
    %v2400 = vshrl.u32 %v2399, 7
    %v2401 = vsub.s32 4, %v2400
    %v2402 = vrot.slane %v359, %v2401
    %v2403 = vmul.f32 %v2402, %v305
    %v2404 = vmul.f32 %v2402, %v306
    %v2405 = vadd.f32 %v2397, %v2403
    %v2406 = vadd.f32 %v2398, %v2404
    %v2407 = vlaneseq
    %v2408 = vshrl.u32 %v2407, 7
    %v2409 = vsub.s32 5, %v2408
    %v2410 = vrot.slane %v359, %v2409
    %v2411 = vmul.f32 %v2410, %v307
    %v2412 = vmul.f32 %v2410, %v308
    %v2413 = vadd.f32 %v2405, %v2411
    %v2414 = vadd.f32 %v2406, %v2412
    %v2415 = vlaneseq
    %v2416 = vshrl.u32 %v2415, 7
    %v2417 = vsub.s32 6, %v2416
    %v2418 = vrot.slane %v359, %v2417
    %v2419 = vmul.f32 %v2418, %v309
    %v2420 = vmul.f32 %v2418, %v310
    %v2421 = vadd.f32 %v2413, %v2419
    %v2422 = vadd.f32 %v2414, %v2420
    %v2423 = vlaneseq
    %v2424 = vshrl.u32 %v2423, 7
    %v2425 = vsub.s32 7, %v2424
    %v2426 = vrot.slane %v359, %v2425
    %v2427 = vmul.f32 %v2426, %v311
    %v2428 = vmul.f32 %v2426, %v312
    %v2429 = vadd.f32 %v2421, %v2427
    %v2430 = vadd.f32 %v2422, %v2428
    %v2431 = vlaneseq
    %v2432 = vshrl.u32 %v2431, 7
    %v2433 = vsub.s32 0, %v2432
    %v2434 = vrot.slane %v360, %v2433
    %v2435 = vmul.f32 %v2434, %v313
    %v2436 = vmul.f32 %v2434, %v314
    %v2437 = vadd.f32 %v2429, %v2435
    %v2438 = vadd.f32 %v2430, %v2436
    %v2439 = vlaneseq
    %v2440 = vshrl.u32 %v2439, 7
    %v2441 = vsub.s32 1, %v2440
    %v2442 = vrot.slane %v360, %v2441
    %v2443 = vmul.f32 %v2442, %v315
    %v2444 = vmul.f32 %v2442, %v316
    %v2445 = vadd.f32 %v2437, %v2443
    %v2446 = vadd.f32 %v2438, %v2444
    %v2447 = vlaneseq
    %v2448 = vshrl.u32 %v2447, 7
    %v2449 = vsub.s32 2, %v2448
    %v2450 = vrot.slane %v360, %v2449
    %v2451 = vmul.f32 %v2450, %v317
    %v2452 = vmul.f32 %v2450, %v318
    %v2453 = vadd.f32 %v2445, %v2451
    %v2454 = vadd.f32 %v2446, %v2452
    %v2455 = vlaneseq
    %v2456 = vshrl.u32 %v2455, 7
    %v2457 = vsub.s32 3, %v2456
    %v2458 = vrot.slane %v360, %v2457
    %v2459 = vmul.f32 %v2458, %v319
    %v2460 = vmul.f32 %v2458, %v320
    %v2461 = vadd.f32 %v2453, %v2459
    %v2462 = vadd.f32 %v2454, %v2460
    %v2463 = vlaneseq
    %v2464 = vshrl.u32 %v2463, 7
    %v2465 = vsub.s32 4, %v2464
    %v2466 = vrot.slane %v360, %v2465
    %v2467 = vmul.f32 %v2466, %v321
    %v2468 = vmul.f32 %v2466, %v322
    %v2469 = vadd.f32 %v2461, %v2467
    %v2470 = vadd.f32 %v2462, %v2468
    %v2471 = vlaneseq
    %v2472 = vshrl.u32 %v2471, 7
    %v2473 = vsub.s32 5, %v2472
    %v2474 = vrot.slane %v360, %v2473
    %v2475 = vmul.f32 %v2474, %v323
    %v2476 = vmul.f32 %v2474, %v324
    %v2477 = vadd.f32 %v2469, %v2475
    %v2478 = vadd.f32 %v2470, %v2476
    %v2479 = vlaneseq
    %v2480 = vshrl.u32 %v2479, 7
    %v2481 = vsub.s32 6, %v2480
    %v2482 = vrot.slane %v360, %v2481
    %v2483 = vmul.f32 %v2482, %v325
    %v2484 = vmul.f32 %v2482, %v326
    %v2485 = vadd.f32 %v2477, %v2483
    %v2486 = vadd.f32 %v2478, %v2484
    %v2487 = vlaneseq
    %v2488 = vshrl.u32 %v2487, 7
    %v2489 = vsub.s32 7, %v2488
    %v2490 = vrot.slane %v360, %v2489
    %v2491 = vmul.f32 %v2490, %v327
    %v2492 = vmul.f32 %v2490, %v328
    %v2493 = vadd.f32 %v2485, %v2491
    %v2494 = vadd.f32 %v2486, %v2492
    %s2495 = scalar_lea.vmem [#allocation9], 240
    %v2496 = vld [vmem:[%s2495] sm:$0xff]
    %v2497 = vld [vmem:[%s2495 + $0x8] sm:$0xff]
    %v2498 = vsub.f32 %v2493, %v2496
    %v2499 = vsub.f32 %v2494, %v2497
    %s2500 = scalar_lea.vmem [#allocation11], 240
    %2501 = vst [vmem:[%s2500] sm:$0xff] %v2498
    %2502 = vst [vmem:[%s2500 + $0x8] sm:$0xff] %v2499
    // Predicated region
    $region38: #{tpu_custom_call.1} parent=1 // pred_check
      _
    $region39: #{tpu_custom_call.1} parent=1 // pred_check_branch
      %2504 = sbr.rel (0) target = $region41
    $region40: #{tpu_custom_call.1} parent=1 // pred_region
      %s2506 = ssub.s32 4096, 4096
      %2507 = vsyncadd [#allocation5], %s2506
      %s2508 = sshll.u32 [#allocation11], 4
      %s2509 = int_to_ptr.vmem [resolvable:$true] %s2508
      %2514 = dma.vmem_to_hbm [thread:$0]  %s2509, 4096, %s5, [#allocation5], 128, 128, 8
    $region41: #{tpu_custom_call.1} parent=1 // pred_fallthru
      _
    // Predicated region
    $region42: #{tpu_custom_call.1} parent=1 // pred_check
      _
    $region43: #{tpu_custom_call.1} parent=1 // pred_check_branch
      %2516 = sbr.rel (0) target = $region45
    $region44: #{tpu_custom_call.1} parent=1 // pred_region
      %2517 = dma.done [#allocation5], 4096
    $region45: #{tpu_custom_call.1} parent=1 // pred_fallthru
      _
    %2518 = vsyncpa [#allocation4], 1
    %2519 = vsyncpa [#allocation7], 1
    %2520 = vsyncpa [#allocation10], 1
    %2521 = vsyncpa [#allocation5], 1

</llo_original>
